<compile_context>
chip_gen: v7x
topology: tpu7x:2x2x1
jax: 0.10.0
libtpu: 0.0.40
codegen_flags: <defaults>
</compile_context>

<pallas_src>
import functools

import numpy as np
import jax
import jax.numpy as jnp
from jax import lax
from jax.experimental import pallas as pl
from jax.experimental.pallas import tpu as pltpu


# ----------------------------- Pallas kernel --------------------------------

def _make_kernel(specs):
    """specs: tuple of (H, W, Cin, Cout) per conv block."""
    n_blocks = len(specs)

    def kernel(x_ref, w0_ref, wrest_ref, bias_ref, fcv_ref, fcb1_ref,
               fcw2_ref, fcb2_ref, o_ref):
        # Three row-shifted (kh = 0, 1, 2) copies of the current activation,
        # bf16, shape (H, W*C).  acts[i][h] == input row (h + i - 1), zero-padded.
        acts = [x_ref[0, 0], x_ref[0, 1], x_ref[0, 2]]
        fc_rows = None

        for b, (H, W, C, F) in enumerate(specs):
            Ho = H // 2
            half = (W // 2) * F            # lanes of one pool half (=128 here)

            # ---- Conv3x3(pad=1): sum of 3 banded block matmuls (bf16 -> f32).
            def wmat(i, b=b):
                return w0_ref[i] if b == 0 else wrest_ref[b - 1, i]

            y = jnp.dot(acts[0], wmat(0), preferred_element_type=jnp.float32)
            y = y + jnp.dot(acts[1], wmat(1), preferred_element_type=jnp.float32)
            y = y + jnp.dot(acts[2], wmat(2), preferred_element_type=jnp.float32)

            # ---- bias + ReLU (f32); columns are pool-permuted: [even w | odd w].
            z = jnp.maximum(y + bias_ref[b], 0.0)

            # ---- MaxPool over w: aligned 128-lane half max (via column perm).
            u = jnp.maximum(z[:, :half], z[:, half:]).astype(jnp.bfloat16)

            # ---- MaxPool over h (+ the next conv's +-1 row shifts) as tiny
            #      0/1 selection matmuls; out-of-range rows select nothing,
            #      which is exactly the next conv's zero padding.
            if b + 1 < n_blocks:
                row_iota = lax.broadcasted_iota(jnp.int32, (Ho, H), 0)
                col_iota = lax.broadcasted_iota(jnp.int32, (Ho, H), 1)

                def pooled_rows(target, u=u, col_iota=col_iota):
                    sel = jnp.where(col_iota == target, 1.0, 0.0)
                    sel = sel.astype(jnp.bfloat16)
                    return jnp.dot(sel, u, preferred_element_type=jnp.float32)

                acts = []
                for dh in (-1, 0, 1):
                    v = jnp.maximum(pooled_rows(2 * (row_iota + dh)),
                                    pooled_rows(2 * (row_iota + dh) + 1))
                    acts.append(v.astype(jnp.bfloat16))
            else:
                # Last block: emit the Ho (=2) pooled rows separately so the
                # flatten + fc1 contraction needs no reshape at all.
                c1 = lax.broadcasted_iota(jnp.int32, (1, H), 1)
                fc_rows = []
                for r in range(Ho):
                    def pick(p, r=r, u=u, c1=c1):
                        sel = jnp.where(c1 == 2 * r + p, 1.0, 0.0)
                        sel = sel.astype(jnp.bfloat16)
                        return jnp.dot(sel, u,
                                       preferred_element_type=jnp.float32)
                    fc_rows.append(
                        jnp.maximum(pick(0), pick(1)).astype(jnp.bfloat16))

        # ---- Dense head: fc1 (flatten folded into per-row weights) -> ReLU -> fc2.
        hidden = fcb1_ref[...]
        for r, row in enumerate(fc_rows):
            hidden = hidden + jnp.dot(row, fcv_ref[r],
                                      preferred_element_type=jnp.float32)
        hidden = jnp.maximum(hidden, 0.0)
        logits = jnp.dot(hidden, fcw2_ref[...],
                         preferred_element_type=jnp.float32) + fcb2_ref[...]
        o_ref[0] = logits

    return kernel


# ------------------------- host-side weight packing --------------------------

def prepare_kernel_params(params, specs):
    """Build banded conv matrices (pool-permuted columns), tiled biases and
    permuted fc1 weights.  Done once at parameter-setup time."""
    conv_ws, conv_bs = [], []
    for (H, W, C, F), (w, b) in zip(specs, params["conv"]):
        # band[d, w_in, v_out] = 1 iff w_in - v_out == d - 1
        # (kw tap d of output column v_out reads input column v_out + d - 1).
        wi = np.arange(W)
        band = np.stack([(wi[:, None] - wi[None, :]) == (d - 1)
                         for d in range(3)]).astype(np.float32)      # (3, W, W)
        # column permutation: even output columns first, then odd (per-F blocks)
        order = np.concatenate([np.arange(0, W, 2), np.arange(1, W, 2)])
        perm = (order[:, None] * F + np.arange(F)[None, :]).reshape(-1)

        mats = []
        for kh in range(3):
            m = jnp.einsum("dwv,dcf->wcvf", jnp.asarray(band), w[kh])
            m = m.reshape(W * C, W * F)[:, perm]
            mats.append(m)
        conv_ws.append(jnp.stack(mats).astype(jnp.bfloat16))          # (3, W*C, W*F)
        # bias depends only on f, so the column permutation leaves it unchanged
        conv_bs.append(jnp.tile(b, W)[None, :].astype(jnp.float32))   # (1, W*F)

    # All blocks after the first must share the same banded shape to be stacked.
    assert all(cw.shape == conv_ws[1].shape for cw in conv_ws[1:]), \
        [cw.shape for cw in conv_ws]
    w0 = conv_ws[0]                       # (3, W0*C0, W0*F0) = (3, 192, 256)
    wrest = jnp.stack(conv_ws[1:])        # (4, 3, 128, 256)
    biases = jnp.stack(conv_bs)           # (5, 1, 256)

    # fc1: fold the NCHW flatten (index c*Ho*Wo + h*Wo + w) into per-h-row
    # weight matrices indexed by the kernel's lane order (w*F + c).
    w1, b1, w2, b2 = params["fc"]
    Hl, Wl, Cl, Fl = specs[-1]
    Ho, Wo = Hl // 2, Wl // 2
    D = w1.shape[1]
    w1r = w1.reshape(Fl, Ho, Wo, D)                     # rows were (c, h, w)
    fcv = jnp.stack([
        jnp.transpose(w1r[:, h, :, :], (1, 0, 2)).reshape(Wo * Fl, D)
        for h in range(Ho)
    ]).astype(jnp.bfloat16)                             # (Ho, Wo*Fl, D)

    return dict(
        w0=w0, wrest=wrest, biases=biases, fcv=fcv,
        b1=b1.reshape(1, -1).astype(jnp.float32),
        w2=w2.astype(jnp.float32),
        b2=b2.reshape(1, -1).astype(jnp.float32),
    )


def _prepare_inputs(x_nchw, specs):
    """NCHW -> three kh-shifted, lane-dense (H, W*C) bf16 copies per image."""
    H0, W0, C0, _ = specs[0]
    x = jnp.transpose(x_nchw, (0, 2, 3, 1)).astype(jnp.float32)   # NHWC
    N = x.shape[0]
    xr = x.reshape(N, H0, W0 * C0)
    xp = jnp.pad(xr, ((0, 0), (1, 1), (0, 0)))
    xs = jnp.stack([xp[:, 0:H0], xp[:, 1:H0 + 1], xp[:, 2:H0 + 2]], axis=1)
    return xs.astype(jnp.bfloat16)                                 # (N, 3, H0, W0*C0)


def cnn_forward(x_nchw, kparams, *, specs, num_classes=10):
    N = x_nchw.shape[0]
    xs = _prepare_inputs(x_nchw, specs)
    kernel = _make_kernel(specs)
    H0, W0, C0, _ = specs[0]

    out = pl.pallas_call(
        kernel,
        out_shape=jax.ShapeDtypeStruct((N, 1, num_classes), jnp.float32),
        grid=(N,),
        in_specs=[
            pl.BlockSpec((1, 3, H0, W0 * C0), lambda n: (n, 0, 0, 0)),
            pl.BlockSpec(kparams["w0"].shape, lambda n: (0, 0, 0)),
            pl.BlockSpec(kparams["wrest"].shape, lambda n: (0, 0, 0, 0)),
            pl.BlockSpec(kparams["biases"].shape, lambda n: (0, 0, 0)),
            pl.BlockSpec(kparams["fcv"].shape, lambda n: (0, 0, 0)),
            pl.BlockSpec(kparams["b1"].shape, lambda n: (0, 0)),
            pl.BlockSpec(kparams["w2"].shape, lambda n: (0, 0)),
            pl.BlockSpec(kparams["b2"].shape, lambda n: (0, 0)),
        ],
        out_specs=pl.BlockSpec((1, 1, num_classes), lambda n: (n, 0, 0)),
        compiler_params=pltpu.CompilerParams(
            dimension_semantics=("parallel",)),
    )(xs, kparams["w0"], kparams["wrest"], kparams["biases"], kparams["fcv"],
      kparams["b1"], kparams["w2"], kparams["b2"])
    return out[:, 0, :]


# ----------------------- parameters & pure-JAX reference --------------------

def init_params(key, num_filters=4, kernel_size=3, num_dense_neurons=32,
                num_classes=10, in_channels=3):
    filters = [num_filters * (2 ** i) for i in range(5)]
    keys = jax.random.split(key, 2 * len(filters) + 4)
    params = {"conv": [], "fc": None}
    ki = 0
    c_in = in_channels
    for f in filters:
        fan_in = kernel_size * kernel_size * c_in
        w = jax.random.normal(keys[ki], (kernel_size, kernel_size, c_in, f),
                              jnp.float32) / jnp.sqrt(float(fan_in))
        ki += 1
        b = 0.1 * jax.random.normal(keys[ki], (f,), jnp.float32)
        ki += 1
        params["conv"].append((w, b))
        c_in = f
    flattened = filters[-1] * 2 * 2
    w1 = jax.random.normal(keys[ki], (flattened, num_dense_neurons),
                           jnp.float32) / jnp.sqrt(float(flattened)); ki += 1
    b1 = 0.1 * jax.random.normal(keys[ki], (num_dense_neurons,), jnp.float32); ki += 1
    w2 = jax.random.normal(keys[ki], (num_dense_neurons, num_classes),
                           jnp.float32) / jnp.sqrt(float(num_dense_neurons)); ki += 1
    b2 = 0.1 * jax.random.normal(keys[ki], (num_classes,), jnp.float32)
    params["fc"] = (w1, b1, w2, b2)
    return params


def reference_forward(x_nchw, params):
    """Pure-JAX (XLA) reference for numerical sanity checking."""
    x = x_nchw.astype(jnp.float32)
    for (w, b) in params["conv"]:
        w_oihw = jnp.transpose(w, (3, 2, 0, 1))
        x = jax.lax.conv_general_dilated(
            x, w_oihw, window_strides=(1, 1), padding=((1, 1), (1, 1)),
            dimension_numbers=("NCHW", "OIHW", "NCHW"))
        x = jnp.maximum(x + b[None, :, None, None], 0.0)
        x = jax.lax.reduce_window(x, -jnp.inf, jax.lax.max,
                                  (1, 1, 2, 2), (1, 1, 2, 2), "VALID")
    x = x.reshape(x.shape[0], -1)
    w1, b1, w2, b2 = params["fc"]
    x = jnp.maximum(x @ w1 + b1, 0.0)
    return x @ w2 + b2


# ----------------------------------- main ------------------------------------

if __name__ == "__main__":
    key = jax.random.PRNGKey(0)
    pkey, xkey = jax.random.split(key)

    # Small config consistent with the module: num_filters=4 -> filters
    # [4, 8, 16, 32, 64]; input must be 64x64 so that 5 pools give the 2x2
    # spatial the module's flattened_size assumes; dense=32; classes=10.
    num_filters, num_dense, num_classes = 4, 32, 10
    specs = []
    spatial, c_in = 64, 3
    for i in range(5):
        f = num_filters * (2 ** i)
        specs.append((spatial, spatial, c_in, f))
        spatial //= 2
        c_in = f
    specs = tuple(specs)

    params = init_params(pkey, num_filters=num_filters,
                         num_dense_neurons=num_dense, num_classes=num_classes)
    kparams = prepare_kernel_params(params, specs)

    x = jax.random.normal(xkey, (2, 3, 64, 64), jnp.float32)   # NCHW like PyTorch

    fwd = jax.jit(functools.partial(cnn_forward, specs=specs,
                                    num_classes=num_classes))
    out = jax.block_until_ready(fwd(x, kparams))

    assert out.shape == (2, num_classes), out.shape
    assert bool(jnp.all(jnp.isfinite(out)))

    ref = jax.block_until_ready(jax.jit(reference_forward)(x, params))
    err = float(jnp.max(jnp.abs(out - ref)))
    scale = float(jnp.max(jnp.abs(ref)))
    assert err <= 5e-2 * (1.0 + scale), (err, scale)

    print("KERNEL_OK")
</pallas_src>

<mosaic_0001>
module attributes {stable_mosaic.version = 11 : i64} {
  func.func @kernel(%arg0: i32, %arg1: memref<1x3x64x192xbf16, #tpu.memory_space<vmem>>, %arg2: memref<3x192x256xbf16, #tpu.memory_space<vmem>>, %arg3: memref<4x3x128x256xbf16, #tpu.memory_space<vmem>>, %arg4: memref<5x1x256xf32, #tpu.memory_space<vmem>>, %arg5: memref<2x128x32xbf16, #tpu.memory_space<vmem>>, %arg6: memref<1x32xf32, #tpu.memory_space<vmem>>, %arg7: memref<32x10xf32, #tpu.memory_space<vmem>>, %arg8: memref<1x10xf32, #tpu.memory_space<vmem>>, %arg9: memref<1x1x10xf32, #tpu.memory_space<vmem>>) attributes {dimension_semantics = [#tpu.dimension_semantics<parallel>], iteration_bounds = array<i64: 2>, scalar_prefetch = 0 : i64, scratch_operands = 0 : i64, tpu.core_type = #tpu.core_type<tc>, window_params = [{transform_indices = @transform_0, window_bounds = array<i64: 1, 3, 64, 192>}, {pipeline_mode = #tpu.pipeline_mode<synchronous>, transform_indices = @transform_1, window_bounds = array<i64: 3, 192, 256>}, {pipeline_mode = #tpu.pipeline_mode<synchronous>, transform_indices = @transform_2, window_bounds = array<i64: 4, 3, 128, 256>}, {pipeline_mode = #tpu.pipeline_mode<synchronous>, transform_indices = @transform_3, window_bounds = array<i64: 5, 1, 256>}, {pipeline_mode = #tpu.pipeline_mode<synchronous>, transform_indices = @transform_4, window_bounds = array<i64: 2, 128, 32>}, {pipeline_mode = #tpu.pipeline_mode<synchronous>, transform_indices = @transform_5, window_bounds = array<i64: 1, 32>}, {pipeline_mode = #tpu.pipeline_mode<synchronous>, transform_indices = @transform_6, window_bounds = array<i64: 32, 10>}, {pipeline_mode = #tpu.pipeline_mode<synchronous>, transform_indices = @transform_7, window_bounds = array<i64: 1, 10>}, {transform_indices = @transform_8, window_bounds = array<i64: 1, 1, 10>}]} {
    %c0 = arith.constant 0 : index
    %c0_0 = arith.constant 0 : index
    %c0_1 = arith.constant 0 : index
    %c0_2 = arith.constant 0 : index
    %0 = vector.load %arg1[%c0, %c0_0, %c0_1, %c0_2] : memref<1x3x64x192xbf16, #tpu.memory_space<vmem>>, vector<1x1x64x192xbf16>
    %1 = vector.shape_cast %0 : vector<1x1x64x192xbf16> to vector<64x192xbf16>
    %c0_3 = arith.constant 0 : index
    %c1 = arith.constant 1 : index
    %c0_4 = arith.constant 0 : index
    %c0_5 = arith.constant 0 : index
    %2 = vector.load %arg1[%c0_3, %c1, %c0_4, %c0_5] : memref<1x3x64x192xbf16, #tpu.memory_space<vmem>>, vector<1x1x64x192xbf16>
    %3 = vector.shape_cast %2 : vector<1x1x64x192xbf16> to vector<64x192xbf16>
    %c0_6 = arith.constant 0 : index
    %c2 = arith.constant 2 : index
    %c0_7 = arith.constant 0 : index
    %c0_8 = arith.constant 0 : index
    %4 = vector.load %arg1[%c0_6, %c2, %c0_7, %c0_8] : memref<1x3x64x192xbf16, #tpu.memory_space<vmem>>, vector<1x1x64x192xbf16>
    %5 = vector.shape_cast %4 : vector<1x1x64x192xbf16> to vector<64x192xbf16>
    %c0_9 = arith.constant 0 : index
    %c0_10 = arith.constant 0 : index
    %c0_11 = arith.constant 0 : index
    %6 = vector.load %arg2[%c0_9, %c0_10, %c0_11] : memref<3x192x256xbf16, #tpu.memory_space<vmem>>, vector<1x192x256xbf16>
    %7 = vector.shape_cast %6 : vector<1x192x256xbf16> to vector<192x256xbf16>
    %cst = arith.constant dense<0.000000e+00> : vector<64x256xf32>
    %8 = tpu.matmul %1, %7, %cst {dimension_numbers = #tpu.dot_dimension_numbers<[1], [0], [0], [1], [0, 0, 1, 1], [], []>} : vector<64x192xbf16>, vector<192x256xbf16>, vector<64x256xf32> -> vector<64x256xf32>
    %c1_12 = arith.constant 1 : index
    %c0_13 = arith.constant 0 : index
    %c0_14 = arith.constant 0 : index
    %9 = vector.load %arg2[%c1_12, %c0_13, %c0_14] : memref<3x192x256xbf16, #tpu.memory_space<vmem>>, vector<1x192x256xbf16>
    %10 = vector.shape_cast %9 : vector<1x192x256xbf16> to vector<192x256xbf16>
    %cst_15 = arith.constant dense<0.000000e+00> : vector<64x256xf32>
    %11 = tpu.matmul %3, %10, %cst_15 {dimension_numbers = #tpu.dot_dimension_numbers<[1], [0], [0], [1], [0, 0, 1, 1], [], []>} : vector<64x192xbf16>, vector<192x256xbf16>, vector<64x256xf32> -> vector<64x256xf32>
    %12 = arith.addf %8, %11 : vector<64x256xf32>
    %c2_16 = arith.constant 2 : index
    %c0_17 = arith.constant 0 : index
    %c0_18 = arith.constant 0 : index
    %13 = vector.load %arg2[%c2_16, %c0_17, %c0_18] : memref<3x192x256xbf16, #tpu.memory_space<vmem>>, vector<1x192x256xbf16>
    %14 = vector.shape_cast %13 : vector<1x192x256xbf16> to vector<192x256xbf16>
    %cst_19 = arith.constant dense<0.000000e+00> : vector<64x256xf32>
    %15 = tpu.matmul %5, %14, %cst_19 {dimension_numbers = #tpu.dot_dimension_numbers<[1], [0], [0], [1], [0, 0, 1, 1], [], []>} : vector<64x192xbf16>, vector<192x256xbf16>, vector<64x256xf32> -> vector<64x256xf32>
    %16 = arith.addf %12, %15 : vector<64x256xf32>
    %c0_20 = arith.constant 0 : index
    %c0_21 = arith.constant 0 : index
    %c0_22 = arith.constant 0 : index
    %17 = vector.load %arg4[%c0_20, %c0_21, %c0_22] : memref<5x1x256xf32, #tpu.memory_space<vmem>>, vector<1x1x256xf32>
    %18 = vector.shape_cast %17 : vector<1x1x256xf32> to vector<1x256xf32>
    %19 = vector.broadcast %18 : vector<1x256xf32> to vector<64x256xf32>
    %20 = arith.addf %16, %19 : vector<64x256xf32>
    %cst_23 = arith.constant 0.000000e+00 : f32
    %21 = vector.broadcast %cst_23 : f32 to vector<64x256xf32>
    %22 = arith.maximumf %20, %21 : vector<64x256xf32>
    %23 = vector.extract_strided_slice %22 {offsets = [0, 0], sizes = [64, 128], strides = [1, 1]} : vector<64x256xf32> to vector<64x128xf32>
    %24 = vector.extract_strided_slice %22 {offsets = [0, 128], sizes = [64, 128], strides = [1, 1]} : vector<64x256xf32> to vector<64x128xf32>
    %25 = arith.maximumf %23, %24 : vector<64x128xf32>
    %26 = arith.truncf %25 : vector<64x128xf32> to vector<64x128xbf16>
    %27 = tpu.iota {dimensions = array<i32: 0>} : vector<32x64xi32>
    %28 = tpu.iota {dimensions = array<i32: 1>} : vector<32x64xi32>
    %c-1_i32 = arith.constant -1 : i32
    %29 = vector.broadcast %c-1_i32 : i32 to vector<32x64xi32>
    %30 = arith.addi %27, %29 : vector<32x64xi32>
    %c2_i32 = arith.constant 2 : i32
    %31 = vector.broadcast %c2_i32 : i32 to vector<32x64xi32>
    %32 = arith.muli %31, %30 : vector<32x64xi32>
    %33 = arith.cmpi eq, %28, %32 : vector<32x64xi32>
    %cst_24 = arith.constant 1.000000e+00 : f32
    %cst_25 = arith.constant 0.000000e+00 : f32
    %34 = vector.broadcast %cst_24 : f32 to vector<32x64xf32>
    %35 = vector.broadcast %cst_25 : f32 to vector<32x64xf32>
    %36 = arith.select %33, %34, %35 : vector<32x64xi1>, vector<32x64xf32>
    %37 = arith.truncf %36 : vector<32x64xf32> to vector<32x64xbf16>
    %cst_26 = arith.constant dense<0.000000e+00> : vector<32x128xf32>
    %38 = tpu.matmul %37, %26, %cst_26 {dimension_numbers = #tpu.dot_dimension_numbers<[1], [0], [0], [1], [0, 0, 1, 1], [], []>} : vector<32x64xbf16>, vector<64x128xbf16>, vector<32x128xf32> -> vector<32x128xf32>
    %c-1_i32_27 = arith.constant -1 : i32
    %39 = vector.broadcast %c-1_i32_27 : i32 to vector<32x64xi32>
    %40 = arith.addi %27, %39 : vector<32x64xi32>
    %c2_i32_28 = arith.constant 2 : i32
    %41 = vector.broadcast %c2_i32_28 : i32 to vector<32x64xi32>
    %42 = arith.muli %41, %40 : vector<32x64xi32>
    %c1_i32 = arith.constant 1 : i32
    %43 = vector.broadcast %c1_i32 : i32 to vector<32x64xi32>
    %44 = arith.addi %42, %43 : vector<32x64xi32>
    %45 = arith.cmpi eq, %28, %44 : vector<32x64xi32>
    %cst_29 = arith.constant 1.000000e+00 : f32
    %cst_30 = arith.constant 0.000000e+00 : f32
    %46 = vector.broadcast %cst_29 : f32 to vector<32x64xf32>
    %47 = vector.broadcast %cst_30 : f32 to vector<32x64xf32>
    %48 = arith.select %45, %46, %47 : vector<32x64xi1>, vector<32x64xf32>
    %49 = arith.truncf %48 : vector<32x64xf32> to vector<32x64xbf16>
    %cst_31 = arith.constant dense<0.000000e+00> : vector<32x128xf32>
    %50 = tpu.matmul %49, %26, %cst_31 {dimension_numbers = #tpu.dot_dimension_numbers<[1], [0], [0], [1], [0, 0, 1, 1], [], []>} : vector<32x64xbf16>, vector<64x128xbf16>, vector<32x128xf32> -> vector<32x128xf32>
    %51 = arith.maximumf %38, %50 : vector<32x128xf32>
    %52 = arith.truncf %51 : vector<32x128xf32> to vector<32x128xbf16>
    %c0_i32 = arith.constant 0 : i32
    %53 = vector.broadcast %c0_i32 : i32 to vector<32x64xi32>
    %54 = arith.addi %27, %53 : vector<32x64xi32>
    %c2_i32_32 = arith.constant 2 : i32
    %55 = vector.broadcast %c2_i32_32 : i32 to vector<32x64xi32>
    %56 = arith.muli %55, %54 : vector<32x64xi32>
    %57 = arith.cmpi eq, %28, %56 : vector<32x64xi32>
    %cst_33 = arith.constant 1.000000e+00 : f32
    %cst_34 = arith.constant 0.000000e+00 : f32
    %58 = vector.broadcast %cst_33 : f32 to vector<32x64xf32>
    %59 = vector.broadcast %cst_34 : f32 to vector<32x64xf32>
    %60 = arith.select %57, %58, %59 : vector<32x64xi1>, vector<32x64xf32>
    %61 = arith.truncf %60 : vector<32x64xf32> to vector<32x64xbf16>
    %cst_35 = arith.constant dense<0.000000e+00> : vector<32x128xf32>
    %62 = tpu.matmul %61, %26, %cst_35 {dimension_numbers = #tpu.dot_dimension_numbers<[1], [0], [0], [1], [0, 0, 1, 1], [], []>} : vector<32x64xbf16>, vector<64x128xbf16>, vector<32x128xf32> -> vector<32x128xf32>
    %c0_i32_36 = arith.constant 0 : i32
    %63 = vector.broadcast %c0_i32_36 : i32 to vector<32x64xi32>
    %64 = arith.addi %27, %63 : vector<32x64xi32>
    %c2_i32_37 = arith.constant 2 : i32
    %65 = vector.broadcast %c2_i32_37 : i32 to vector<32x64xi32>
    %66 = arith.muli %65, %64 : vector<32x64xi32>
    %c1_i32_38 = arith.constant 1 : i32
    %67 = vector.broadcast %c1_i32_38 : i32 to vector<32x64xi32>
    %68 = arith.addi %66, %67 : vector<32x64xi32>
    %69 = arith.cmpi eq, %28, %68 : vector<32x64xi32>
    %cst_39 = arith.constant 1.000000e+00 : f32
    %cst_40 = arith.constant 0.000000e+00 : f32
    %70 = vector.broadcast %cst_39 : f32 to vector<32x64xf32>
    %71 = vector.broadcast %cst_40 : f32 to vector<32x64xf32>
    %72 = arith.select %69, %70, %71 : vector<32x64xi1>, vector<32x64xf32>
    %73 = arith.truncf %72 : vector<32x64xf32> to vector<32x64xbf16>
    %cst_41 = arith.constant dense<0.000000e+00> : vector<32x128xf32>
    %74 = tpu.matmul %73, %26, %cst_41 {dimension_numbers = #tpu.dot_dimension_numbers<[1], [0], [0], [1], [0, 0, 1, 1], [], []>} : vector<32x64xbf16>, vector<64x128xbf16>, vector<32x128xf32> -> vector<32x128xf32>
    %75 = arith.maximumf %62, %74 : vector<32x128xf32>
    %76 = arith.truncf %75 : vector<32x128xf32> to vector<32x128xbf16>
    %c1_i32_42 = arith.constant 1 : i32
    %77 = vector.broadcast %c1_i32_42 : i32 to vector<32x64xi32>
    %78 = arith.addi %27, %77 : vector<32x64xi32>
    %c2_i32_43 = arith.constant 2 : i32
    %79 = vector.broadcast %c2_i32_43 : i32 to vector<32x64xi32>
    %80 = arith.muli %79, %78 : vector<32x64xi32>
    %81 = arith.cmpi eq, %28, %80 : vector<32x64xi32>
    %cst_44 = arith.constant 1.000000e+00 : f32
    %cst_45 = arith.constant 0.000000e+00 : f32
    %82 = vector.broadcast %cst_44 : f32 to vector<32x64xf32>
    %83 = vector.broadcast %cst_45 : f32 to vector<32x64xf32>
    %84 = arith.select %81, %82, %83 : vector<32x64xi1>, vector<32x64xf32>
    %85 = arith.truncf %84 : vector<32x64xf32> to vector<32x64xbf16>
    %cst_46 = arith.constant dense<0.000000e+00> : vector<32x128xf32>
    %86 = tpu.matmul %85, %26, %cst_46 {dimension_numbers = #tpu.dot_dimension_numbers<[1], [0], [0], [1], [0, 0, 1, 1], [], []>} : vector<32x64xbf16>, vector<64x128xbf16>, vector<32x128xf32> -> vector<32x128xf32>
    %c1_i32_47 = arith.constant 1 : i32
    %87 = vector.broadcast %c1_i32_47 : i32 to vector<32x64xi32>
    %88 = arith.addi %27, %87 : vector<32x64xi32>
    %c2_i32_48 = arith.constant 2 : i32
    %89 = vector.broadcast %c2_i32_48 : i32 to vector<32x64xi32>
    %90 = arith.muli %89, %88 : vector<32x64xi32>
    %c1_i32_49 = arith.constant 1 : i32
    %91 = vector.broadcast %c1_i32_49 : i32 to vector<32x64xi32>
    %92 = arith.addi %90, %91 : vector<32x64xi32>
    %93 = arith.cmpi eq, %28, %92 : vector<32x64xi32>
    %cst_50 = arith.constant 1.000000e+00 : f32
    %cst_51 = arith.constant 0.000000e+00 : f32
    %94 = vector.broadcast %cst_50 : f32 to vector<32x64xf32>
    %95 = vector.broadcast %cst_51 : f32 to vector<32x64xf32>
    %96 = arith.select %93, %94, %95 : vector<32x64xi1>, vector<32x64xf32>
    %97 = arith.truncf %96 : vector<32x64xf32> to vector<32x64xbf16>
    %cst_52 = arith.constant dense<0.000000e+00> : vector<32x128xf32>
    %98 = tpu.matmul %97, %26, %cst_52 {dimension_numbers = #tpu.dot_dimension_numbers<[1], [0], [0], [1], [0, 0, 1, 1], [], []>} : vector<32x64xbf16>, vector<64x128xbf16>, vector<32x128xf32> -> vector<32x128xf32>
    %99 = arith.maximumf %86, %98 : vector<32x128xf32>
    %100 = arith.truncf %99 : vector<32x128xf32> to vector<32x128xbf16>
    %c0_53 = arith.constant 0 : index
    %c0_54 = arith.constant 0 : index
    %c0_55 = arith.constant 0 : index
    %c0_56 = arith.constant 0 : index
    %101 = vector.load %arg3[%c0_53, %c0_54, %c0_55, %c0_56] : memref<4x3x128x256xbf16, #tpu.memory_space<vmem>>, vector<1x1x128x256xbf16>
    %102 = vector.shape_cast %101 : vector<1x1x128x256xbf16> to vector<128x256xbf16>
    %cst_57 = arith.constant dense<0.000000e+00> : vector<32x256xf32>
    %103 = tpu.matmul %52, %102, %cst_57 {dimension_numbers = #tpu.dot_dimension_numbers<[1], [0], [0], [1], [0, 0, 1, 1], [], []>} : vector<32x128xbf16>, vector<128x256xbf16>, vector<32x256xf32> -> vector<32x256xf32>
    %c0_58 = arith.constant 0 : index
    %c1_59 = arith.constant 1 : index
    %c0_60 = arith.constant 0 : index
    %c0_61 = arith.constant 0 : index
    %104 = vector.load %arg3[%c0_58, %c1_59, %c0_60, %c0_61] : memref<4x3x128x256xbf16, #tpu.memory_space<vmem>>, vector<1x1x128x256xbf16>
    %105 = vector.shape_cast %104 : vector<1x1x128x256xbf16> to vector<128x256xbf16>
    %cst_62 = arith.constant dense<0.000000e+00> : vector<32x256xf32>
    %106 = tpu.matmul %76, %105, %cst_62 {dimension_numbers = #tpu.dot_dimension_numbers<[1], [0], [0], [1], [0, 0, 1, 1], [], []>} : vector<32x128xbf16>, vector<128x256xbf16>, vector<32x256xf32> -> vector<32x256xf32>
    %107 = arith.addf %103, %106 : vector<32x256xf32>
    %c0_63 = arith.constant 0 : index
    %c2_64 = arith.constant 2 : index
    %c0_65 = arith.constant 0 : index
    %c0_66 = arith.constant 0 : index
    %108 = vector.load %arg3[%c0_63, %c2_64, %c0_65, %c0_66] : memref<4x3x128x256xbf16, #tpu.memory_space<vmem>>, vector<1x1x128x256xbf16>
    %109 = vector.shape_cast %108 : vector<1x1x128x256xbf16> to vector<128x256xbf16>
    %cst_67 = arith.constant dense<0.000000e+00> : vector<32x256xf32>
    %110 = tpu.matmul %100, %109, %cst_67 {dimension_numbers = #tpu.dot_dimension_numbers<[1], [0], [0], [1], [0, 0, 1, 1], [], []>} : vector<32x128xbf16>, vector<128x256xbf16>, vector<32x256xf32> -> vector<32x256xf32>
    %111 = arith.addf %107, %110 : vector<32x256xf32>
    %c1_68 = arith.constant 1 : index
    %c0_69 = arith.constant 0 : index
    %c0_70 = arith.constant 0 : index
    %112 = vector.load %arg4[%c1_68, %c0_69, %c0_70] : memref<5x1x256xf32, #tpu.memory_space<vmem>>, vector<1x1x256xf32>
    %113 = vector.shape_cast %112 : vector<1x1x256xf32> to vector<1x256xf32>
    %114 = vector.broadcast %113 : vector<1x256xf32> to vector<32x256xf32>
    %115 = arith.addf %111, %114 : vector<32x256xf32>
    %cst_71 = arith.constant 0.000000e+00 : f32
    %116 = vector.broadcast %cst_71 : f32 to vector<32x256xf32>
    %117 = arith.maximumf %115, %116 : vector<32x256xf32>
    %118 = vector.extract_strided_slice %117 {offsets = [0, 0], sizes = [32, 128], strides = [1, 1]} : vector<32x256xf32> to vector<32x128xf32>
    %119 = vector.extract_strided_slice %117 {offsets = [0, 128], sizes = [32, 128], strides = [1, 1]} : vector<32x256xf32> to vector<32x128xf32>
    %120 = arith.maximumf %118, %119 : vector<32x128xf32>
    %121 = arith.truncf %120 : vector<32x128xf32> to vector<32x128xbf16>
    %122 = tpu.iota {dimensions = array<i32: 0>} : vector<16x32xi32>
    %123 = tpu.iota {dimensions = array<i32: 1>} : vector<16x32xi32>
    %c-1_i32_72 = arith.constant -1 : i32
    %124 = vector.broadcast %c-1_i32_72 : i32 to vector<16x32xi32>
    %125 = arith.addi %122, %124 : vector<16x32xi32>
    %c2_i32_73 = arith.constant 2 : i32
    %126 = vector.broadcast %c2_i32_73 : i32 to vector<16x32xi32>
    %127 = arith.muli %126, %125 : vector<16x32xi32>
    %128 = arith.cmpi eq, %123, %127 : vector<16x32xi32>
    %cst_74 = arith.constant 1.000000e+00 : f32
    %cst_75 = arith.constant 0.000000e+00 : f32
    %129 = vector.broadcast %cst_74 : f32 to vector<16x32xf32>
    %130 = vector.broadcast %cst_75 : f32 to vector<16x32xf32>
    %131 = arith.select %128, %129, %130 : vector<16x32xi1>, vector<16x32xf32>
    %132 = arith.truncf %131 : vector<16x32xf32> to vector<16x32xbf16>
    %cst_76 = arith.constant dense<0.000000e+00> : vector<16x128xf32>
    %133 = tpu.matmul %132, %121, %cst_76 {dimension_numbers = #tpu.dot_dimension_numbers<[1], [0], [0], [1], [0, 0, 1, 1], [], []>} : vector<16x32xbf16>, vector<32x128xbf16>, vector<16x128xf32> -> vector<16x128xf32>
    %c-1_i32_77 = arith.constant -1 : i32
    %134 = vector.broadcast %c-1_i32_77 : i32 to vector<16x32xi32>
    %135 = arith.addi %122, %134 : vector<16x32xi32>
    %c2_i32_78 = arith.constant 2 : i32
    %136 = vector.broadcast %c2_i32_78 : i32 to vector<16x32xi32>
    %137 = arith.muli %136, %135 : vector<16x32xi32>
    %c1_i32_79 = arith.constant 1 : i32
    %138 = vector.broadcast %c1_i32_79 : i32 to vector<16x32xi32>
    %139 = arith.addi %137, %138 : vector<16x32xi32>
    %140 = arith.cmpi eq, %123, %139 : vector<16x32xi32>
    %cst_80 = arith.constant 1.000000e+00 : f32
    %cst_81 = arith.constant 0.000000e+00 : f32
    %141 = vector.broadcast %cst_80 : f32 to vector<16x32xf32>
    %142 = vector.broadcast %cst_81 : f32 to vector<16x32xf32>
    %143 = arith.select %140, %141, %142 : vector<16x32xi1>, vector<16x32xf32>
    %144 = arith.truncf %143 : vector<16x32xf32> to vector<16x32xbf16>
    %cst_82 = arith.constant dense<0.000000e+00> : vector<16x128xf32>
    %145 = tpu.matmul %144, %121, %cst_82 {dimension_numbers = #tpu.dot_dimension_numbers<[1], [0], [0], [1], [0, 0, 1, 1], [], []>} : vector<16x32xbf16>, vector<32x128xbf16>, vector<16x128xf32> -> vector<16x128xf32>
    %146 = arith.maximumf %133, %145 : vector<16x128xf32>
    %147 = arith.truncf %146 : vector<16x128xf32> to vector<16x128xbf16>
    %c0_i32_83 = arith.constant 0 : i32
    %148 = vector.broadcast %c0_i32_83 : i32 to vector<16x32xi32>
    %149 = arith.addi %122, %148 : vector<16x32xi32>
    %c2_i32_84 = arith.constant 2 : i32
    %150 = vector.broadcast %c2_i32_84 : i32 to vector<16x32xi32>
    %151 = arith.muli %150, %149 : vector<16x32xi32>
    %152 = arith.cmpi eq, %123, %151 : vector<16x32xi32>
    %cst_85 = arith.constant 1.000000e+00 : f32
    %cst_86 = arith.constant 0.000000e+00 : f32
    %153 = vector.broadcast %cst_85 : f32 to vector<16x32xf32>
    %154 = vector.broadcast %cst_86 : f32 to vector<16x32xf32>
    %155 = arith.select %152, %153, %154 : vector<16x32xi1>, vector<16x32xf32>
    %156 = arith.truncf %155 : vector<16x32xf32> to vector<16x32xbf16>
    %cst_87 = arith.constant dense<0.000000e+00> : vector<16x128xf32>
    %157 = tpu.matmul %156, %121, %cst_87 {dimension_numbers = #tpu.dot_dimension_numbers<[1], [0], [0], [1], [0, 0, 1, 1], [], []>} : vector<16x32xbf16>, vector<32x128xbf16>, vector<16x128xf32> -> vector<16x128xf32>
    %c0_i32_88 = arith.constant 0 : i32
    %158 = vector.broadcast %c0_i32_88 : i32 to vector<16x32xi32>
    %159 = arith.addi %122, %158 : vector<16x32xi32>
    %c2_i32_89 = arith.constant 2 : i32
    %160 = vector.broadcast %c2_i32_89 : i32 to vector<16x32xi32>
    %161 = arith.muli %160, %159 : vector<16x32xi32>
    %c1_i32_90 = arith.constant 1 : i32
    %162 = vector.broadcast %c1_i32_90 : i32 to vector<16x32xi32>
    %163 = arith.addi %161, %162 : vector<16x32xi32>
    %164 = arith.cmpi eq, %123, %163 : vector<16x32xi32>
    %cst_91 = arith.constant 1.000000e+00 : f32
    %cst_92 = arith.constant 0.000000e+00 : f32
    %165 = vector.broadcast %cst_91 : f32 to vector<16x32xf32>
    %166 = vector.broadcast %cst_92 : f32 to vector<16x32xf32>
    %167 = arith.select %164, %165, %166 : vector<16x32xi1>, vector<16x32xf32>
    %168 = arith.truncf %167 : vector<16x32xf32> to vector<16x32xbf16>
    %cst_93 = arith.constant dense<0.000000e+00> : vector<16x128xf32>
    %169 = tpu.matmul %168, %121, %cst_93 {dimension_numbers = #tpu.dot_dimension_numbers<[1], [0], [0], [1], [0, 0, 1, 1], [], []>} : vector<16x32xbf16>, vector<32x128xbf16>, vector<16x128xf32> -> vector<16x128xf32>
    %170 = arith.maximumf %157, %169 : vector<16x128xf32>
    %171 = arith.truncf %170 : vector<16x128xf32> to vector<16x128xbf16>
    %c1_i32_94 = arith.constant 1 : i32
    %172 = vector.broadcast %c1_i32_94 : i32 to vector<16x32xi32>
    %173 = arith.addi %122, %172 : vector<16x32xi32>
    %c2_i32_95 = arith.constant 2 : i32
    %174 = vector.broadcast %c2_i32_95 : i32 to vector<16x32xi32>
    %175 = arith.muli %174, %173 : vector<16x32xi32>
    %176 = arith.cmpi eq, %123, %175 : vector<16x32xi32>
    %cst_96 = arith.constant 1.000000e+00 : f32
    %cst_97 = arith.constant 0.000000e+00 : f32
    %177 = vector.broadcast %cst_96 : f32 to vector<16x32xf32>
    %178 = vector.broadcast %cst_97 : f32 to vector<16x32xf32>
    %179 = arith.select %176, %177, %178 : vector<16x32xi1>, vector<16x32xf32>
    %180 = arith.truncf %179 : vector<16x32xf32> to vector<16x32xbf16>
    %cst_98 = arith.constant dense<0.000000e+00> : vector<16x128xf32>
    %181 = tpu.matmul %180, %121, %cst_98 {dimension_numbers = #tpu.dot_dimension_numbers<[1], [0], [0], [1], [0, 0, 1, 1], [], []>} : vector<16x32xbf16>, vector<32x128xbf16>, vector<16x128xf32> -> vector<16x128xf32>
    %c1_i32_99 = arith.constant 1 : i32
    %182 = vector.broadcast %c1_i32_99 : i32 to vector<16x32xi32>
    %183 = arith.addi %122, %182 : vector<16x32xi32>
    %c2_i32_100 = arith.constant 2 : i32
    %184 = vector.broadcast %c2_i32_100 : i32 to vector<16x32xi32>
    %185 = arith.muli %184, %183 : vector<16x32xi32>
    %c1_i32_101 = arith.constant 1 : i32
    %186 = vector.broadcast %c1_i32_101 : i32 to vector<16x32xi32>
    %187 = arith.addi %185, %186 : vector<16x32xi32>
    %188 = arith.cmpi eq, %123, %187 : vector<16x32xi32>
    %cst_102 = arith.constant 1.000000e+00 : f32
    %cst_103 = arith.constant 0.000000e+00 : f32
    %189 = vector.broadcast %cst_102 : f32 to vector<16x32xf32>
    %190 = vector.broadcast %cst_103 : f32 to vector<16x32xf32>
    %191 = arith.select %188, %189, %190 : vector<16x32xi1>, vector<16x32xf32>
    %192 = arith.truncf %191 : vector<16x32xf32> to vector<16x32xbf16>
    %cst_104 = arith.constant dense<0.000000e+00> : vector<16x128xf32>
    %193 = tpu.matmul %192, %121, %cst_104 {dimension_numbers = #tpu.dot_dimension_numbers<[1], [0], [0], [1], [0, 0, 1, 1], [], []>} : vector<16x32xbf16>, vector<32x128xbf16>, vector<16x128xf32> -> vector<16x128xf32>
    %194 = arith.maximumf %181, %193 : vector<16x128xf32>
    %195 = arith.truncf %194 : vector<16x128xf32> to vector<16x128xbf16>
    %c1_105 = arith.constant 1 : index
    %c0_106 = arith.constant 0 : index
    %c0_107 = arith.constant 0 : index
    %c0_108 = arith.constant 0 : index
    %196 = vector.load %arg3[%c1_105, %c0_106, %c0_107, %c0_108] : memref<4x3x128x256xbf16, #tpu.memory_space<vmem>>, vector<1x1x128x256xbf16>
    %197 = vector.shape_cast %196 : vector<1x1x128x256xbf16> to vector<128x256xbf16>
    %cst_109 = arith.constant dense<0.000000e+00> : vector<16x256xf32>
    %198 = tpu.matmul %147, %197, %cst_109 {dimension_numbers = #tpu.dot_dimension_numbers<[1], [0], [0], [1], [0, 0, 1, 1], [], []>} : vector<16x128xbf16>, vector<128x256xbf16>, vector<16x256xf32> -> vector<16x256xf32>
    %c1_110 = arith.constant 1 : index
    %c1_111 = arith.constant 1 : index
    %c0_112 = arith.constant 0 : index
    %c0_113 = arith.constant 0 : index
    %199 = vector.load %arg3[%c1_110, %c1_111, %c0_112, %c0_113] : memref<4x3x128x256xbf16, #tpu.memory_space<vmem>>, vector<1x1x128x256xbf16>
    %200 = vector.shape_cast %199 : vector<1x1x128x256xbf16> to vector<128x256xbf16>
    %cst_114 = arith.constant dense<0.000000e+00> : vector<16x256xf32>
    %201 = tpu.matmul %171, %200, %cst_114 {dimension_numbers = #tpu.dot_dimension_numbers<[1], [0], [0], [1], [0, 0, 1, 1], [], []>} : vector<16x128xbf16>, vector<128x256xbf16>, vector<16x256xf32> -> vector<16x256xf32>
    %202 = arith.addf %198, %201 : vector<16x256xf32>
    %c1_115 = arith.constant 1 : index
    %c2_116 = arith.constant 2 : index
    %c0_117 = arith.constant 0 : index
    %c0_118 = arith.constant 0 : index
    %203 = vector.load %arg3[%c1_115, %c2_116, %c0_117, %c0_118] : memref<4x3x128x256xbf16, #tpu.memory_space<vmem>>, vector<1x1x128x256xbf16>
    %204 = vector.shape_cast %203 : vector<1x1x128x256xbf16> to vector<128x256xbf16>
    %cst_119 = arith.constant dense<0.000000e+00> : vector<16x256xf32>
    %205 = tpu.matmul %195, %204, %cst_119 {dimension_numbers = #tpu.dot_dimension_numbers<[1], [0], [0], [1], [0, 0, 1, 1], [], []>} : vector<16x128xbf16>, vector<128x256xbf16>, vector<16x256xf32> -> vector<16x256xf32>
    %206 = arith.addf %202, %205 : vector<16x256xf32>
    %c2_120 = arith.constant 2 : index
    %c0_121 = arith.constant 0 : index
    %c0_122 = arith.constant 0 : index
    %207 = vector.load %arg4[%c2_120, %c0_121, %c0_122] : memref<5x1x256xf32, #tpu.memory_space<vmem>>, vector<1x1x256xf32>
    %208 = vector.shape_cast %207 : vector<1x1x256xf32> to vector<1x256xf32>
    %209 = vector.broadcast %208 : vector<1x256xf32> to vector<16x256xf32>
    %210 = arith.addf %206, %209 : vector<16x256xf32>
    %cst_123 = arith.constant 0.000000e+00 : f32
    %211 = vector.broadcast %cst_123 : f32 to vector<16x256xf32>
    %212 = arith.maximumf %210, %211 : vector<16x256xf32>
    %213 = vector.extract_strided_slice %212 {offsets = [0, 0], sizes = [16, 128], strides = [1, 1]} : vector<16x256xf32> to vector<16x128xf32>
    %214 = vector.extract_strided_slice %212 {offsets = [0, 128], sizes = [16, 128], strides = [1, 1]} : vector<16x256xf32> to vector<16x128xf32>
    %215 = arith.maximumf %213, %214 : vector<16x128xf32>
    %216 = arith.truncf %215 : vector<16x128xf32> to vector<16x128xbf16>
    %217 = tpu.iota {dimensions = array<i32: 0>} : vector<8x16xi32>
    %218 = tpu.iota {dimensions = array<i32: 1>} : vector<8x16xi32>
    %c-1_i32_124 = arith.constant -1 : i32
    %219 = vector.broadcast %c-1_i32_124 : i32 to vector<8x16xi32>
    %220 = arith.addi %217, %219 : vector<8x16xi32>
    %c2_i32_125 = arith.constant 2 : i32
    %221 = vector.broadcast %c2_i32_125 : i32 to vector<8x16xi32>
    %222 = arith.muli %221, %220 : vector<8x16xi32>
    %223 = arith.cmpi eq, %218, %222 : vector<8x16xi32>
    %cst_126 = arith.constant 1.000000e+00 : f32
    %cst_127 = arith.constant 0.000000e+00 : f32
    %224 = vector.broadcast %cst_126 : f32 to vector<8x16xf32>
    %225 = vector.broadcast %cst_127 : f32 to vector<8x16xf32>
    %226 = arith.select %223, %224, %225 : vector<8x16xi1>, vector<8x16xf32>
    %227 = arith.truncf %226 : vector<8x16xf32> to vector<8x16xbf16>
    %cst_128 = arith.constant dense<0.000000e+00> : vector<8x128xf32>
    %228 = tpu.matmul %227, %216, %cst_128 {dimension_numbers = #tpu.dot_dimension_numbers<[1], [0], [0], [1], [0, 0, 1, 1], [], []>} : vector<8x16xbf16>, vector<16x128xbf16>, vector<8x128xf32> -> vector<8x128xf32>
    %c-1_i32_129 = arith.constant -1 : i32
    %229 = vector.broadcast %c-1_i32_129 : i32 to vector<8x16xi32>
    %230 = arith.addi %217, %229 : vector<8x16xi32>
    %c2_i32_130 = arith.constant 2 : i32
    %231 = vector.broadcast %c2_i32_130 : i32 to vector<8x16xi32>
    %232 = arith.muli %231, %230 : vector<8x16xi32>
    %c1_i32_131 = arith.constant 1 : i32
    %233 = vector.broadcast %c1_i32_131 : i32 to vector<8x16xi32>
    %234 = arith.addi %232, %233 : vector<8x16xi32>
    %235 = arith.cmpi eq, %218, %234 : vector<8x16xi32>
    %cst_132 = arith.constant 1.000000e+00 : f32
    %cst_133 = arith.constant 0.000000e+00 : f32
    %236 = vector.broadcast %cst_132 : f32 to vector<8x16xf32>
    %237 = vector.broadcast %cst_133 : f32 to vector<8x16xf32>
    %238 = arith.select %235, %236, %237 : vector<8x16xi1>, vector<8x16xf32>
    %239 = arith.truncf %238 : vector<8x16xf32> to vector<8x16xbf16>
    %cst_134 = arith.constant dense<0.000000e+00> : vector<8x128xf32>
    %240 = tpu.matmul %239, %216, %cst_134 {dimension_numbers = #tpu.dot_dimension_numbers<[1], [0], [0], [1], [0, 0, 1, 1], [], []>} : vector<8x16xbf16>, vector<16x128xbf16>, vector<8x128xf32> -> vector<8x128xf32>
    %241 = arith.maximumf %228, %240 : vector<8x128xf32>
    %242 = arith.truncf %241 : vector<8x128xf32> to vector<8x128xbf16>
    %c0_i32_135 = arith.constant 0 : i32
    %243 = vector.broadcast %c0_i32_135 : i32 to vector<8x16xi32>
    %244 = arith.addi %217, %243 : vector<8x16xi32>
    %c2_i32_136 = arith.constant 2 : i32
    %245 = vector.broadcast %c2_i32_136 : i32 to vector<8x16xi32>
    %246 = arith.muli %245, %244 : vector<8x16xi32>
    %247 = arith.cmpi eq, %218, %246 : vector<8x16xi32>
    %cst_137 = arith.constant 1.000000e+00 : f32
    %cst_138 = arith.constant 0.000000e+00 : f32
    %248 = vector.broadcast %cst_137 : f32 to vector<8x16xf32>
    %249 = vector.broadcast %cst_138 : f32 to vector<8x16xf32>
    %250 = arith.select %247, %248, %249 : vector<8x16xi1>, vector<8x16xf32>
    %251 = arith.truncf %250 : vector<8x16xf32> to vector<8x16xbf16>
    %cst_139 = arith.constant dense<0.000000e+00> : vector<8x128xf32>
    %252 = tpu.matmul %251, %216, %cst_139 {dimension_numbers = #tpu.dot_dimension_numbers<[1], [0], [0], [1], [0, 0, 1, 1], [], []>} : vector<8x16xbf16>, vector<16x128xbf16>, vector<8x128xf32> -> vector<8x128xf32>
    %c0_i32_140 = arith.constant 0 : i32
    %253 = vector.broadcast %c0_i32_140 : i32 to vector<8x16xi32>
    %254 = arith.addi %217, %253 : vector<8x16xi32>
    %c2_i32_141 = arith.constant 2 : i32
    %255 = vector.broadcast %c2_i32_141 : i32 to vector<8x16xi32>
    %256 = arith.muli %255, %254 : vector<8x16xi32>
    %c1_i32_142 = arith.constant 1 : i32
    %257 = vector.broadcast %c1_i32_142 : i32 to vector<8x16xi32>
    %258 = arith.addi %256, %257 : vector<8x16xi32>
    %259 = arith.cmpi eq, %218, %258 : vector<8x16xi32>
    %cst_143 = arith.constant 1.000000e+00 : f32
    %cst_144 = arith.constant 0.000000e+00 : f32
    %260 = vector.broadcast %cst_143 : f32 to vector<8x16xf32>
    %261 = vector.broadcast %cst_144 : f32 to vector<8x16xf32>
    %262 = arith.select %259, %260, %261 : vector<8x16xi1>, vector<8x16xf32>
    %263 = arith.truncf %262 : vector<8x16xf32> to vector<8x16xbf16>
    %cst_145 = arith.constant dense<0.000000e+00> : vector<8x128xf32>
    %264 = tpu.matmul %263, %216, %cst_145 {dimension_numbers = #tpu.dot_dimension_numbers<[1], [0], [0], [1], [0, 0, 1, 1], [], []>} : vector<8x16xbf16>, vector<16x128xbf16>, vector<8x128xf32> -> vector<8x128xf32>
    %265 = arith.maximumf %252, %264 : vector<8x128xf32>
    %266 = arith.truncf %265 : vector<8x128xf32> to vector<8x128xbf16>
    %c1_i32_146 = arith.constant 1 : i32
    %267 = vector.broadcast %c1_i32_146 : i32 to vector<8x16xi32>
    %268 = arith.addi %217, %267 : vector<8x16xi32>
    %c2_i32_147 = arith.constant 2 : i32
    %269 = vector.broadcast %c2_i32_147 : i32 to vector<8x16xi32>
    %270 = arith.muli %269, %268 : vector<8x16xi32>
    %271 = arith.cmpi eq, %218, %270 : vector<8x16xi32>
    %cst_148 = arith.constant 1.000000e+00 : f32
    %cst_149 = arith.constant 0.000000e+00 : f32
    %272 = vector.broadcast %cst_148 : f32 to vector<8x16xf32>
    %273 = vector.broadcast %cst_149 : f32 to vector<8x16xf32>
    %274 = arith.select %271, %272, %273 : vector<8x16xi1>, vector<8x16xf32>
    %275 = arith.truncf %274 : vector<8x16xf32> to vector<8x16xbf16>
    %cst_150 = arith.constant dense<0.000000e+00> : vector<8x128xf32>
    %276 = tpu.matmul %275, %216, %cst_150 {dimension_numbers = #tpu.dot_dimension_numbers<[1], [0], [0], [1], [0, 0, 1, 1], [], []>} : vector<8x16xbf16>, vector<16x128xbf16>, vector<8x128xf32> -> vector<8x128xf32>
    %c1_i32_151 = arith.constant 1 : i32
    %277 = vector.broadcast %c1_i32_151 : i32 to vector<8x16xi32>
    %278 = arith.addi %217, %277 : vector<8x16xi32>
    %c2_i32_152 = arith.constant 2 : i32
    %279 = vector.broadcast %c2_i32_152 : i32 to vector<8x16xi32>
    %280 = arith.muli %279, %278 : vector<8x16xi32>
    %c1_i32_153 = arith.constant 1 : i32
    %281 = vector.broadcast %c1_i32_153 : i32 to vector<8x16xi32>
    %282 = arith.addi %280, %281 : vector<8x16xi32>
    %283 = arith.cmpi eq, %218, %282 : vector<8x16xi32>
    %cst_154 = arith.constant 1.000000e+00 : f32
    %cst_155 = arith.constant 0.000000e+00 : f32
    %284 = vector.broadcast %cst_154 : f32 to vector<8x16xf32>
    %285 = vector.broadcast %cst_155 : f32 to vector<8x16xf32>
    %286 = arith.select %283, %284, %285 : vector<8x16xi1>, vector<8x16xf32>
    %287 = arith.truncf %286 : vector<8x16xf32> to vector<8x16xbf16>
    %cst_156 = arith.constant dense<0.000000e+00> : vector<8x128xf32>
    %288 = tpu.matmul %287, %216, %cst_156 {dimension_numbers = #tpu.dot_dimension_numbers<[1], [0], [0], [1], [0, 0, 1, 1], [], []>} : vector<8x16xbf16>, vector<16x128xbf16>, vector<8x128xf32> -> vector<8x128xf32>
    %289 = arith.maximumf %276, %288 : vector<8x128xf32>
    %290 = arith.truncf %289 : vector<8x128xf32> to vector<8x128xbf16>
    %c2_157 = arith.constant 2 : index
    %c0_158 = arith.constant 0 : index
    %c0_159 = arith.constant 0 : index
    %c0_160 = arith.constant 0 : index
    %291 = vector.load %arg3[%c2_157, %c0_158, %c0_159, %c0_160] : memref<4x3x128x256xbf16, #tpu.memory_space<vmem>>, vector<1x1x128x256xbf16>
    %292 = vector.shape_cast %291 : vector<1x1x128x256xbf16> to vector<128x256xbf16>
    %cst_161 = arith.constant dense<0.000000e+00> : vector<8x256xf32>
    %293 = tpu.matmul %242, %292, %cst_161 {dimension_numbers = #tpu.dot_dimension_numbers<[1], [0], [0], [1], [0, 0, 1, 1], [], []>} : vector<8x128xbf16>, vector<128x256xbf16>, vector<8x256xf32> -> vector<8x256xf32>
    %c2_162 = arith.constant 2 : index
    %c1_163 = arith.constant 1 : index
    %c0_164 = arith.constant 0 : index
    %c0_165 = arith.constant 0 : index
    %294 = vector.load %arg3[%c2_162, %c1_163, %c0_164, %c0_165] : memref<4x3x128x256xbf16, #tpu.memory_space<vmem>>, vector<1x1x128x256xbf16>
    %295 = vector.shape_cast %294 : vector<1x1x128x256xbf16> to vector<128x256xbf16>
    %cst_166 = arith.constant dense<0.000000e+00> : vector<8x256xf32>
    %296 = tpu.matmul %266, %295, %cst_166 {dimension_numbers = #tpu.dot_dimension_numbers<[1], [0], [0], [1], [0, 0, 1, 1], [], []>} : vector<8x128xbf16>, vector<128x256xbf16>, vector<8x256xf32> -> vector<8x256xf32>
    %297 = arith.addf %293, %296 : vector<8x256xf32>
    %c2_167 = arith.constant 2 : index
    %c2_168 = arith.constant 2 : index
    %c0_169 = arith.constant 0 : index
    %c0_170 = arith.constant 0 : index
    %298 = vector.load %arg3[%c2_167, %c2_168, %c0_169, %c0_170] : memref<4x3x128x256xbf16, #tpu.memory_space<vmem>>, vector<1x1x128x256xbf16>
    %299 = vector.shape_cast %298 : vector<1x1x128x256xbf16> to vector<128x256xbf16>
    %cst_171 = arith.constant dense<0.000000e+00> : vector<8x256xf32>
    %300 = tpu.matmul %290, %299, %cst_171 {dimension_numbers = #tpu.dot_dimension_numbers<[1], [0], [0], [1], [0, 0, 1, 1], [], []>} : vector<8x128xbf16>, vector<128x256xbf16>, vector<8x256xf32> -> vector<8x256xf32>
    %301 = arith.addf %297, %300 : vector<8x256xf32>
    %c3 = arith.constant 3 : index
    %c0_172 = arith.constant 0 : index
    %c0_173 = arith.constant 0 : index
    %302 = vector.load %arg4[%c3, %c0_172, %c0_173] : memref<5x1x256xf32, #tpu.memory_space<vmem>>, vector<1x1x256xf32>
    %303 = vector.shape_cast %302 : vector<1x1x256xf32> to vector<1x256xf32>
    %304 = vector.broadcast %303 : vector<1x256xf32> to vector<8x256xf32>
    %305 = arith.addf %301, %304 : vector<8x256xf32>
    %cst_174 = arith.constant 0.000000e+00 : f32
    %306 = vector.broadcast %cst_174 : f32 to vector<8x256xf32>
    %307 = arith.maximumf %305, %306 : vector<8x256xf32>
    %308 = vector.extract_strided_slice %307 {offsets = [0, 0], sizes = [8, 128], strides = [1, 1]} : vector<8x256xf32> to vector<8x128xf32>
    %309 = vector.extract_strided_slice %307 {offsets = [0, 128], sizes = [8, 128], strides = [1, 1]} : vector<8x256xf32> to vector<8x128xf32>
    %310 = arith.maximumf %308, %309 : vector<8x128xf32>
    %311 = arith.truncf %310 : vector<8x128xf32> to vector<8x128xbf16>
    %312 = tpu.iota {dimensions = array<i32: 0>} : vector<4x8xi32>
    %313 = tpu.iota {dimensions = array<i32: 1>} : vector<4x8xi32>
    %c-1_i32_175 = arith.constant -1 : i32
    %314 = vector.broadcast %c-1_i32_175 : i32 to vector<4x8xi32>
    %315 = arith.addi %312, %314 : vector<4x8xi32>
    %c2_i32_176 = arith.constant 2 : i32
    %316 = vector.broadcast %c2_i32_176 : i32 to vector<4x8xi32>
    %317 = arith.muli %316, %315 : vector<4x8xi32>
    %318 = arith.cmpi eq, %313, %317 : vector<4x8xi32>
    %cst_177 = arith.constant 1.000000e+00 : f32
    %cst_178 = arith.constant 0.000000e+00 : f32
    %319 = vector.broadcast %cst_177 : f32 to vector<4x8xf32>
    %320 = vector.broadcast %cst_178 : f32 to vector<4x8xf32>
    %321 = arith.select %318, %319, %320 : vector<4x8xi1>, vector<4x8xf32>
    %322 = arith.truncf %321 : vector<4x8xf32> to vector<4x8xbf16>
    %cst_179 = arith.constant dense<0.000000e+00> : vector<4x128xf32>
    %323 = tpu.matmul %322, %311, %cst_179 {dimension_numbers = #tpu.dot_dimension_numbers<[1], [0], [0], [1], [0, 0, 1, 1], [], []>} : vector<4x8xbf16>, vector<8x128xbf16>, vector<4x128xf32> -> vector<4x128xf32>
    %c-1_i32_180 = arith.constant -1 : i32
    %324 = vector.broadcast %c-1_i32_180 : i32 to vector<4x8xi32>
    %325 = arith.addi %312, %324 : vector<4x8xi32>
    %c2_i32_181 = arith.constant 2 : i32
    %326 = vector.broadcast %c2_i32_181 : i32 to vector<4x8xi32>
    %327 = arith.muli %326, %325 : vector<4x8xi32>
    %c1_i32_182 = arith.constant 1 : i32
    %328 = vector.broadcast %c1_i32_182 : i32 to vector<4x8xi32>
    %329 = arith.addi %327, %328 : vector<4x8xi32>
    %330 = arith.cmpi eq, %313, %329 : vector<4x8xi32>
    %cst_183 = arith.constant 1.000000e+00 : f32
    %cst_184 = arith.constant 0.000000e+00 : f32
    %331 = vector.broadcast %cst_183 : f32 to vector<4x8xf32>
    %332 = vector.broadcast %cst_184 : f32 to vector<4x8xf32>
    %333 = arith.select %330, %331, %332 : vector<4x8xi1>, vector<4x8xf32>
    %334 = arith.truncf %333 : vector<4x8xf32> to vector<4x8xbf16>
    %cst_185 = arith.constant dense<0.000000e+00> : vector<4x128xf32>
    %335 = tpu.matmul %334, %311, %cst_185 {dimension_numbers = #tpu.dot_dimension_numbers<[1], [0], [0], [1], [0, 0, 1, 1], [], []>} : vector<4x8xbf16>, vector<8x128xbf16>, vector<4x128xf32> -> vector<4x128xf32>
    %336 = arith.maximumf %323, %335 : vector<4x128xf32>
    %337 = arith.truncf %336 : vector<4x128xf32> to vector<4x128xbf16>
    %c0_i32_186 = arith.constant 0 : i32
    %338 = vector.broadcast %c0_i32_186 : i32 to vector<4x8xi32>
    %339 = arith.addi %312, %338 : vector<4x8xi32>
    %c2_i32_187 = arith.constant 2 : i32
    %340 = vector.broadcast %c2_i32_187 : i32 to vector<4x8xi32>
    %341 = arith.muli %340, %339 : vector<4x8xi32>
    %342 = arith.cmpi eq, %313, %341 : vector<4x8xi32>
    %cst_188 = arith.constant 1.000000e+00 : f32
    %cst_189 = arith.constant 0.000000e+00 : f32
    %343 = vector.broadcast %cst_188 : f32 to vector<4x8xf32>
    %344 = vector.broadcast %cst_189 : f32 to vector<4x8xf32>
    %345 = arith.select %342, %343, %344 : vector<4x8xi1>, vector<4x8xf32>
    %346 = arith.truncf %345 : vector<4x8xf32> to vector<4x8xbf16>
    %cst_190 = arith.constant dense<0.000000e+00> : vector<4x128xf32>
    %347 = tpu.matmul %346, %311, %cst_190 {dimension_numbers = #tpu.dot_dimension_numbers<[1], [0], [0], [1], [0, 0, 1, 1], [], []>} : vector<4x8xbf16>, vector<8x128xbf16>, vector<4x128xf32> -> vector<4x128xf32>
    %c0_i32_191 = arith.constant 0 : i32
    %348 = vector.broadcast %c0_i32_191 : i32 to vector<4x8xi32>
    %349 = arith.addi %312, %348 : vector<4x8xi32>
    %c2_i32_192 = arith.constant 2 : i32
    %350 = vector.broadcast %c2_i32_192 : i32 to vector<4x8xi32>
    %351 = arith.muli %350, %349 : vector<4x8xi32>
    %c1_i32_193 = arith.constant 1 : i32
    %352 = vector.broadcast %c1_i32_193 : i32 to vector<4x8xi32>
    %353 = arith.addi %351, %352 : vector<4x8xi32>
    %354 = arith.cmpi eq, %313, %353 : vector<4x8xi32>
    %cst_194 = arith.constant 1.000000e+00 : f32
    %cst_195 = arith.constant 0.000000e+00 : f32
    %355 = vector.broadcast %cst_194 : f32 to vector<4x8xf32>
    %356 = vector.broadcast %cst_195 : f32 to vector<4x8xf32>
    %357 = arith.select %354, %355, %356 : vector<4x8xi1>, vector<4x8xf32>
    %358 = arith.truncf %357 : vector<4x8xf32> to vector<4x8xbf16>
    %cst_196 = arith.constant dense<0.000000e+00> : vector<4x128xf32>
    %359 = tpu.matmul %358, %311, %cst_196 {dimension_numbers = #tpu.dot_dimension_numbers<[1], [0], [0], [1], [0, 0, 1, 1], [], []>} : vector<4x8xbf16>, vector<8x128xbf16>, vector<4x128xf32> -> vector<4x128xf32>
    %360 = arith.maximumf %347, %359 : vector<4x128xf32>
    %361 = arith.truncf %360 : vector<4x128xf32> to vector<4x128xbf16>
    %c1_i32_197 = arith.constant 1 : i32
    %362 = vector.broadcast %c1_i32_197 : i32 to vector<4x8xi32>
    %363 = arith.addi %312, %362 : vector<4x8xi32>
    %c2_i32_198 = arith.constant 2 : i32
    %364 = vector.broadcast %c2_i32_198 : i32 to vector<4x8xi32>
    %365 = arith.muli %364, %363 : vector<4x8xi32>
    %366 = arith.cmpi eq, %313, %365 : vector<4x8xi32>
    %cst_199 = arith.constant 1.000000e+00 : f32
    %cst_200 = arith.constant 0.000000e+00 : f32
    %367 = vector.broadcast %cst_199 : f32 to vector<4x8xf32>
    %368 = vector.broadcast %cst_200 : f32 to vector<4x8xf32>
    %369 = arith.select %366, %367, %368 : vector<4x8xi1>, vector<4x8xf32>
    %370 = arith.truncf %369 : vector<4x8xf32> to vector<4x8xbf16>
    %cst_201 = arith.constant dense<0.000000e+00> : vector<4x128xf32>
    %371 = tpu.matmul %370, %311, %cst_201 {dimension_numbers = #tpu.dot_dimension_numbers<[1], [0], [0], [1], [0, 0, 1, 1], [], []>} : vector<4x8xbf16>, vector<8x128xbf16>, vector<4x128xf32> -> vector<4x128xf32>
    %c1_i32_202 = arith.constant 1 : i32
    %372 = vector.broadcast %c1_i32_202 : i32 to vector<4x8xi32>
    %373 = arith.addi %312, %372 : vector<4x8xi32>
    %c2_i32_203 = arith.constant 2 : i32
    %374 = vector.broadcast %c2_i32_203 : i32 to vector<4x8xi32>
    %375 = arith.muli %374, %373 : vector<4x8xi32>
    %c1_i32_204 = arith.constant 1 : i32
    %376 = vector.broadcast %c1_i32_204 : i32 to vector<4x8xi32>
    %377 = arith.addi %375, %376 : vector<4x8xi32>
    %378 = arith.cmpi eq, %313, %377 : vector<4x8xi32>
    %cst_205 = arith.constant 1.000000e+00 : f32
    %cst_206 = arith.constant 0.000000e+00 : f32
    %379 = vector.broadcast %cst_205 : f32 to vector<4x8xf32>
    %380 = vector.broadcast %cst_206 : f32 to vector<4x8xf32>
    %381 = arith.select %378, %379, %380 : vector<4x8xi1>, vector<4x8xf32>
    %382 = arith.truncf %381 : vector<4x8xf32> to vector<4x8xbf16>
    %cst_207 = arith.constant dense<0.000000e+00> : vector<4x128xf32>
    %383 = tpu.matmul %382, %311, %cst_207 {dimension_numbers = #tpu.dot_dimension_numbers<[1], [0], [0], [1], [0, 0, 1, 1], [], []>} : vector<4x8xbf16>, vector<8x128xbf16>, vector<4x128xf32> -> vector<4x128xf32>
    %384 = arith.maximumf %371, %383 : vector<4x128xf32>
    %385 = arith.truncf %384 : vector<4x128xf32> to vector<4x128xbf16>
    %c3_208 = arith.constant 3 : index
    %c0_209 = arith.constant 0 : index
    %c0_210 = arith.constant 0 : index
    %c0_211 = arith.constant 0 : index
    %386 = vector.load %arg3[%c3_208, %c0_209, %c0_210, %c0_211] : memref<4x3x128x256xbf16, #tpu.memory_space<vmem>>, vector<1x1x128x256xbf16>
    %387 = vector.shape_cast %386 : vector<1x1x128x256xbf16> to vector<128x256xbf16>
    %cst_212 = arith.constant dense<0.000000e+00> : vector<4x256xf32>
    %388 = tpu.matmul %337, %387, %cst_212 {dimension_numbers = #tpu.dot_dimension_numbers<[1], [0], [0], [1], [0, 0, 1, 1], [], []>} : vector<4x128xbf16>, vector<128x256xbf16>, vector<4x256xf32> -> vector<4x256xf32>
    %c3_213 = arith.constant 3 : index
    %c1_214 = arith.constant 1 : index
    %c0_215 = arith.constant 0 : index
    %c0_216 = arith.constant 0 : index
    %389 = vector.load %arg3[%c3_213, %c1_214, %c0_215, %c0_216] : memref<4x3x128x256xbf16, #tpu.memory_space<vmem>>, vector<1x1x128x256xbf16>
    %390 = vector.shape_cast %389 : vector<1x1x128x256xbf16> to vector<128x256xbf16>
    %cst_217 = arith.constant dense<0.000000e+00> : vector<4x256xf32>
    %391 = tpu.matmul %361, %390, %cst_217 {dimension_numbers = #tpu.dot_dimension_numbers<[1], [0], [0], [1], [0, 0, 1, 1], [], []>} : vector<4x128xbf16>, vector<128x256xbf16>, vector<4x256xf32> -> vector<4x256xf32>
    %392 = arith.addf %388, %391 : vector<4x256xf32>
    %c3_218 = arith.constant 3 : index
    %c2_219 = arith.constant 2 : index
    %c0_220 = arith.constant 0 : index
    %c0_221 = arith.constant 0 : index
    %393 = vector.load %arg3[%c3_218, %c2_219, %c0_220, %c0_221] : memref<4x3x128x256xbf16, #tpu.memory_space<vmem>>, vector<1x1x128x256xbf16>
    %394 = vector.shape_cast %393 : vector<1x1x128x256xbf16> to vector<128x256xbf16>
    %cst_222 = arith.constant dense<0.000000e+00> : vector<4x256xf32>
    %395 = tpu.matmul %385, %394, %cst_222 {dimension_numbers = #tpu.dot_dimension_numbers<[1], [0], [0], [1], [0, 0, 1, 1], [], []>} : vector<4x128xbf16>, vector<128x256xbf16>, vector<4x256xf32> -> vector<4x256xf32>
    %396 = arith.addf %392, %395 : vector<4x256xf32>
    %c4 = arith.constant 4 : index
    %c0_223 = arith.constant 0 : index
    %c0_224 = arith.constant 0 : index
    %397 = vector.load %arg4[%c4, %c0_223, %c0_224] : memref<5x1x256xf32, #tpu.memory_space<vmem>>, vector<1x1x256xf32>
    %398 = vector.shape_cast %397 : vector<1x1x256xf32> to vector<1x256xf32>
    %399 = vector.broadcast %398 : vector<1x256xf32> to vector<4x256xf32>
    %400 = arith.addf %396, %399 : vector<4x256xf32>
    %cst_225 = arith.constant 0.000000e+00 : f32
    %401 = vector.broadcast %cst_225 : f32 to vector<4x256xf32>
    %402 = arith.maximumf %400, %401 : vector<4x256xf32>
    %403 = vector.extract_strided_slice %402 {offsets = [0, 0], sizes = [4, 128], strides = [1, 1]} : vector<4x256xf32> to vector<4x128xf32>
    %404 = vector.extract_strided_slice %402 {offsets = [0, 128], sizes = [4, 128], strides = [1, 1]} : vector<4x256xf32> to vector<4x128xf32>
    %405 = arith.maximumf %403, %404 : vector<4x128xf32>
    %406 = arith.truncf %405 : vector<4x128xf32> to vector<4x128xbf16>
    %407 = tpu.iota {dimensions = array<i32: 1>} : vector<1x4xi32>
    %c0_i32_226 = arith.constant 0 : i32
    %408 = vector.broadcast %c0_i32_226 : i32 to vector<1x4xi32>
    %409 = arith.cmpi eq, %407, %408 : vector<1x4xi32>
    %cst_227 = arith.constant 1.000000e+00 : f32
    %cst_228 = arith.constant 0.000000e+00 : f32
    %410 = vector.broadcast %cst_227 : f32 to vector<1x4xf32>
    %411 = vector.broadcast %cst_228 : f32 to vector<1x4xf32>
    %412 = arith.select %409, %410, %411 : vector<1x4xi1>, vector<1x4xf32>
    %413 = arith.truncf %412 : vector<1x4xf32> to vector<1x4xbf16>
    %cst_229 = arith.constant dense<0.000000e+00> : vector<1x128xf32>
    %414 = tpu.matmul %413, %406, %cst_229 {dimension_numbers = #tpu.dot_dimension_numbers<[1], [0], [0], [1], [0, 0, 1, 1], [], []>} : vector<1x4xbf16>, vector<4x128xbf16>, vector<1x128xf32> -> vector<1x128xf32>
    %c1_i32_230 = arith.constant 1 : i32
    %415 = vector.broadcast %c1_i32_230 : i32 to vector<1x4xi32>
    %416 = arith.cmpi eq, %407, %415 : vector<1x4xi32>
    %cst_231 = arith.constant 1.000000e+00 : f32
    %cst_232 = arith.constant 0.000000e+00 : f32
    %417 = vector.broadcast %cst_231 : f32 to vector<1x4xf32>
    %418 = vector.broadcast %cst_232 : f32 to vector<1x4xf32>
    %419 = arith.select %416, %417, %418 : vector<1x4xi1>, vector<1x4xf32>
    %420 = arith.truncf %419 : vector<1x4xf32> to vector<1x4xbf16>
    %cst_233 = arith.constant dense<0.000000e+00> : vector<1x128xf32>
    %421 = tpu.matmul %420, %406, %cst_233 {dimension_numbers = #tpu.dot_dimension_numbers<[1], [0], [0], [1], [0, 0, 1, 1], [], []>} : vector<1x4xbf16>, vector<4x128xbf16>, vector<1x128xf32> -> vector<1x128xf32>
    %422 = arith.maximumf %414, %421 : vector<1x128xf32>
    %423 = arith.truncf %422 : vector<1x128xf32> to vector<1x128xbf16>
    %c2_i32_234 = arith.constant 2 : i32
    %424 = vector.broadcast %c2_i32_234 : i32 to vector<1x4xi32>
    %425 = arith.cmpi eq, %407, %424 : vector<1x4xi32>
    %cst_235 = arith.constant 1.000000e+00 : f32
    %cst_236 = arith.constant 0.000000e+00 : f32
    %426 = vector.broadcast %cst_235 : f32 to vector<1x4xf32>
    %427 = vector.broadcast %cst_236 : f32 to vector<1x4xf32>
    %428 = arith.select %425, %426, %427 : vector<1x4xi1>, vector<1x4xf32>
    %429 = arith.truncf %428 : vector<1x4xf32> to vector<1x4xbf16>
    %cst_237 = arith.constant dense<0.000000e+00> : vector<1x128xf32>
    %430 = tpu.matmul %429, %406, %cst_237 {dimension_numbers = #tpu.dot_dimension_numbers<[1], [0], [0], [1], [0, 0, 1, 1], [], []>} : vector<1x4xbf16>, vector<4x128xbf16>, vector<1x128xf32> -> vector<1x128xf32>
    %c3_i32 = arith.constant 3 : i32
    %431 = vector.broadcast %c3_i32 : i32 to vector<1x4xi32>
    %432 = arith.cmpi eq, %407, %431 : vector<1x4xi32>
    %cst_238 = arith.constant 1.000000e+00 : f32
    %cst_239 = arith.constant 0.000000e+00 : f32
    %433 = vector.broadcast %cst_238 : f32 to vector<1x4xf32>
    %434 = vector.broadcast %cst_239 : f32 to vector<1x4xf32>
    %435 = arith.select %432, %433, %434 : vector<1x4xi1>, vector<1x4xf32>
    %436 = arith.truncf %435 : vector<1x4xf32> to vector<1x4xbf16>
    %cst_240 = arith.constant dense<0.000000e+00> : vector<1x128xf32>
    %437 = tpu.matmul %436, %406, %cst_240 {dimension_numbers = #tpu.dot_dimension_numbers<[1], [0], [0], [1], [0, 0, 1, 1], [], []>} : vector<1x4xbf16>, vector<4x128xbf16>, vector<1x128xf32> -> vector<1x128xf32>
    %438 = arith.maximumf %430, %437 : vector<1x128xf32>
    %439 = arith.truncf %438 : vector<1x128xf32> to vector<1x128xbf16>
    %c0_241 = arith.constant 0 : index
    %c0_242 = arith.constant 0 : index
    %440 = vector.load %arg6[%c0_241, %c0_242] : memref<1x32xf32, #tpu.memory_space<vmem>>, vector<1x32xf32>
    %c0_243 = arith.constant 0 : index
    %c0_244 = arith.constant 0 : index
    %c0_245 = arith.constant 0 : index
    %441 = vector.load %arg5[%c0_243, %c0_244, %c0_245] : memref<2x128x32xbf16, #tpu.memory_space<vmem>>, vector<1x128x32xbf16>
    %442 = vector.shape_cast %441 : vector<1x128x32xbf16> to vector<128x32xbf16>
    %cst_246 = arith.constant dense<0.000000e+00> : vector<1x32xf32>
    %443 = tpu.matmul %423, %442, %cst_246 {dimension_numbers = #tpu.dot_dimension_numbers<[1], [0], [0], [1], [0, 0, 1, 1], [], []>} : vector<1x128xbf16>, vector<128x32xbf16>, vector<1x32xf32> -> vector<1x32xf32>
    %444 = arith.addf %440, %443 : vector<1x32xf32>
    %c1_247 = arith.constant 1 : index
    %c0_248 = arith.constant 0 : index
    %c0_249 = arith.constant 0 : index
    %445 = vector.load %arg5[%c1_247, %c0_248, %c0_249] : memref<2x128x32xbf16, #tpu.memory_space<vmem>>, vector<1x128x32xbf16>
    %446 = vector.shape_cast %445 : vector<1x128x32xbf16> to vector<128x32xbf16>
    %cst_250 = arith.constant dense<0.000000e+00> : vector<1x32xf32>
    %447 = tpu.matmul %439, %446, %cst_250 {dimension_numbers = #tpu.dot_dimension_numbers<[1], [0], [0], [1], [0, 0, 1, 1], [], []>} : vector<1x128xbf16>, vector<128x32xbf16>, vector<1x32xf32> -> vector<1x32xf32>
    %448 = arith.addf %444, %447 : vector<1x32xf32>
    %cst_251 = arith.constant 0.000000e+00 : f32
    %449 = vector.broadcast %cst_251 : f32 to vector<1x32xf32>
    %450 = arith.maximumf %448, %449 : vector<1x32xf32>
    %c0_252 = arith.constant 0 : index
    %c0_253 = arith.constant 0 : index
    %451 = vector.load %arg7[%c0_252, %c0_253] : memref<32x10xf32, #tpu.memory_space<vmem>>, vector<32x10xf32>
    %cst_254 = arith.constant dense<0.000000e+00> : vector<1x10xf32>
    %452 = tpu.matmul %450, %451, %cst_254 {dimension_numbers = #tpu.dot_dimension_numbers<[1], [0], [0], [1], [0, 0, 1, 1], [], []>} : vector<1x32xf32>, vector<32x10xf32>, vector<1x10xf32> -> vector<1x10xf32>
    %c0_255 = arith.constant 0 : index
    %c0_256 = arith.constant 0 : index
    %453 = vector.load %arg8[%c0_255, %c0_256] : memref<1x10xf32, #tpu.memory_space<vmem>>, vector<1x10xf32>
    %454 = arith.addf %452, %453 : vector<1x10xf32>
    %c0_257 = arith.constant 0 : index
    %c0_258 = arith.constant 0 : index
    %c0_259 = arith.constant 0 : index
    %455 = vector.load %arg9[%c0_257, %c0_258, %c0_259] : memref<1x1x10xf32, #tpu.memory_space<vmem>>, vector<1x1x10xf32>
    %456 = vector.shape_cast %455 : vector<1x1x10xf32> to vector<1x10xf32>
    %457 = vector.shape_cast %454 : vector<1x10xf32> to vector<1x1x10xf32>
    tpu.vector_store %arg9[%c0_257, %c0_258, %c0_259], %457 {strides = array<i32>} : memref<1x1x10xf32, #tpu.memory_space<vmem>>, vector<1x1x10xf32>,
    return
  }
  func.func @transform_0(%arg0: i32) -> (i32, i32, i32, i32) {
    %c0_i32 = arith.constant 0 : i32
    %c0_i32_0 = arith.constant 0 : i32
    %c0_i32_1 = arith.constant 0 : i32
    %c0_i32_2 = arith.constant 0 : i32
    return %arg0, %c0_i32, %c0_i32_0, %c0_i32_1 : i32, i32, i32, i32
  }
  func.func @transform_1(%arg0: i32) -> (i32, i32, i32) {
    %c0_i32 = arith.constant 0 : i32
    %c0_i32_0 = arith.constant 0 : i32
    %c0_i32_1 = arith.constant 0 : i32
    %c0_i32_2 = arith.constant 0 : i32
    return %c0_i32, %c0_i32_0, %c0_i32_1 : i32, i32, i32
  }
  func.func @transform_2(%arg0: i32) -> (i32, i32, i32, i32) {
    %c0_i32 = arith.constant 0 : i32
    %c0_i32_0 = arith.constant 0 : i32
    %c0_i32_1 = arith.constant 0 : i32
    %c0_i32_2 = arith.constant 0 : i32
    %c0_i32_3 = arith.constant 0 : i32
    return %c0_i32, %c0_i32_0, %c0_i32_1, %c0_i32_2 : i32, i32, i32, i32
  }
  func.func @transform_3(%arg0: i32) -> (i32, i32, i32) {
    %c0_i32 = arith.constant 0 : i32
    %c0_i32_0 = arith.constant 0 : i32
    %c0_i32_1 = arith.constant 0 : i32
    %c0_i32_2 = arith.constant 0 : i32
    return %c0_i32, %c0_i32_0, %c0_i32_1 : i32, i32, i32
  }
  func.func @transform_4(%arg0: i32) -> (i32, i32, i32) {
    %c0_i32 = arith.constant 0 : i32
    %c0_i32_0 = arith.constant 0 : i32
    %c0_i32_1 = arith.constant 0 : i32
    %c0_i32_2 = arith.constant 0 : i32
    return %c0_i32, %c0_i32_0, %c0_i32_1 : i32, i32, i32
  }
  func.func @transform_5(%arg0: i32) -> (i32, i32) {
    %c0_i32 = arith.constant 0 : i32
    %c0_i32_0 = arith.constant 0 : i32
    %c0_i32_1 = arith.constant 0 : i32
    return %c0_i32, %c0_i32_0 : i32, i32
  }
  func.func @transform_6(%arg0: i32) -> (i32, i32) {
    %c0_i32 = arith.constant 0 : i32
    %c0_i32_0 = arith.constant 0 : i32
    %c0_i32_1 = arith.constant 0 : i32
    return %c0_i32, %c0_i32_0 : i32, i32
  }
  func.func @transform_7(%arg0: i32) -> (i32, i32) {
    %c0_i32 = arith.constant 0 : i32
    %c0_i32_0 = arith.constant 0 : i32
    %c0_i32_1 = arith.constant 0 : i32
    return %c0_i32, %c0_i32_0 : i32, i32
  }
  func.func @transform_8(%arg0: i32) -> (i32, i32, i32) {
    %c0_i32 = arith.constant 0 : i32
    %c0_i32_0 = arith.constant 0 : i32
    %c0_i32_1 = arith.constant 0 : i32
    return %arg0, %c0_i32, %c0_i32_0 : i32, i32, i32
  }
}

</mosaic_0001>

<llo_original>
// kernel: cnn_forward.1
$region0: #{cnn_forward.1}
  #allocation0 [shape = 'u32[]', space=smem, size = 0x4, offset = 0x4, fixed_abs, tag = 'smem constant byte address 0x4 - core index']
  #allocation1 [shape = 'u32[144,128]{1,0:T(1,128)}', space=vmem, size = 0x12000, scoped, tag = 'internal scratch']
  %s0 = inlined_call_operand.vmem [shape: bf16[2,3,64,192], index: 0, kind: input, shape index: {}]
  %s1 = inlined_call_operand.vmem [shape: bf16[3,192,256], index: 1, kind: input, shape index: {}]
  %s2 = inlined_call_operand.vmem [shape: bf16[4,3,128,256], index: 2, kind: input, shape index: {}]
  %s3 = inlined_call_operand.vmem [shape: f32[5,1,256], index: 3, kind: input, shape index: {}]
  %s4 = inlined_call_operand.vmem [shape: bf16[2,128,32], index: 4, kind: input, shape index: {}]
  %s5 = inlined_call_operand.vmem [shape: f32[1,32], index: 5, kind: input, shape index: {}]
  %s6 = inlined_call_operand.vmem [shape: f32[32,10], index: 6, kind: input, shape index: {}]
  %s7 = inlined_call_operand.vmem [shape: f32[1,10], index: 7, kind: input, shape index: {}]
  %s8 = inlined_call_operand.hbm [shape: f32[2,1,10], index: 8, kind: output, shape index: {}]
  %s9 = sld [smem:[#allocation0]]
  $region65: #{cnn_forward.1} parent=0
    _
  %s11 = ssub.s32 1, %s9
  %s12 = scalar_select 0, %s11, %s9
  $region1: #{cnn_forward.1} parent=0
    #allocation2 [shape = 'u8[1024]{0}', space=vmem, size = 0x400, scoped, tag = 'output window, operand 0']
    #allocation3 [shape = 's32[2]{0}', space=sflag, size = 0x8, scoped, tag = 'scoped memory for cnn_forward.1']
    %13 = vsyncpa [#allocation3], 0
    %s14 = scalar_lea.sflag [#allocation3], 1
    %15 = vsyncpa %s14, 0
    loop: start=0, step=1, limit=4
    $region2: #{cnn_forward.1} parent=1 // loop_pre_header
      _
    $region3: #{cnn_forward.1} parent=1 // loop_header
      %s17 = sphi 0, %s21
      %p18 = scmp.ge.s32.totalorder %s17, 4
      %s27 = sphi 0, %s29
      %s30 = sphi 0, %s27
      %s31 = sphi 0, %s30
      %s47 = sphi 0, %s31
      %s51 = sphi 0, %s51
      %s53 = sphi 0, %s51
      %s54 = sphi 0, %s53
      %s68 = sphi 0, %s54
      %s72 = sphi 0, %s72
      %s74 = sphi 0, %s72
      %s75 = sphi 0, %s74
      %s89 = sphi 0, %s75
      %s93 = sphi 0, %s93
      %s95 = sphi 0, %s93
      %s96 = sphi 0, %s95
      %s110 = sphi 0, %s96
      %s114 = sphi 0, %s114
      %s116 = sphi 0, %s114
      %s117 = sphi 0, %s116
      %s131 = sphi 0, %s117
      %s135 = sphi 0, %s135
      %s137 = sphi 0, %s135
      %s138 = sphi 0, %s137
      %s152 = sphi 0, %s138
      %s156 = sphi 0, %s156
      %s158 = sphi 0, %s156
      %s159 = sphi 0, %s158
      %s173 = sphi 0, %s159
      %s177 = sphi 0, %s177
      %s179 = sphi 0, %s177
      %s180 = sphi 0, %s179
      %s194 = sphi 0, %s180
      %s200 = sphi 0, %s202
      %s203 = sphi 0, %s200
      %s204 = sphi 0, %s203
      %s220 = sphi 0, %s204
    $region4: #{cnn_forward.1} parent=1 // loop_header_branch
      %20 = sbr.rel (%p18) target = $region8
    $region5: #{cnn_forward.1} parent=1 // loop_body
      %s22 = ssub.s32 %s17, 1
      %s23 = ssub.s32 %s17, 2
      %s24 = sadd.s32 %s17, 1
      %s25 = ssub.s32 %s17, %s24
      %p26 = scmp.eq.s32.totalorder %s25, 0
      %s28 = sadd.s32 %s27, 1
      %s29 = scalar_select %p26, %s27, %s28
      %p32 = pneg %p26
      %p33 = scmp.eq.s32.totalorder %s17, 1
      %p34 = por %p32, %p33
      %p35 = scmp.ne.s32.totalorder %s27, %s30
      %p36 = scmp.eq.s32.totalorder %s17, 0
      %p37 = por %p35, %p36
      %p38 = scmp.ne.s32.totalorder %s27, %s30
      %p39 = scmp.eq.s32.totalorder %s22, 1
      %p40 = por %p38, %p39
      %p41 = scmp.ne.s32.totalorder %s30, %s31
      %p42 = scmp.eq.s32.totalorder %s22, 0
      %p43 = por %p41, %p42
      %p44 = scmp.ne.s32.totalorder %s30, %s31
      %p45 = scmp.eq.s32.totalorder %s23, 1
      %p46 = por %p44, %p45
      %p48 = scmp.ne.s32.totalorder %s31, %s47
      %p49 = scmp.eq.s32.totalorder %s23, 0
      %p50 = por %p48, %p49
      %s52 = sadd.s32 %s51, 1
      %p55 = scmp.eq.s32.totalorder %s17, 1
      %p56 = scmp.ne.s32.totalorder %s51, %s53
      %p57 = scmp.eq.s32.totalorder %s17, 0
      %p58 = por %p56, %p57
      %p59 = scmp.ne.s32.totalorder %s51, %s53
      %p60 = scmp.eq.s32.totalorder %s22, 1
      %p61 = por %p59, %p60
      %p62 = scmp.ne.s32.totalorder %s53, %s54
      %p63 = scmp.eq.s32.totalorder %s22, 0
      %p64 = por %p62, %p63
      %p65 = scmp.ne.s32.totalorder %s53, %s54
      %p66 = scmp.eq.s32.totalorder %s23, 1
      %p67 = por %p65, %p66
      %p69 = scmp.ne.s32.totalorder %s54, %s68
      %p70 = scmp.eq.s32.totalorder %s23, 0
      %p71 = por %p69, %p70
      %s73 = sadd.s32 %s72, 1
      %p76 = scmp.eq.s32.totalorder %s17, 1
      %p77 = scmp.ne.s32.totalorder %s72, %s74
      %p78 = scmp.eq.s32.totalorder %s17, 0
      %p79 = por %p77, %p78
      %p80 = scmp.ne.s32.totalorder %s72, %s74
      %p81 = scmp.eq.s32.totalorder %s22, 1
      %p82 = por %p80, %p81
      %p83 = scmp.ne.s32.totalorder %s74, %s75
      %p84 = scmp.eq.s32.totalorder %s22, 0
      %p85 = por %p83, %p84
      %p86 = scmp.ne.s32.totalorder %s74, %s75
      %p87 = scmp.eq.s32.totalorder %s23, 1
      %p88 = por %p86, %p87
      %p90 = scmp.ne.s32.totalorder %s75, %s89
      %p91 = scmp.eq.s32.totalorder %s23, 0
      %p92 = por %p90, %p91
      %s94 = sadd.s32 %s93, 1
      %p97 = scmp.eq.s32.totalorder %s17, 1
      %p98 = scmp.ne.s32.totalorder %s93, %s95
      %p99 = scmp.eq.s32.totalorder %s17, 0
      %p100 = por %p98, %p99
      %p101 = scmp.ne.s32.totalorder %s93, %s95
      %p102 = scmp.eq.s32.totalorder %s22, 1
      %p103 = por %p101, %p102
      %p104 = scmp.ne.s32.totalorder %s95, %s96
      %p105 = scmp.eq.s32.totalorder %s22, 0
      %p106 = por %p104, %p105
      %p107 = scmp.ne.s32.totalorder %s95, %s96
      %p108 = scmp.eq.s32.totalorder %s23, 1
      %p109 = por %p107, %p108
      %p111 = scmp.ne.s32.totalorder %s96, %s110
      %p112 = scmp.eq.s32.totalorder %s23, 0
      %p113 = por %p111, %p112
      %s115 = sadd.s32 %s114, 1
      %p118 = scmp.eq.s32.totalorder %s17, 1
      %p119 = scmp.ne.s32.totalorder %s114, %s116
      %p120 = scmp.eq.s32.totalorder %s17, 0
      %p121 = por %p119, %p120
      %p122 = scmp.ne.s32.totalorder %s114, %s116
      %p123 = scmp.eq.s32.totalorder %s22, 1
      %p124 = por %p122, %p123
      %p125 = scmp.ne.s32.totalorder %s116, %s117
      %p126 = scmp.eq.s32.totalorder %s22, 0
      %p127 = por %p125, %p126
      %p128 = scmp.ne.s32.totalorder %s116, %s117
      %p129 = scmp.eq.s32.totalorder %s23, 1
      %p130 = por %p128, %p129
      %p132 = scmp.ne.s32.totalorder %s117, %s131
      %p133 = scmp.eq.s32.totalorder %s23, 0
      %p134 = por %p132, %p133
      %s136 = sadd.s32 %s135, 1
      %p139 = scmp.eq.s32.totalorder %s17, 1
      %p140 = scmp.ne.s32.totalorder %s135, %s137
      %p141 = scmp.eq.s32.totalorder %s17, 0
      %p142 = por %p140, %p141
      %p143 = scmp.ne.s32.totalorder %s135, %s137
      %p144 = scmp.eq.s32.totalorder %s22, 1
      %p145 = por %p143, %p144
      %p146 = scmp.ne.s32.totalorder %s137, %s138
      %p147 = scmp.eq.s32.totalorder %s22, 0
      %p148 = por %p146, %p147
      %p149 = scmp.ne.s32.totalorder %s137, %s138
      %p150 = scmp.eq.s32.totalorder %s23, 1
      %p151 = por %p149, %p150
      %p153 = scmp.ne.s32.totalorder %s138, %s152
      %p154 = scmp.eq.s32.totalorder %s23, 0
      %p155 = por %p153, %p154
      %s157 = sadd.s32 %s156, 1
      %p160 = scmp.eq.s32.totalorder %s17, 1
      %p161 = scmp.ne.s32.totalorder %s156, %s158
      %p162 = scmp.eq.s32.totalorder %s17, 0
      %p163 = por %p161, %p162
      %p164 = scmp.ne.s32.totalorder %s156, %s158
      %p165 = scmp.eq.s32.totalorder %s22, 1
      %p166 = por %p164, %p165
      %p167 = scmp.ne.s32.totalorder %s158, %s159
      %p168 = scmp.eq.s32.totalorder %s22, 0
      %p169 = por %p167, %p168
      %p170 = scmp.ne.s32.totalorder %s158, %s159
      %p171 = scmp.eq.s32.totalorder %s23, 1
      %p172 = por %p170, %p171
      %p174 = scmp.ne.s32.totalorder %s159, %s173
      %p175 = scmp.eq.s32.totalorder %s23, 0
      %p176 = por %p174, %p175
      %s178 = sadd.s32 %s177, 1
      %p181 = scmp.eq.s32.totalorder %s17, 1
      %p182 = scmp.ne.s32.totalorder %s177, %s179
      %p183 = scmp.eq.s32.totalorder %s17, 0
      %p184 = por %p182, %p183
      %p185 = scmp.ne.s32.totalorder %s177, %s179
      %p186 = scmp.eq.s32.totalorder %s22, 1
      %p187 = por %p185, %p186
      %p188 = scmp.ne.s32.totalorder %s179, %s180
      %p189 = scmp.eq.s32.totalorder %s22, 0
      %p190 = por %p188, %p189
      %p191 = scmp.ne.s32.totalorder %s179, %s180
      %p192 = scmp.eq.s32.totalorder %s23, 1
      %p193 = por %p191, %p192
      %p195 = scmp.ne.s32.totalorder %s180, %s194
      %p196 = scmp.eq.s32.totalorder %s23, 0
      %p197 = por %p195, %p196
      %s198 = ssub.s32 %s17, %s24
      %p199 = scmp.eq.s32.totalorder %s198, 0
      %s201 = sadd.s32 %s200, 1
      %s202 = scalar_select %p199, %s200, %s201
      %p205 = pneg %p199
      %p206 = scmp.eq.s32.totalorder %s17, 1
      %p207 = por %p205, %p206
      %p208 = scmp.ne.s32.totalorder %s200, %s203
      %p209 = scmp.eq.s32.totalorder %s17, 0
      %p210 = por %p208, %p209
      %p211 = scmp.ne.s32.totalorder %s200, %s203
      %p212 = scmp.eq.s32.totalorder %s22, 1
      %p213 = por %p211, %p212
      %p214 = scmp.ne.s32.totalorder %s203, %s204
      %p215 = scmp.eq.s32.totalorder %s22, 0
      %p216 = por %p214, %p215
      %p217 = scmp.ne.s32.totalorder %s203, %s204
      %p218 = scmp.eq.s32.totalorder %s23, 1
      %p219 = por %p217, %p218
      %p221 = scmp.ne.s32.totalorder %s204, %s220
      %p222 = scmp.eq.s32.totalorder %s23, 0
      %p223 = por %p221, %p222
      %p224 = scmp.le.s32.totalorder 1, %s17
      %p225 = scmp.lt.s32.totalorder %s17, 3
      %p226 = pnand %p224, %p225
      %p227 = pneg %p226
      // Predicated region
      $region9: #{cnn_forward.1} parent=5 // pred_check
        _
      $region10: #{cnn_forward.1} parent=5 // pred_check_branch
        %229 = sbr.rel (%p226) target = $region12
      $region11: #{cnn_forward.1} parent=5 // pred_region
        %s230 = ssub.s32 %s17, 1
        // Predicated region
        $region13: #{cnn_forward.1} parent=11 // pred_check
          %p231 = pneg %p64
        $region14: #{cnn_forward.1} parent=11 // pred_check_branch
          %233 = sbr.rel (%p231) target = $region16
        $region15: #{cnn_forward.1} parent=11 // pred_region
          _
        $region16: #{cnn_forward.1} parent=11 // pred_fallthru
          _
        // Predicated region
        $region17: #{cnn_forward.1} parent=11 // pred_check
          %p234 = pneg %p85
        $region18: #{cnn_forward.1} parent=11 // pred_check_branch
          %236 = sbr.rel (%p234) target = $region20
        $region19: #{cnn_forward.1} parent=11 // pred_region
          _
        $region20: #{cnn_forward.1} parent=11 // pred_fallthru
          _
        // Predicated region
        $region21: #{cnn_forward.1} parent=11 // pred_check
          %p237 = pneg %p106
        $region22: #{cnn_forward.1} parent=11 // pred_check_branch
          %239 = sbr.rel (%p237) target = $region24
        $region23: #{cnn_forward.1} parent=11 // pred_region
          _
        $region24: #{cnn_forward.1} parent=11 // pred_fallthru
          _
        // Predicated region
        $region25: #{cnn_forward.1} parent=11 // pred_check
          %p240 = pneg %p127
        $region26: #{cnn_forward.1} parent=11 // pred_check_branch
          %242 = sbr.rel (%p240) target = $region28
        $region27: #{cnn_forward.1} parent=11 // pred_region
          _
        $region28: #{cnn_forward.1} parent=11 // pred_fallthru
          _
        // Predicated region
        $region29: #{cnn_forward.1} parent=11 // pred_check
          %p243 = pneg %p148
        $region30: #{cnn_forward.1} parent=11 // pred_check_branch
          %245 = sbr.rel (%p243) target = $region32
        $region31: #{cnn_forward.1} parent=11 // pred_region
          _
        $region32: #{cnn_forward.1} parent=11 // pred_fallthru
          _
        // Predicated region
        $region33: #{cnn_forward.1} parent=11 // pred_check
          %p246 = pneg %p169
        $region34: #{cnn_forward.1} parent=11 // pred_check_branch
          %248 = sbr.rel (%p246) target = $region36
        $region35: #{cnn_forward.1} parent=11 // pred_region
          _
        $region36: #{cnn_forward.1} parent=11 // pred_fallthru
          _
        // Predicated region
        $region37: #{cnn_forward.1} parent=11 // pred_check
          %p249 = pneg %p190
        $region38: #{cnn_forward.1} parent=11 // pred_check_branch
          %251 = sbr.rel (%p249) target = $region40
        $region39: #{cnn_forward.1} parent=11 // pred_region
          _
        $region40: #{cnn_forward.1} parent=11 // pred_fallthru
          _
      $region12: #{cnn_forward.1} parent=5 // pred_fallthru
        _
      %p252 = scmp.lt.s32.totalorder %s17, 2
      // Predicated region
      $region41: #{cnn_forward.1} parent=5 // pred_check
        %p253 = pneg %p252
      $region42: #{cnn_forward.1} parent=5 // pred_check_branch
        %255 = sbr.rel (%p253) target = $region44
      $region43: #{cnn_forward.1} parent=5 // pred_region
        // Predicated region
        $region45: #{cnn_forward.1} parent=43 // pred_check
          %p256 = pneg %p37
        $region46: #{cnn_forward.1} parent=43 // pred_check_branch
          %258 = sbr.rel (%p256) target = $region48
        $region47: #{cnn_forward.1} parent=43 // pred_region
          %p259 = scmp.lt.s32.totalorder %s17, 1
          %s260 = scalar_select %p259, %s17, 1
          %s261 = smul.addr %s260, 48
          %s262 = smul.addr %s261, 4
          %s263 = scalar_lea.vmem %s0, %s262
        $region48: #{cnn_forward.1} parent=43 // pred_fallthru
          _
      $region44: #{cnn_forward.1} parent=5 // pred_fallthru
        _
      %p264 = scmp.le.s32.totalorder 1, %s17
      %p265 = scmp.lt.s32.totalorder %s17, 3
      %p266 = pnand %p264, %p265
      %p267 = pneg %p266
      // Predicated region
      $region49: #{cnn_forward.1} parent=5 // pred_check
        _
      $region50: #{cnn_forward.1} parent=5 // pred_check_branch
        %269 = sbr.rel (%p266) target = $region52
      $region51: #{cnn_forward.1} parent=5 // pred_region
        %s270 = ssub.s32 %s17, 1
        %p271 = scmp.lt.s32.totalorder %s22, 1
        %s272 = scalar_select %p271, %s22, 1
        %s273 = smul.addr %s272, 48
        %s274 = smul.addr %s273, 4
        %s275 = scalar_lea.vmem %s0, %s274
        %p276 = pneg %p43
        %p277 = pneg %p40
        %p278 = pneg %p64
        %p279 = pneg %p61
        %p280 = pneg %p85
        %p281 = pneg %p82
        %p282 = pneg %p106
        %p283 = pneg %p103
        %p284 = pneg %p127
        %p285 = pneg %p124
        %p286 = pneg %p148
        %p287 = pneg %p145
        %p288 = pneg %p169
        %p289 = pneg %p166
        %p290 = pneg %p190
        %p291 = pneg %p187
        %p292 = pneg %p216
        %p293 = pneg %p213
        %s294 = sand.u32 %s203, 1
        %s295 = scalar_lea.sflag [#allocation3], %s294
        %s296 = sand.u32 %s203, 1
        %s297 = scalar_lea.vmem [#allocation2], %s296
        %p298 = scmp.lt.s32.totalorder %s22, 1
        %s299 = scalar_select %p298, %s22, 1
        %s300 = smul.addr %s299, 48
        %s301 = smul.addr %s300, 4
        %s302 = scalar_lea.vmem %s0, %s301
        %v304 = vld [vmem:[%s302] sm:$0xff]
        %v305 = vld [vmem:[%s302 + $0x8] sm:$0xff]
        %v306 = vld [vmem:[%s302 + $0x10] sm:$0xff]
        %v307 = vld [vmem:[%s302 + $0x18] sm:$0xff]
        %v308 = vld [vmem:[%s302 + $0x20] sm:$0xff]
        %v309 = vld [vmem:[%s302 + $0x28] sm:$0xff]
        %v310 = vld [vmem:[%s302 + $0x30] sm:$0xff]
        %v311 = vld [vmem:[%s302 + $0x38] sm:$0xff]
        %s312 = scalar_lea.vmem %s302, 64
        %v313 = vld [vmem:[%s312] sm:$0xff]
        %v314 = vld [vmem:[%s312 + $0x8] sm:$0xff]
        %v315 = vld [vmem:[%s312 + $0x10] sm:$0xff]
        %v316 = vld [vmem:[%s312 + $0x18] sm:$0xff]
        %v317 = vld [vmem:[%s312 + $0x20] sm:$0xff]
        %v318 = vld [vmem:[%s312 + $0x28] sm:$0xff]
        %v319 = vld [vmem:[%s312 + $0x30] sm:$0xff]
        %v320 = vld [vmem:[%s312 + $0x38] sm:$0xff]
        %s321 = scalar_lea.vmem %s302, 128
        %v322 = vld [vmem:[%s321] sm:$0xff]
        %v323 = vld [vmem:[%s321 + $0x8] sm:$0xff]
        %v324 = vld [vmem:[%s321 + $0x10] sm:$0xff]
        %v325 = vld [vmem:[%s321 + $0x18] sm:$0xff]
        %v326 = vld [vmem:[%s321 + $0x20] sm:$0xff]
        %v327 = vld [vmem:[%s321 + $0x28] sm:$0xff]
        %v328 = vld [vmem:[%s321 + $0x30] sm:$0xff]
        %v329 = vld [vmem:[%s321 + $0x38] sm:$0xff]
        %v330 = vld [vmem:[%s1] sm:$0xff]
        %v331 = vld [vmem:[%s1 + $0x8] sm:$0xff]
        %v332 = vld [vmem:[%s1 + $0x10] sm:$0xff]
        %v333 = vld [vmem:[%s1 + $0x18] sm:$0xff]
        %v334 = vld [vmem:[%s1 + $0x20] sm:$0xff]
        %v335 = vld [vmem:[%s1 + $0x28] sm:$0xff]
        %v336 = vld [vmem:[%s1 + $0x30] sm:$0xff]
        %v337 = vld [vmem:[%s1 + $0x38] sm:$0xff]
        %v338 = vld [vmem:[%s1 + $0x40] sm:$0xff]
        %v339 = vld [vmem:[%s1 + $0x48] sm:$0xff]
        %v340 = vld [vmem:[%s1 + $0x50] sm:$0xff]
        %v341 = vld [vmem:[%s1 + $0x58] sm:$0xff]
        %v342 = vld [vmem:[%s1 + $0x60] sm:$0xff]
        %v343 = vld [vmem:[%s1 + $0x68] sm:$0xff]
        %v344 = vld [vmem:[%s1 + $0x70] sm:$0xff]
        %v345 = vld [vmem:[%s1 + $0x78] sm:$0xff]
        %v346 = vld [vmem:[%s1 + $0x80] sm:$0xff]
        %v347 = vld [vmem:[%s1 + $0x88] sm:$0xff]
        %v348 = vld [vmem:[%s1 + $0x90] sm:$0xff]
        %v349 = vld [vmem:[%s1 + $0x98] sm:$0xff]
        %v350 = vld [vmem:[%s1 + $0xa0] sm:$0xff]
        %v351 = vld [vmem:[%s1 + $0xa8] sm:$0xff]
        %v352 = vld [vmem:[%s1 + $0xb0] sm:$0xff]
        %v353 = vld [vmem:[%s1 + $0xb8] sm:$0xff]
        %s354 = scalar_lea.vmem %s1, 192
        %v355 = vld [vmem:[%s354] sm:$0xff]
        %v356 = vld [vmem:[%s354 + $0x8] sm:$0xff]
        %v357 = vld [vmem:[%s354 + $0x10] sm:$0xff]
        %v358 = vld [vmem:[%s354 + $0x18] sm:$0xff]
        %v359 = vld [vmem:[%s354 + $0x20] sm:$0xff]
        %v360 = vld [vmem:[%s354 + $0x28] sm:$0xff]
        %v361 = vld [vmem:[%s354 + $0x30] sm:$0xff]
        %v362 = vld [vmem:[%s354 + $0x38] sm:$0xff]
        %v363 = vld [vmem:[%s354 + $0x40] sm:$0xff]
        %v364 = vld [vmem:[%s354 + $0x48] sm:$0xff]
        %v365 = vld [vmem:[%s354 + $0x50] sm:$0xff]
        %v366 = vld [vmem:[%s354 + $0x58] sm:$0xff]
        %v367 = vld [vmem:[%s354 + $0x60] sm:$0xff]
        %v368 = vld [vmem:[%s354 + $0x68] sm:$0xff]
        %v369 = vld [vmem:[%s354 + $0x70] sm:$0xff]
        %v370 = vld [vmem:[%s354 + $0x78] sm:$0xff]
        %v371 = vld [vmem:[%s354 + $0x80] sm:$0xff]
        %v372 = vld [vmem:[%s354 + $0x88] sm:$0xff]
        %v373 = vld [vmem:[%s354 + $0x90] sm:$0xff]
        %v374 = vld [vmem:[%s354 + $0x98] sm:$0xff]
        %v375 = vld [vmem:[%s354 + $0xa0] sm:$0xff]
        %v376 = vld [vmem:[%s354 + $0xa8] sm:$0xff]
        %v377 = vld [vmem:[%s354 + $0xb0] sm:$0xff]
        %v378 = vld [vmem:[%s354 + $0xb8] sm:$0xff]
        %v387 = vunpack.c.l.b16 %v313
        %v388 = vunpack.c.h.b16 %v313
        %v389 = vunpack.c.l.b16 %v314
        %v390 = vunpack.c.h.b16 %v314
        %v391 = vunpack.c.l.b16 %v315
        %v392 = vunpack.c.h.b16 %v315
        %v393 = vunpack.c.l.b16 %v316
        %v394 = vunpack.c.h.b16 %v316
        %v395 = vunpack.c.l.b16 %v317
        %v396 = vunpack.c.h.b16 %v317
        %v397 = vunpack.c.l.b16 %v318
        %v398 = vunpack.c.h.b16 %v318
        %v399 = vunpack.c.l.b16 %v319
        %v400 = vunpack.c.h.b16 %v319
        %v401 = vunpack.c.l.b16 %v320
        %v402 = vunpack.c.h.b16 %v320
        %v403 = vpack.c.b16 %v389, %v387
        %v404 = vpack.c.b16 %v390, %v388
        %v405 = vpack.c.b16 %v393, %v391
        %v406 = vpack.c.b16 %v394, %v392
        %v407 = vpack.c.b16 %v397, %v395
        %v408 = vpack.c.b16 %v398, %v396
        %v409 = vpack.c.b16 %v401, %v399
        %v410 = vpack.c.b16 %v402, %v400
        %v439 = vunpack.c.l.b16 %v355
        %v440 = vunpack.c.h.b16 %v355
        %v441 = vunpack.c.l.b16 %v356
        %v442 = vunpack.c.h.b16 %v356
        %v443 = vunpack.c.l.b16 %v357
        %v444 = vunpack.c.h.b16 %v357
        %v445 = vunpack.c.l.b16 %v358
        %v446 = vunpack.c.h.b16 %v358
        %v447 = vunpack.c.l.b16 %v359
        %v448 = vunpack.c.h.b16 %v359
        %v449 = vunpack.c.l.b16 %v360
        %v450 = vunpack.c.h.b16 %v360
        %v451 = vunpack.c.l.b16 %v361
        %v452 = vunpack.c.h.b16 %v361
        %v453 = vunpack.c.l.b16 %v362
        %v454 = vunpack.c.h.b16 %v362
        %v455 = vunpack.c.l.b16 %v363
        %v456 = vunpack.c.h.b16 %v363
        %v457 = vunpack.c.l.b16 %v364
        %v458 = vunpack.c.h.b16 %v364
        %v459 = vunpack.c.l.b16 %v365
        %v460 = vunpack.c.h.b16 %v365
        %v461 = vunpack.c.l.b16 %v366
        %v462 = vunpack.c.h.b16 %v366
        %v463 = vunpack.c.l.b16 %v367
        %v464 = vunpack.c.h.b16 %v367
        %v465 = vunpack.c.l.b16 %v368
        %v466 = vunpack.c.h.b16 %v368
        %v467 = vunpack.c.l.b16 %v369
        %v468 = vunpack.c.h.b16 %v369
        %v469 = vunpack.c.l.b16 %v370
        %v470 = vunpack.c.h.b16 %v370
        %v471 = vunpack.c.l.b16 %v371
        %v472 = vunpack.c.h.b16 %v371
        %v473 = vunpack.c.l.b16 %v372
        %v474 = vunpack.c.h.b16 %v372
        %v475 = vunpack.c.l.b16 %v373
        %v476 = vunpack.c.h.b16 %v373
        %v477 = vunpack.c.l.b16 %v374
        %v478 = vunpack.c.h.b16 %v374
        %v479 = vunpack.c.l.b16 %v375
        %v480 = vunpack.c.h.b16 %v375
        %v481 = vunpack.c.l.b16 %v376
        %v482 = vunpack.c.h.b16 %v376
        %v483 = vunpack.c.l.b16 %v377
        %v484 = vunpack.c.h.b16 %v377
        %v485 = vunpack.c.l.b16 %v378
        %v486 = vunpack.c.h.b16 %v378
        %v487 = vpack.c.b16 %v441, %v439
        %v488 = vpack.c.b16 %v442, %v440
        %v489 = vpack.c.b16 %v445, %v443
        %v490 = vpack.c.b16 %v446, %v444
        %v491 = vpack.c.b16 %v449, %v447
        %v492 = vpack.c.b16 %v450, %v448
        %v493 = vpack.c.b16 %v453, %v451
        %v494 = vpack.c.b16 %v454, %v452
        %v495 = vpack.c.b16 %v457, %v455
        %v496 = vpack.c.b16 %v458, %v456
        %v497 = vpack.c.b16 %v461, %v459
        %v498 = vpack.c.b16 %v462, %v460
        %v499 = vpack.c.b16 %v465, %v463
        %v500 = vpack.c.b16 %v466, %v464
        %v501 = vpack.c.b16 %v469, %v467
        %v502 = vpack.c.b16 %v470, %v468
        %v503 = vpack.c.b16 %v473, %v471
        %v504 = vpack.c.b16 %v474, %v472
        %v505 = vpack.c.b16 %v477, %v475
        %v506 = vpack.c.b16 %v478, %v476
        %v507 = vpack.c.b16 %v481, %v479
        %v508 = vpack.c.b16 %v482, %v480
        %v509 = vpack.c.b16 %v485, %v483
        %v510 = vpack.c.b16 %v486, %v484
        %vm535 = vcmask 523264
        %v537 = vsel %vm535, %v404, 0
        %v540 = vsel %vm535, %v406, 0
        %v543 = vsel %vm535, %v408, 0
        %v546 = vsel %vm535, %v410, 0
        %548 = vmatprep.subr.bf16.mxu0 %v488
        %549 = vmatpush1.bf16.msra.mxu0 %v487
        %550 = vmatprep.subr.bf16.mxu0 %v490
        %551 = vmatpush1.bf16.msra.mxu0 %v489
        %552 = vmatprep.subr.bf16.mxu0 %v492
        %553 = vmatpush1.bf16.msra.mxu0 %v491
        %554 = vmatprep.subr.bf16.mxu0 %v494
        %555 = vmatpush1.bf16.msra.mxu0 %v493
        %556 = vmatprep.subr.bf16.mxu0 %v496
        %557 = vmatpush1.bf16.msra.mxu0 %v495
        %558 = vmatprep.subr.bf16.mxu0 %v498
        %559 = vmatpush1.bf16.msra.mxu0 %v497
        %560 = vmatprep.subr.bf16.mxu0 %v500
        %561 = vmatpush1.bf16.msra.mxu0 %v499
        %562 = vmatprep.subr.bf16.mxu0 %v502
        %563 = vmatpush1.bf16.msra.mxu0 %v501
        %564 = vmatprep.subr.bf16.mxu0 %v504
        %565 = vmatpush1.bf16.msra.mxu0 %v503
        %566 = vmatprep.subr.bf16.mxu0 %v506
        %567 = vmatpush1.bf16.msra.mxu0 %v505
        %568 = vmatprep.subr.bf16.mxu0 %v508
        %569 = vmatpush1.bf16.msra.mxu0 %v507
        %570 = vmatprep.subr.bf16.mxu0 %v510
        %571 = vmatpush1.bf16.msra.mxu0 %v509
        %572 = vmatprep.subr.bf16.mxu0 0
        %573 = vmatpush1.bf16.msra.mxu0 0
        %574 = vmatprep.subr.bf16.mxu0 0
        %575 = vmatpush1.bf16.msra.mxu0 0
        %576 = vmatprep.subr.bf16.mxu0 0
        %577 = vmatpush1.bf16.msra.mxu0 0
        %578 = vmatprep.subr.bf16.mxu0 0
        %579 = vmatpush1.bf16.msra.mxu0 0
        %580 = vmatprep.mubr.bf16.mxu0 %v537
        %581 = vmatmul.mubr.bf16.gmra.mrb[0].mxu0 %v403
        %v582 = vpop.f32.mrb[0].mxu0
        %v583 = vadd.f32 0.0, %v582
        %v584 = vpop.f32.mrb[0].mxu0
        %v585 = vadd.f32 0.0, %v584
        %v586 = vpop.f32.mrb[0].mxu0
        %v587 = vadd.f32 0.0, %v586
        %v588 = vpop.f32.mrb[0].mxu0
        %v589 = vadd.f32 0.0, %v588
        %590 = vmatprep.mubr.bf16.mxu0 %v540
        %591 = vmatmul.mubr.bf16.gmra.mrb[0].mxu0 %v405
        %v592 = vpop.f32.mrb[0].mxu0
        %v593 = vadd.f32 0.0, %v592
        %v594 = vpop.f32.mrb[0].mxu0
        %v595 = vadd.f32 0.0, %v594
        %v596 = vpop.f32.mrb[0].mxu0
        %v597 = vadd.f32 0.0, %v596
        %v598 = vpop.f32.mrb[0].mxu0
        %v599 = vadd.f32 0.0, %v598
        %600 = vmatprep.mubr.bf16.mxu0 %v543
        %601 = vmatmul.mubr.bf16.gmra.mrb[0].mxu0 %v407
        %v602 = vpop.f32.mrb[0].mxu0
        %v603 = vadd.f32 0.0, %v602
        %v604 = vpop.f32.mrb[0].mxu0
        %v605 = vadd.f32 0.0, %v604
        %v606 = vpop.f32.mrb[0].mxu0
        %v607 = vadd.f32 0.0, %v606
        %v608 = vpop.f32.mrb[0].mxu0
        %v609 = vadd.f32 0.0, %v608
        %610 = vmatprep.mubr.bf16.mxu0 %v546
        %611 = vmatmul.mubr.bf16.gmra.mrb[0].mxu0 %v409
        %v612 = vpop.f32.mrb[0].mxu0
        %v613 = vadd.f32 0.0, %v612
        %v614 = vpop.f32.mrb[0].mxu0
        %v615 = vadd.f32 0.0, %v614
        %v616 = vpop.f32.mrb[0].mxu0
        %v617 = vadd.f32 0.0, %v616
        %v618 = vpop.f32.mrb[0].mxu0
        %v619 = vadd.f32 0.0, %v618
        %620 = vdwg.mxu0
        %v629 = vunpack.c.l.b16 %v304
        %v630 = vunpack.c.h.b16 %v304
        %v631 = vunpack.c.l.b16 %v305
        %v632 = vunpack.c.h.b16 %v305
        %v633 = vunpack.c.l.b16 %v306
        %v634 = vunpack.c.h.b16 %v306
        %v635 = vunpack.c.l.b16 %v307
        %v636 = vunpack.c.h.b16 %v307
        %v637 = vunpack.c.l.b16 %v308
        %v638 = vunpack.c.h.b16 %v308
        %v639 = vunpack.c.l.b16 %v309
        %v640 = vunpack.c.h.b16 %v309
        %v641 = vunpack.c.l.b16 %v310
        %v642 = vunpack.c.h.b16 %v310
        %v643 = vunpack.c.l.b16 %v311
        %v644 = vunpack.c.h.b16 %v311
        %v645 = vpack.c.b16 %v631, %v629
        %v646 = vpack.c.b16 %v632, %v630
        %v647 = vpack.c.b16 %v635, %v633
        %v648 = vpack.c.b16 %v636, %v634
        %v649 = vpack.c.b16 %v639, %v637
        %v650 = vpack.c.b16 %v640, %v638
        %v651 = vpack.c.b16 %v643, %v641
        %v652 = vpack.c.b16 %v644, %v642
        %v681 = vunpack.c.l.b16 %v330
        %v682 = vunpack.c.h.b16 %v330
        %v683 = vunpack.c.l.b16 %v331
        %v684 = vunpack.c.h.b16 %v331
        %v685 = vunpack.c.l.b16 %v332
        %v686 = vunpack.c.h.b16 %v332
        %v687 = vunpack.c.l.b16 %v333
        %v688 = vunpack.c.h.b16 %v333
        %v689 = vunpack.c.l.b16 %v334
        %v690 = vunpack.c.h.b16 %v334
        %v691 = vunpack.c.l.b16 %v335
        %v692 = vunpack.c.h.b16 %v335
        %v693 = vunpack.c.l.b16 %v336
        %v694 = vunpack.c.h.b16 %v336
        %v695 = vunpack.c.l.b16 %v337
        %v696 = vunpack.c.h.b16 %v337
        %v697 = vunpack.c.l.b16 %v338
        %v698 = vunpack.c.h.b16 %v338
        %v699 = vunpack.c.l.b16 %v339
        %v700 = vunpack.c.h.b16 %v339
        %v701 = vunpack.c.l.b16 %v340
        %v702 = vunpack.c.h.b16 %v340
        %v703 = vunpack.c.l.b16 %v341
        %v704 = vunpack.c.h.b16 %v341
        %v705 = vunpack.c.l.b16 %v342
        %v706 = vunpack.c.h.b16 %v342
        %v707 = vunpack.c.l.b16 %v343
        %v708 = vunpack.c.h.b16 %v343
        %v709 = vunpack.c.l.b16 %v344
        %v710 = vunpack.c.h.b16 %v344
        %v711 = vunpack.c.l.b16 %v345
        %v712 = vunpack.c.h.b16 %v345
        %v713 = vunpack.c.l.b16 %v346
        %v714 = vunpack.c.h.b16 %v346
        %v715 = vunpack.c.l.b16 %v347
        %v716 = vunpack.c.h.b16 %v347
        %v717 = vunpack.c.l.b16 %v348
        %v718 = vunpack.c.h.b16 %v348
        %v719 = vunpack.c.l.b16 %v349
        %v720 = vunpack.c.h.b16 %v349
        %v721 = vunpack.c.l.b16 %v350
        %v722 = vunpack.c.h.b16 %v350
        %v723 = vunpack.c.l.b16 %v351
        %v724 = vunpack.c.h.b16 %v351
        %v725 = vunpack.c.l.b16 %v352
        %v726 = vunpack.c.h.b16 %v352
        %v727 = vunpack.c.l.b16 %v353
        %v728 = vunpack.c.h.b16 %v353
        %v729 = vpack.c.b16 %v683, %v681
        %v730 = vpack.c.b16 %v684, %v682
        %v731 = vpack.c.b16 %v687, %v685
        %v732 = vpack.c.b16 %v688, %v686
        %v733 = vpack.c.b16 %v691, %v689
        %v734 = vpack.c.b16 %v692, %v690
        %v735 = vpack.c.b16 %v695, %v693
        %v736 = vpack.c.b16 %v696, %v694
        %v737 = vpack.c.b16 %v699, %v697
        %v738 = vpack.c.b16 %v700, %v698
        %v739 = vpack.c.b16 %v703, %v701
        %v740 = vpack.c.b16 %v704, %v702
        %v741 = vpack.c.b16 %v707, %v705
        %v742 = vpack.c.b16 %v708, %v706
        %v743 = vpack.c.b16 %v711, %v709
        %v744 = vpack.c.b16 %v712, %v710
        %v745 = vpack.c.b16 %v715, %v713
        %v746 = vpack.c.b16 %v716, %v714
        %v747 = vpack.c.b16 %v719, %v717
        %v748 = vpack.c.b16 %v720, %v718
        %v749 = vpack.c.b16 %v723, %v721
        %v750 = vpack.c.b16 %v724, %v722
        %v751 = vpack.c.b16 %v727, %v725
        %v752 = vpack.c.b16 %v728, %v726
        %v778 = vsel %vm535, %v646, 0
        %v781 = vsel %vm535, %v648, 0
        %v784 = vsel %vm535, %v650, 0
        %v787 = vsel %vm535, %v652, 0
        %789 = vmatprep.subr.bf16.mxu0 %v730
        %790 = vmatpush1.bf16.msra.mxu0 %v729
        %791 = vmatprep.subr.bf16.mxu0 %v732
        %792 = vmatpush1.bf16.msra.mxu0 %v731
        %793 = vmatprep.subr.bf16.mxu0 %v734
        %794 = vmatpush1.bf16.msra.mxu0 %v733
        %795 = vmatprep.subr.bf16.mxu0 %v736
        %796 = vmatpush1.bf16.msra.mxu0 %v735
        %797 = vmatprep.subr.bf16.mxu0 %v738
        %798 = vmatpush1.bf16.msra.mxu0 %v737
        %799 = vmatprep.subr.bf16.mxu0 %v740
        %800 = vmatpush1.bf16.msra.mxu0 %v739
        %801 = vmatprep.subr.bf16.mxu0 %v742
        %802 = vmatpush1.bf16.msra.mxu0 %v741
        %803 = vmatprep.subr.bf16.mxu0 %v744
        %804 = vmatpush1.bf16.msra.mxu0 %v743
        %805 = vmatprep.subr.bf16.mxu0 %v746
        %806 = vmatpush1.bf16.msra.mxu0 %v745
        %807 = vmatprep.subr.bf16.mxu0 %v748
        %808 = vmatpush1.bf16.msra.mxu0 %v747
        %809 = vmatprep.subr.bf16.mxu0 %v750
        %810 = vmatpush1.bf16.msra.mxu0 %v749
        %811 = vmatprep.subr.bf16.mxu0 %v752
        %812 = vmatpush1.bf16.msra.mxu0 %v751
        %813 = vmatprep.subr.bf16.mxu0 0
        %814 = vmatpush1.bf16.msra.mxu0 0
        %815 = vmatprep.subr.bf16.mxu0 0
        %816 = vmatpush1.bf16.msra.mxu0 0
        %817 = vmatprep.subr.bf16.mxu0 0
        %818 = vmatpush1.bf16.msra.mxu0 0
        %819 = vmatprep.subr.bf16.mxu0 0
        %820 = vmatpush1.bf16.msra.mxu0 0
        %821 = vmatprep.mubr.bf16.mxu0 %v778
        %822 = vmatmul.mubr.bf16.gmra.mrb[0].mxu0 %v645
        %v823 = vpop.f32.mrb[0].mxu0
        %v824 = vadd.f32 %v583, %v823
        %v825 = vpop.f32.mrb[0].mxu0
        %v826 = vadd.f32 %v585, %v825
        %v827 = vpop.f32.mrb[0].mxu0
        %v828 = vadd.f32 %v587, %v827
        %v829 = vpop.f32.mrb[0].mxu0
        %v830 = vadd.f32 %v589, %v829
        %831 = vmatprep.mubr.bf16.mxu0 %v781
        %832 = vmatmul.mubr.bf16.gmra.mrb[0].mxu0 %v647
        %v833 = vpop.f32.mrb[0].mxu0
        %v834 = vadd.f32 %v593, %v833
        %v835 = vpop.f32.mrb[0].mxu0
        %v836 = vadd.f32 %v595, %v835
        %v837 = vpop.f32.mrb[0].mxu0
        %v838 = vadd.f32 %v597, %v837
        %v839 = vpop.f32.mrb[0].mxu0
        %v840 = vadd.f32 %v599, %v839
        %841 = vmatprep.mubr.bf16.mxu0 %v784
        %842 = vmatmul.mubr.bf16.gmra.mrb[0].mxu0 %v649
        %v843 = vpop.f32.mrb[0].mxu0
        %v844 = vadd.f32 %v603, %v843
        %v845 = vpop.f32.mrb[0].mxu0
        %v846 = vadd.f32 %v605, %v845
        %v847 = vpop.f32.mrb[0].mxu0
        %v848 = vadd.f32 %v607, %v847
        %v849 = vpop.f32.mrb[0].mxu0
        %v850 = vadd.f32 %v609, %v849
        %851 = vmatprep.mubr.bf16.mxu0 %v787
        %852 = vmatmul.mubr.bf16.gmra.mrb[0].mxu0 %v651
        %v853 = vpop.f32.mrb[0].mxu0
        %v854 = vadd.f32 %v613, %v853
        %v855 = vpop.f32.mrb[0].mxu0
        %v856 = vadd.f32 %v615, %v855
        %v857 = vpop.f32.mrb[0].mxu0
        %v858 = vadd.f32 %v617, %v857
        %v859 = vpop.f32.mrb[0].mxu0
        %v860 = vadd.f32 %v619, %v859
        %861 = vdwg.mxu0
        %s862 = scalar_lea.vmem %s1, 384
        %v863 = vld [vmem:[%s862] sm:$0xff]
        %v864 = vld [vmem:[%s862 + $0x8] sm:$0xff]
        %v865 = vld [vmem:[%s862 + $0x10] sm:$0xff]
        %v866 = vld [vmem:[%s862 + $0x18] sm:$0xff]
        %v867 = vld [vmem:[%s862 + $0x20] sm:$0xff]
        %v868 = vld [vmem:[%s862 + $0x28] sm:$0xff]
        %v869 = vld [vmem:[%s862 + $0x30] sm:$0xff]
        %v870 = vld [vmem:[%s862 + $0x38] sm:$0xff]
        %v871 = vld [vmem:[%s862 + $0x40] sm:$0xff]
        %v872 = vld [vmem:[%s862 + $0x48] sm:$0xff]
        %v873 = vld [vmem:[%s862 + $0x50] sm:$0xff]
        %v874 = vld [vmem:[%s862 + $0x58] sm:$0xff]
        %v875 = vld [vmem:[%s862 + $0x60] sm:$0xff]
        %v876 = vld [vmem:[%s862 + $0x68] sm:$0xff]
        %v877 = vld [vmem:[%s862 + $0x70] sm:$0xff]
        %v878 = vld [vmem:[%s862 + $0x78] sm:$0xff]
        %v879 = vld [vmem:[%s862 + $0x80] sm:$0xff]
        %v880 = vld [vmem:[%s862 + $0x88] sm:$0xff]
        %v881 = vld [vmem:[%s862 + $0x90] sm:$0xff]
        %v882 = vld [vmem:[%s862 + $0x98] sm:$0xff]
        %v883 = vld [vmem:[%s862 + $0xa0] sm:$0xff]
        %v884 = vld [vmem:[%s862 + $0xa8] sm:$0xff]
        %v885 = vld [vmem:[%s862 + $0xb0] sm:$0xff]
        %v886 = vld [vmem:[%s862 + $0xb8] sm:$0xff]
        %v895 = vunpack.c.l.b16 %v322
        %v896 = vunpack.c.h.b16 %v322
        %v897 = vunpack.c.l.b16 %v323
        %v898 = vunpack.c.h.b16 %v323
        %v899 = vunpack.c.l.b16 %v324
        %v900 = vunpack.c.h.b16 %v324
        %v901 = vunpack.c.l.b16 %v325
        %v902 = vunpack.c.h.b16 %v325
        %v903 = vunpack.c.l.b16 %v326
        %v904 = vunpack.c.h.b16 %v326
        %v905 = vunpack.c.l.b16 %v327
        %v906 = vunpack.c.h.b16 %v327
        %v907 = vunpack.c.l.b16 %v328
        %v908 = vunpack.c.h.b16 %v328
        %v909 = vunpack.c.l.b16 %v329
        %v910 = vunpack.c.h.b16 %v329
        %v911 = vpack.c.b16 %v897, %v895
        %v912 = vpack.c.b16 %v898, %v896
        %v913 = vpack.c.b16 %v901, %v899
        %v914 = vpack.c.b16 %v902, %v900
        %v915 = vpack.c.b16 %v905, %v903
        %v916 = vpack.c.b16 %v906, %v904
        %v917 = vpack.c.b16 %v909, %v907
        %v918 = vpack.c.b16 %v910, %v908
        %v947 = vunpack.c.l.b16 %v863
        %v948 = vunpack.c.h.b16 %v863
        %v949 = vunpack.c.l.b16 %v864
        %v950 = vunpack.c.h.b16 %v864
        %v951 = vunpack.c.l.b16 %v865
        %v952 = vunpack.c.h.b16 %v865
        %v953 = vunpack.c.l.b16 %v866
        %v954 = vunpack.c.h.b16 %v866
        %v955 = vunpack.c.l.b16 %v867
        %v956 = vunpack.c.h.b16 %v867
        %v957 = vunpack.c.l.b16 %v868
        %v958 = vunpack.c.h.b16 %v868
        %v959 = vunpack.c.l.b16 %v869
        %v960 = vunpack.c.h.b16 %v869
        %v961 = vunpack.c.l.b16 %v870
        %v962 = vunpack.c.h.b16 %v870
        %v963 = vunpack.c.l.b16 %v871
        %v964 = vunpack.c.h.b16 %v871
        %v965 = vunpack.c.l.b16 %v872
        %v966 = vunpack.c.h.b16 %v872
        %v967 = vunpack.c.l.b16 %v873
        %v968 = vunpack.c.h.b16 %v873
        %v969 = vunpack.c.l.b16 %v874
        %v970 = vunpack.c.h.b16 %v874
        %v971 = vunpack.c.l.b16 %v875
        %v972 = vunpack.c.h.b16 %v875
        %v973 = vunpack.c.l.b16 %v876
        %v974 = vunpack.c.h.b16 %v876
        %v975 = vunpack.c.l.b16 %v877
        %v976 = vunpack.c.h.b16 %v877
        %v977 = vunpack.c.l.b16 %v878
        %v978 = vunpack.c.h.b16 %v878
        %v979 = vunpack.c.l.b16 %v879
        %v980 = vunpack.c.h.b16 %v879
        %v981 = vunpack.c.l.b16 %v880
        %v982 = vunpack.c.h.b16 %v880
        %v983 = vunpack.c.l.b16 %v881
        %v984 = vunpack.c.h.b16 %v881
        %v985 = vunpack.c.l.b16 %v882
        %v986 = vunpack.c.h.b16 %v882
        %v987 = vunpack.c.l.b16 %v883
        %v988 = vunpack.c.h.b16 %v883
        %v989 = vunpack.c.l.b16 %v884
        %v990 = vunpack.c.h.b16 %v884
        %v991 = vunpack.c.l.b16 %v885
        %v992 = vunpack.c.h.b16 %v885
        %v993 = vunpack.c.l.b16 %v886
        %v994 = vunpack.c.h.b16 %v886
        %v995 = vpack.c.b16 %v949, %v947
        %v996 = vpack.c.b16 %v950, %v948
        %v997 = vpack.c.b16 %v953, %v951
        %v998 = vpack.c.b16 %v954, %v952
        %v999 = vpack.c.b16 %v957, %v955
        %v1000 = vpack.c.b16 %v958, %v956
        %v1001 = vpack.c.b16 %v961, %v959
        %v1002 = vpack.c.b16 %v962, %v960
        %v1003 = vpack.c.b16 %v965, %v963
        %v1004 = vpack.c.b16 %v966, %v964
        %v1005 = vpack.c.b16 %v969, %v967
        %v1006 = vpack.c.b16 %v970, %v968
        %v1007 = vpack.c.b16 %v973, %v971
        %v1008 = vpack.c.b16 %v974, %v972
        %v1009 = vpack.c.b16 %v977, %v975
        %v1010 = vpack.c.b16 %v978, %v976
        %v1011 = vpack.c.b16 %v981, %v979
        %v1012 = vpack.c.b16 %v982, %v980
        %v1013 = vpack.c.b16 %v985, %v983
        %v1014 = vpack.c.b16 %v986, %v984
        %v1015 = vpack.c.b16 %v989, %v987
        %v1016 = vpack.c.b16 %v990, %v988
        %v1017 = vpack.c.b16 %v993, %v991
        %v1018 = vpack.c.b16 %v994, %v992
        %v1044 = vsel %vm535, %v912, 0
        %v1047 = vsel %vm535, %v914, 0
        %v1050 = vsel %vm535, %v916, 0
        %v1053 = vsel %vm535, %v918, 0
        %1055 = vmatprep.subr.bf16.mxu0 %v996
        %1056 = vmatpush1.bf16.msra.mxu0 %v995
        %1057 = vmatprep.subr.bf16.mxu0 %v998
        %1058 = vmatpush1.bf16.msra.mxu0 %v997
        %1059 = vmatprep.subr.bf16.mxu0 %v1000
        %1060 = vmatpush1.bf16.msra.mxu0 %v999
        %1061 = vmatprep.subr.bf16.mxu0 %v1002
        %1062 = vmatpush1.bf16.msra.mxu0 %v1001
        %1063 = vmatprep.subr.bf16.mxu0 %v1004
        %1064 = vmatpush1.bf16.msra.mxu0 %v1003
        %1065 = vmatprep.subr.bf16.mxu0 %v1006
        %1066 = vmatpush1.bf16.msra.mxu0 %v1005
        %1067 = vmatprep.subr.bf16.mxu0 %v1008
        %1068 = vmatpush1.bf16.msra.mxu0 %v1007
        %1069 = vmatprep.subr.bf16.mxu0 %v1010
        %1070 = vmatpush1.bf16.msra.mxu0 %v1009
        %1071 = vmatprep.subr.bf16.mxu0 %v1012
        %1072 = vmatpush1.bf16.msra.mxu0 %v1011
        %1073 = vmatprep.subr.bf16.mxu0 %v1014
        %1074 = vmatpush1.bf16.msra.mxu0 %v1013
        %1075 = vmatprep.subr.bf16.mxu0 %v1016
        %1076 = vmatpush1.bf16.msra.mxu0 %v1015
        %1077 = vmatprep.subr.bf16.mxu0 %v1018
        %1078 = vmatpush1.bf16.msra.mxu0 %v1017
        %1079 = vmatprep.subr.bf16.mxu0 0
        %1080 = vmatpush1.bf16.msra.mxu0 0
        %1081 = vmatprep.subr.bf16.mxu0 0
        %1082 = vmatpush1.bf16.msra.mxu0 0
        %1083 = vmatprep.subr.bf16.mxu0 0
        %1084 = vmatpush1.bf16.msra.mxu0 0
        %1085 = vmatprep.subr.bf16.mxu0 0
        %1086 = vmatpush1.bf16.msra.mxu0 0
        %1087 = vmatprep.mubr.bf16.mxu0 %v1044
        %1088 = vmatmul.mubr.bf16.gmra.mrb[0].mxu0 %v911
        %v1089 = vpop.f32.mrb[0].mxu0
        %v1090 = vadd.f32 0.0, %v1089
        %v1091 = vpop.f32.mrb[0].mxu0
        %v1092 = vadd.f32 0.0, %v1091
        %v1093 = vpop.f32.mrb[0].mxu0
        %v1094 = vadd.f32 0.0, %v1093
        %v1095 = vpop.f32.mrb[0].mxu0
        %v1096 = vadd.f32 0.0, %v1095
        %1097 = vmatprep.mubr.bf16.mxu0 %v1047
        %1098 = vmatmul.mubr.bf16.gmra.mrb[0].mxu0 %v913
        %v1099 = vpop.f32.mrb[0].mxu0
        %v1100 = vadd.f32 0.0, %v1099
        %v1101 = vpop.f32.mrb[0].mxu0
        %v1102 = vadd.f32 0.0, %v1101
        %v1103 = vpop.f32.mrb[0].mxu0
        %v1104 = vadd.f32 0.0, %v1103
        %v1105 = vpop.f32.mrb[0].mxu0
        %v1106 = vadd.f32 0.0, %v1105
        %1107 = vmatprep.mubr.bf16.mxu0 %v1050
        %1108 = vmatmul.mubr.bf16.gmra.mrb[0].mxu0 %v915
        %v1109 = vpop.f32.mrb[0].mxu0
        %v1110 = vadd.f32 0.0, %v1109
        %v1111 = vpop.f32.mrb[0].mxu0
        %v1112 = vadd.f32 0.0, %v1111
        %v1113 = vpop.f32.mrb[0].mxu0
        %v1114 = vadd.f32 0.0, %v1113
        %v1115 = vpop.f32.mrb[0].mxu0
        %v1116 = vadd.f32 0.0, %v1115
        %1117 = vmatprep.mubr.bf16.mxu0 %v1053
        %1118 = vmatmul.mubr.bf16.gmra.mrb[0].mxu0 %v917
        %v1119 = vpop.f32.mrb[0].mxu0
        %v1120 = vadd.f32 0.0, %v1119
        %v1121 = vpop.f32.mrb[0].mxu0
        %v1122 = vadd.f32 0.0, %v1121
        %v1123 = vpop.f32.mrb[0].mxu0
        %v1124 = vadd.f32 0.0, %v1123
        %v1125 = vpop.f32.mrb[0].mxu0
        %v1126 = vadd.f32 0.0, %v1125
        %1127 = vdwg.mxu0
        %v1128 = vadd.f32 %v824, %v1090
        %v1129 = vadd.f32 %v826, %v1092
        %v1130 = vadd.f32 %v828, %v1094
        %v1131 = vadd.f32 %v830, %v1096
        %v1132 = vadd.f32 %v834, %v1100
        %v1133 = vadd.f32 %v836, %v1102
        %v1134 = vadd.f32 %v838, %v1104
        %v1135 = vadd.f32 %v840, %v1106
        %v1136 = vadd.f32 %v844, %v1110
        %v1137 = vadd.f32 %v846, %v1112
        %v1138 = vadd.f32 %v848, %v1114
        %v1139 = vadd.f32 %v850, %v1116
        %v1140 = vadd.f32 %v854, %v1120
        %v1141 = vadd.f32 %v856, %v1122
        %v1142 = vadd.f32 %v858, %v1124
        %v1143 = vadd.f32 %v860, %v1126
        %v1144 = vld [vmem:[%s3] sm:$0x3]
        %v1146 = vlaneseq
        %v1147 = vshrl.u32 %v1146, 7
        %v1148 = vsub.s32 0, %v1147
        %v1149 = vrot.slane %v1144, %v1148
        %v1150 = vlaneseq
        %v1151 = vshrl.u32 %v1150, 7
        %v1152 = vsub.s32 1, %v1151
        %v1153 = vrot.slane %v1144, %v1152
        %v1156 = vadd.f32 %v1128, %v1149
        %v1157 = vadd.f32 %v1129, %v1153
        %v1158 = vadd.f32 %v1130, %v1149
        %v1159 = vadd.f32 %v1131, %v1153
        %v1160 = vadd.f32 %v1132, %v1149
        %v1161 = vadd.f32 %v1133, %v1153
        %v1162 = vadd.f32 %v1134, %v1149
        %v1163 = vadd.f32 %v1135, %v1153
        %v1164 = vadd.f32 %v1136, %v1149
        %v1165 = vadd.f32 %v1137, %v1153
        %v1166 = vadd.f32 %v1138, %v1149
        %v1167 = vadd.f32 %v1139, %v1153
        %v1168 = vadd.f32 %v1140, %v1149
        %v1169 = vadd.f32 %v1141, %v1153
        %v1170 = vadd.f32 %v1142, %v1149
        %v1171 = vadd.f32 %v1143, %v1153
        %v1172 = vmax.f32 %v1156, 0.0
        %v1173 = vmax.f32 %v1157, 0.0
        %v1174 = vmax.f32 %v1158, 0.0
        %v1175 = vmax.f32 %v1159, 0.0
        %v1176 = vmax.f32 %v1160, 0.0
        %v1177 = vmax.f32 %v1161, 0.0
        %v1178 = vmax.f32 %v1162, 0.0
        %v1179 = vmax.f32 %v1163, 0.0
        %v1180 = vmax.f32 %v1164, 0.0
        %v1181 = vmax.f32 %v1165, 0.0
        %v1182 = vmax.f32 %v1166, 0.0
        %v1183 = vmax.f32 %v1167, 0.0
        %v1184 = vmax.f32 %v1168, 0.0
        %v1185 = vmax.f32 %v1169, 0.0
        %v1186 = vmax.f32 %v1170, 0.0
        %v1187 = vmax.f32 %v1171, 0.0
        %v1188 = vmax.f32 %v1172, %v1173
        %v1189 = vmax.f32 %v1174, %v1175
        %v1190 = vmax.f32 %v1176, %v1177
        %v1191 = vmax.f32 %v1178, %v1179
        %v1192 = vmax.f32 %v1180, %v1181
        %v1193 = vmax.f32 %v1182, %v1183
        %v1194 = vmax.f32 %v1184, %v1185
        %v1195 = vmax.f32 %v1186, %v1187
        %v1196 = vpack.c.bf16 %v1189, %v1188
        %v1197 = vpack.c.bf16 %v1191, %v1190
        %v1198 = vpack.c.bf16 %v1193, %v1192
        %v1199 = vpack.c.bf16 %v1195, %v1194
        %v1200 = vlaneseq
        %v1201 = vshrl.u32 %v1200, 7
        %v1202 = vadd.s32 %v1201, 8
        %v1203 = vadd.s32 %v1201, 16
        %v1204 = vadd.s32 %v1201, 24
        %v1205 = vlaneseq
        %v1206 = vand.u32 %v1205, 127
        %v1207 = vadd.s32 %v1201, 4294967295
        %v1208 = vadd.s32 %v1202, 4294967295
        %v1209 = vadd.s32 %v1203, 4294967295
        %v1210 = vadd.s32 %v1204, 4294967295
        %v1211 = vmul.u32 %v1207, 2
        %v1212 = vmul.u32 %v1208, 2
        %v1213 = vmul.u32 %v1209, 2
        %v1214 = vmul.u32 %v1210, 2
        %vm1215 = vcmp.eq.s32.totalorder %v1206, %v1211
        %vm1216 = vcmp.eq.s32.totalorder %v1206, %v1212
        %vm1217 = vcmp.eq.s32.totalorder %v1206, %v1213
        %vm1218 = vcmp.eq.s32.totalorder %v1206, %v1214
        %v1219 = vsel %vm1215, 1.0, 0.0
        %v1220 = vsel %vm1216, 1.0, 0.0
        %v1221 = vsel %vm1217, 1.0, 0.0
        %v1222 = vsel %vm1218, 1.0, 0.0
        %v1223 = vpack.c.bf16 %v1220, %v1219
        %v1224 = vpack.c.bf16 %v1222, %v1221
        %v1226 = vsel %vm535, %v1223, 0
        %v1229 = vsel %vm535, %v1224, 0
        %1231 = vmatprep.subr.bf16.mxu0 0
        %1232 = vmatpush1.bf16.msra.mxu0 %v1196
        %1233 = vmatprep.subr.bf16.mxu0 0
        %1234 = vmatpush1.bf16.msra.mxu0 %v1197
        %1235 = vmatprep.subr.bf16.mxu0 0
        %1236 = vmatpush1.bf16.msra.mxu0 %v1198
        %1237 = vmatprep.subr.bf16.mxu0 0
        %1238 = vmatpush1.bf16.msra.mxu0 %v1199
        %1239 = vmatprep.subr.bf16.mxu0 0
        %1240 = vmatpush1.bf16.msra.mxu0 0
        %1241 = vmatprep.subr.bf16.mxu0 0
        %1242 = vmatpush1.bf16.msra.mxu0 0
        %1243 = vmatprep.subr.bf16.mxu0 0
        %1244 = vmatpush1.bf16.msra.mxu0 0
        %1245 = vmatprep.subr.bf16.mxu0 0
        %1246 = vmatpush1.bf16.msra.mxu0 0
        %1247 = vmatprep.subr.bf16.mxu0 0
        %1248 = vmatpush1.bf16.msra.mxu0 0
        %1249 = vmatprep.subr.bf16.mxu0 0
        %1250 = vmatpush1.bf16.msra.mxu0 0
        %1251 = vmatprep.subr.bf16.mxu0 0
        %1252 = vmatpush1.bf16.msra.mxu0 0
        %1253 = vmatprep.subr.bf16.mxu0 0
        %1254 = vmatpush1.bf16.msra.mxu0 0
        %1255 = vmatprep.subr.bf16.mxu0 0
        %1256 = vmatpush1.bf16.msra.mxu0 0
        %1257 = vmatprep.subr.bf16.mxu0 0
        %1258 = vmatpush1.bf16.msra.mxu0 0
        %1259 = vmatprep.subr.bf16.mxu0 0
        %1260 = vmatpush1.bf16.msra.mxu0 0
        %1261 = vmatprep.subr.bf16.mxu0 0
        %1262 = vmatpush1.bf16.msra.mxu0 0
        %1263 = vmatprep.mubr.bf16.mxu0 0
        %1264 = vmatmul.mubr.bf16.gmra.mrb[0].mxu0 %v1226
        %v1265 = vpop.f32.mrb[0].mxu0
        %v1266 = vadd.f32 0.0, %v1265
        %v1267 = vpop.f32.mrb[0].mxu0
        %v1268 = vpop.f32.mrb[0].mxu0
        %v1269 = vadd.f32 0.0, %v1268
        %v1270 = vpop.f32.mrb[0].mxu0
        %1271 = vmatprep.mubr.bf16.mxu0 0
        %1272 = vmatmul.mubr.bf16.gmra.mrb[0].mxu0 %v1229
        %v1273 = vpop.f32.mrb[0].mxu0
        %v1274 = vadd.f32 0.0, %v1273
        %v1275 = vpop.f32.mrb[0].mxu0
        %v1276 = vpop.f32.mrb[0].mxu0
        %v1277 = vadd.f32 0.0, %v1276
        %v1278 = vpop.f32.mrb[0].mxu0
        %1279 = vdwg.mxu0
        %v1280 = vadd.s32 %v1211, 1
        %v1281 = vadd.s32 %v1212, 1
        %v1282 = vadd.s32 %v1213, 1
        %v1283 = vadd.s32 %v1214, 1
        %vm1284 = vcmp.eq.s32.totalorder %v1206, %v1280
        %vm1285 = vcmp.eq.s32.totalorder %v1206, %v1281
        %vm1286 = vcmp.eq.s32.totalorder %v1206, %v1282
        %vm1287 = vcmp.eq.s32.totalorder %v1206, %v1283
        %v1288 = vsel %vm1284, 1.0, 0.0
        %v1289 = vsel %vm1285, 1.0, 0.0
        %v1290 = vsel %vm1286, 1.0, 0.0
        %v1291 = vsel %vm1287, 1.0, 0.0
        %v1292 = vpack.c.bf16 %v1289, %v1288
        %v1293 = vpack.c.bf16 %v1291, %v1290
        %v1295 = vsel %vm535, %v1292, 0
        %v1298 = vsel %vm535, %v1293, 0
        %1300 = vmatprep.subr.bf16.mxu0 0
        %1301 = vmatpush1.bf16.msra.mxu0 %v1196
        %1302 = vmatprep.subr.bf16.mxu0 0
        %1303 = vmatpush1.bf16.msra.mxu0 %v1197
        %1304 = vmatprep.subr.bf16.mxu0 0
        %1305 = vmatpush1.bf16.msra.mxu0 %v1198
        %1306 = vmatprep.subr.bf16.mxu0 0
        %1307 = vmatpush1.bf16.msra.mxu0 %v1199
        %1308 = vmatprep.subr.bf16.mxu0 0
        %1309 = vmatpush1.bf16.msra.mxu0 0
        %1310 = vmatprep.subr.bf16.mxu0 0
        %1311 = vmatpush1.bf16.msra.mxu0 0
        %1312 = vmatprep.subr.bf16.mxu0 0
        %1313 = vmatpush1.bf16.msra.mxu0 0
        %1314 = vmatprep.subr.bf16.mxu0 0
        %1315 = vmatpush1.bf16.msra.mxu0 0
        %1316 = vmatprep.subr.bf16.mxu0 0
        %1317 = vmatpush1.bf16.msra.mxu0 0
        %1318 = vmatprep.subr.bf16.mxu0 0
        %1319 = vmatpush1.bf16.msra.mxu0 0
        %1320 = vmatprep.subr.bf16.mxu0 0
        %1321 = vmatpush1.bf16.msra.mxu0 0
        %1322 = vmatprep.subr.bf16.mxu0 0
        %1323 = vmatpush1.bf16.msra.mxu0 0
        %1324 = vmatprep.subr.bf16.mxu0 0
        %1325 = vmatpush1.bf16.msra.mxu0 0
        %1326 = vmatprep.subr.bf16.mxu0 0
        %1327 = vmatpush1.bf16.msra.mxu0 0
        %1328 = vmatprep.subr.bf16.mxu0 0
        %1329 = vmatpush1.bf16.msra.mxu0 0
        %1330 = vmatprep.subr.bf16.mxu0 0
        %1331 = vmatpush1.bf16.msra.mxu0 0
        %1332 = vmatprep.mubr.bf16.mxu0 0
        %1333 = vmatmul.mubr.bf16.gmra.mrb[0].mxu0 %v1295
        %v1334 = vpop.f32.mrb[0].mxu0
        %v1335 = vadd.f32 0.0, %v1334
        %v1336 = vpop.f32.mrb[0].mxu0
        %v1337 = vpop.f32.mrb[0].mxu0
        %v1338 = vadd.f32 0.0, %v1337
        %v1339 = vpop.f32.mrb[0].mxu0
        %1340 = vmatprep.mubr.bf16.mxu0 0
        %1341 = vmatmul.mubr.bf16.gmra.mrb[0].mxu0 %v1298
        %v1342 = vpop.f32.mrb[0].mxu0
        %v1343 = vadd.f32 0.0, %v1342
        %v1344 = vpop.f32.mrb[0].mxu0
        %v1345 = vpop.f32.mrb[0].mxu0
        %v1346 = vadd.f32 0.0, %v1345
        %v1347 = vpop.f32.mrb[0].mxu0
        %1348 = vdwg.mxu0
        %v1349 = vmax.f32 %v1266, %v1335
        %v1350 = vmax.f32 %v1269, %v1338
        %v1351 = vmax.f32 %v1274, %v1343
        %v1352 = vmax.f32 %v1277, %v1346
        %v1353 = vpack.c.bf16 %v1350, %v1349
        %v1354 = vpack.c.bf16 %v1352, %v1351
        %v1355 = vmul.u32 %v1201, 2
        %v1356 = vmul.u32 %v1202, 2
        %v1357 = vmul.u32 %v1203, 2
        %v1358 = vmul.u32 %v1204, 2
        %vm1359 = vcmp.eq.s32.totalorder %v1206, %v1355
        %vm1360 = vcmp.eq.s32.totalorder %v1206, %v1356
        %vm1361 = vcmp.eq.s32.totalorder %v1206, %v1357
        %vm1362 = vcmp.eq.s32.totalorder %v1206, %v1358
        %v1363 = vsel %vm1359, 1.0, 0.0
        %v1364 = vsel %vm1360, 1.0, 0.0
        %v1365 = vsel %vm1361, 1.0, 0.0
        %v1366 = vsel %vm1362, 1.0, 0.0
        %v1367 = vpack.c.bf16 %v1364, %v1363
        %v1368 = vpack.c.bf16 %v1366, %v1365
        %v1370 = vsel %vm535, %v1367, 0
        %v1373 = vsel %vm535, %v1368, 0
        %1375 = vmatprep.subr.bf16.mxu0 0
        %1376 = vmatpush1.bf16.msra.mxu0 %v1196
        %1377 = vmatprep.subr.bf16.mxu0 0
        %1378 = vmatpush1.bf16.msra.mxu0 %v1197
        %1379 = vmatprep.subr.bf16.mxu0 0
        %1380 = vmatpush1.bf16.msra.mxu0 %v1198
        %1381 = vmatprep.subr.bf16.mxu0 0
        %1382 = vmatpush1.bf16.msra.mxu0 %v1199
        %1383 = vmatprep.subr.bf16.mxu0 0
        %1384 = vmatpush1.bf16.msra.mxu0 0
        %1385 = vmatprep.subr.bf16.mxu0 0
        %1386 = vmatpush1.bf16.msra.mxu0 0
        %1387 = vmatprep.subr.bf16.mxu0 0
        %1388 = vmatpush1.bf16.msra.mxu0 0
        %1389 = vmatprep.subr.bf16.mxu0 0
        %1390 = vmatpush1.bf16.msra.mxu0 0
        %1391 = vmatprep.subr.bf16.mxu0 0
        %1392 = vmatpush1.bf16.msra.mxu0 0
        %1393 = vmatprep.subr.bf16.mxu0 0
        %1394 = vmatpush1.bf16.msra.mxu0 0
        %1395 = vmatprep.subr.bf16.mxu0 0
        %1396 = vmatpush1.bf16.msra.mxu0 0
        %1397 = vmatprep.subr.bf16.mxu0 0
        %1398 = vmatpush1.bf16.msra.mxu0 0
        %1399 = vmatprep.subr.bf16.mxu0 0
        %1400 = vmatpush1.bf16.msra.mxu0 0
        %1401 = vmatprep.subr.bf16.mxu0 0
        %1402 = vmatpush1.bf16.msra.mxu0 0
        %1403 = vmatprep.subr.bf16.mxu0 0
        %1404 = vmatpush1.bf16.msra.mxu0 0
        %1405 = vmatprep.subr.bf16.mxu0 0
        %1406 = vmatpush1.bf16.msra.mxu0 0
        %1407 = vmatprep.mubr.bf16.mxu0 0
        %1408 = vmatmul.mubr.bf16.gmra.mrb[0].mxu0 %v1370
        %v1409 = vpop.f32.mrb[0].mxu0
        %v1410 = vadd.f32 0.0, %v1409
        %v1411 = vpop.f32.mrb[0].mxu0
        %v1412 = vpop.f32.mrb[0].mxu0
        %v1413 = vadd.f32 0.0, %v1412
        %v1414 = vpop.f32.mrb[0].mxu0
        %1415 = vmatprep.mubr.bf16.mxu0 0
        %1416 = vmatmul.mubr.bf16.gmra.mrb[0].mxu0 %v1373
        %v1417 = vpop.f32.mrb[0].mxu0
        %v1418 = vadd.f32 0.0, %v1417
        %v1419 = vpop.f32.mrb[0].mxu0
        %v1420 = vpop.f32.mrb[0].mxu0
        %v1421 = vadd.f32 0.0, %v1420
        %v1422 = vpop.f32.mrb[0].mxu0
        %1423 = vdwg.mxu0
        %v1424 = vadd.s32 %v1355, 1
        %v1425 = vadd.s32 %v1356, 1
        %v1426 = vadd.s32 %v1357, 1
        %v1427 = vadd.s32 %v1358, 1
        %vm1428 = vcmp.eq.s32.totalorder %v1206, %v1424
        %vm1429 = vcmp.eq.s32.totalorder %v1206, %v1425
        %vm1430 = vcmp.eq.s32.totalorder %v1206, %v1426
        %vm1431 = vcmp.eq.s32.totalorder %v1206, %v1427
        %v1432 = vsel %vm1428, 1.0, 0.0
        %v1433 = vsel %vm1429, 1.0, 0.0
        %v1434 = vsel %vm1430, 1.0, 0.0
        %v1435 = vsel %vm1431, 1.0, 0.0
        %v1436 = vpack.c.bf16 %v1433, %v1432
        %v1437 = vpack.c.bf16 %v1435, %v1434
        %v1439 = vsel %vm535, %v1436, 0
        %v1442 = vsel %vm535, %v1437, 0
        %1444 = vmatprep.subr.bf16.mxu0 0
        %1445 = vmatpush1.bf16.msra.mxu0 %v1196
        %1446 = vmatprep.subr.bf16.mxu0 0
        %1447 = vmatpush1.bf16.msra.mxu0 %v1197
        %1448 = vmatprep.subr.bf16.mxu0 0
        %1449 = vmatpush1.bf16.msra.mxu0 %v1198
        %1450 = vmatprep.subr.bf16.mxu0 0
        %1451 = vmatpush1.bf16.msra.mxu0 %v1199
        %1452 = vmatprep.subr.bf16.mxu0 0
        %1453 = vmatpush1.bf16.msra.mxu0 0
        %1454 = vmatprep.subr.bf16.mxu0 0
        %1455 = vmatpush1.bf16.msra.mxu0 0
        %1456 = vmatprep.subr.bf16.mxu0 0
        %1457 = vmatpush1.bf16.msra.mxu0 0
        %1458 = vmatprep.subr.bf16.mxu0 0
        %1459 = vmatpush1.bf16.msra.mxu0 0
        %1460 = vmatprep.subr.bf16.mxu0 0
        %1461 = vmatpush1.bf16.msra.mxu0 0
        %1462 = vmatprep.subr.bf16.mxu0 0
        %1463 = vmatpush1.bf16.msra.mxu0 0
        %1464 = vmatprep.subr.bf16.mxu0 0
        %1465 = vmatpush1.bf16.msra.mxu0 0
        %1466 = vmatprep.subr.bf16.mxu0 0
        %1467 = vmatpush1.bf16.msra.mxu0 0
        %1468 = vmatprep.subr.bf16.mxu0 0
        %1469 = vmatpush1.bf16.msra.mxu0 0
        %1470 = vmatprep.subr.bf16.mxu0 0
        %1471 = vmatpush1.bf16.msra.mxu0 0
        %1472 = vmatprep.subr.bf16.mxu0 0
        %1473 = vmatpush1.bf16.msra.mxu0 0
        %1474 = vmatprep.subr.bf16.mxu0 0
        %1475 = vmatpush1.bf16.msra.mxu0 0
        %1476 = vmatprep.mubr.bf16.mxu0 0
        %1477 = vmatmul.mubr.bf16.gmra.mrb[0].mxu0 %v1439
        %v1478 = vpop.f32.mrb[0].mxu0
        %v1479 = vadd.f32 0.0, %v1478
        %v1480 = vpop.f32.mrb[0].mxu0
        %v1481 = vpop.f32.mrb[0].mxu0
        %v1482 = vadd.f32 0.0, %v1481
        %v1483 = vpop.f32.mrb[0].mxu0
        %1484 = vmatprep.mubr.bf16.mxu0 0
        %1485 = vmatmul.mubr.bf16.gmra.mrb[0].mxu0 %v1442
        %v1486 = vpop.f32.mrb[0].mxu0
        %v1487 = vadd.f32 0.0, %v1486
        %v1488 = vpop.f32.mrb[0].mxu0
        %v1489 = vpop.f32.mrb[0].mxu0
        %v1490 = vadd.f32 0.0, %v1489
        %v1491 = vpop.f32.mrb[0].mxu0
        %1492 = vdwg.mxu0
        %v1493 = vmax.f32 %v1410, %v1479
        %v1494 = vmax.f32 %v1413, %v1482
        %v1495 = vmax.f32 %v1418, %v1487
        %v1496 = vmax.f32 %v1421, %v1490
        %v1497 = vpack.c.bf16 %v1494, %v1493
        %v1498 = vpack.c.bf16 %v1496, %v1495
        %v1499 = vadd.s32 %v1201, 1
        %v1500 = vadd.s32 %v1202, 1
        %v1501 = vadd.s32 %v1203, 1
        %v1502 = vadd.s32 %v1204, 1
        %v1503 = vmul.u32 %v1499, 2
        %v1504 = vmul.u32 %v1500, 2
        %v1505 = vmul.u32 %v1501, 2
        %v1506 = vmul.u32 %v1502, 2
        %vm1507 = vcmp.eq.s32.totalorder %v1206, %v1503
        %vm1508 = vcmp.eq.s32.totalorder %v1206, %v1504
        %vm1509 = vcmp.eq.s32.totalorder %v1206, %v1505
        %vm1510 = vcmp.eq.s32.totalorder %v1206, %v1506
        %v1511 = vsel %vm1507, 1.0, 0.0
        %v1512 = vsel %vm1508, 1.0, 0.0
        %v1513 = vsel %vm1509, 1.0, 0.0
        %v1514 = vsel %vm1510, 1.0, 0.0
        %v1515 = vpack.c.bf16 %v1512, %v1511
        %v1516 = vpack.c.bf16 %v1514, %v1513
        %v1518 = vsel %vm535, %v1515, 0
        %v1521 = vsel %vm535, %v1516, 0
        %1523 = vmatprep.subr.bf16.mxu0 0
        %1524 = vmatpush1.bf16.msra.mxu0 %v1196
        %1525 = vmatprep.subr.bf16.mxu0 0
        %1526 = vmatpush1.bf16.msra.mxu0 %v1197
        %1527 = vmatprep.subr.bf16.mxu0 0
        %1528 = vmatpush1.bf16.msra.mxu0 %v1198
        %1529 = vmatprep.subr.bf16.mxu0 0
        %1530 = vmatpush1.bf16.msra.mxu0 %v1199
        %1531 = vmatprep.subr.bf16.mxu0 0
        %1532 = vmatpush1.bf16.msra.mxu0 0
        %1533 = vmatprep.subr.bf16.mxu0 0
        %1534 = vmatpush1.bf16.msra.mxu0 0
        %1535 = vmatprep.subr.bf16.mxu0 0
        %1536 = vmatpush1.bf16.msra.mxu0 0
        %1537 = vmatprep.subr.bf16.mxu0 0
        %1538 = vmatpush1.bf16.msra.mxu0 0
        %1539 = vmatprep.subr.bf16.mxu0 0
        %1540 = vmatpush1.bf16.msra.mxu0 0
        %1541 = vmatprep.subr.bf16.mxu0 0
        %1542 = vmatpush1.bf16.msra.mxu0 0
        %1543 = vmatprep.subr.bf16.mxu0 0
        %1544 = vmatpush1.bf16.msra.mxu0 0
        %1545 = vmatprep.subr.bf16.mxu0 0
        %1546 = vmatpush1.bf16.msra.mxu0 0
        %1547 = vmatprep.subr.bf16.mxu0 0
        %1548 = vmatpush1.bf16.msra.mxu0 0
        %1549 = vmatprep.subr.bf16.mxu0 0
        %1550 = vmatpush1.bf16.msra.mxu0 0
        %1551 = vmatprep.subr.bf16.mxu0 0
        %1552 = vmatpush1.bf16.msra.mxu0 0
        %1553 = vmatprep.subr.bf16.mxu0 0
        %1554 = vmatpush1.bf16.msra.mxu0 0
        %1555 = vmatprep.mubr.bf16.mxu0 0
        %1556 = vmatmul.mubr.bf16.gmra.mrb[0].mxu0 %v1518
        %v1557 = vpop.f32.mrb[0].mxu0
        %v1558 = vadd.f32 0.0, %v1557
        %v1559 = vpop.f32.mrb[0].mxu0
        %v1560 = vpop.f32.mrb[0].mxu0
        %v1561 = vadd.f32 0.0, %v1560
        %v1562 = vpop.f32.mrb[0].mxu0
        %1563 = vmatprep.mubr.bf16.mxu0 0
        %1564 = vmatmul.mubr.bf16.gmra.mrb[0].mxu0 %v1521
        %v1565 = vpop.f32.mrb[0].mxu0
        %v1566 = vadd.f32 0.0, %v1565
        %v1567 = vpop.f32.mrb[0].mxu0
        %v1568 = vpop.f32.mrb[0].mxu0
        %v1569 = vadd.f32 0.0, %v1568
        %v1570 = vpop.f32.mrb[0].mxu0
        %1571 = vdwg.mxu0
        %v1572 = vadd.s32 %v1503, 1
        %v1573 = vadd.s32 %v1504, 1
        %v1574 = vadd.s32 %v1505, 1
        %v1575 = vadd.s32 %v1506, 1
        %vm1576 = vcmp.eq.s32.totalorder %v1206, %v1572
        %vm1577 = vcmp.eq.s32.totalorder %v1206, %v1573
        %vm1578 = vcmp.eq.s32.totalorder %v1206, %v1574
        %vm1579 = vcmp.eq.s32.totalorder %v1206, %v1575
        %v1580 = vsel %vm1576, 1.0, 0.0
        %v1581 = vsel %vm1577, 1.0, 0.0
        %v1582 = vsel %vm1578, 1.0, 0.0
        %v1583 = vsel %vm1579, 1.0, 0.0
        %v1584 = vpack.c.bf16 %v1581, %v1580
        %v1585 = vpack.c.bf16 %v1583, %v1582
        %v1587 = vsel %vm535, %v1584, 0
        %v1590 = vsel %vm535, %v1585, 0
        %1592 = vmatprep.subr.bf16.mxu0 0
        %1593 = vmatpush1.bf16.msra.mxu0 %v1196
        %1594 = vmatprep.subr.bf16.mxu0 0
        %1595 = vmatpush1.bf16.msra.mxu0 %v1197
        %1596 = vmatprep.subr.bf16.mxu0 0
        %1597 = vmatpush1.bf16.msra.mxu0 %v1198
        %1598 = vmatprep.subr.bf16.mxu0 0
        %1599 = vmatpush1.bf16.msra.mxu0 %v1199
        %1600 = vmatprep.subr.bf16.mxu0 0
        %1601 = vmatpush1.bf16.msra.mxu0 0
        %1602 = vmatprep.subr.bf16.mxu0 0
        %1603 = vmatpush1.bf16.msra.mxu0 0
        %1604 = vmatprep.subr.bf16.mxu0 0
        %1605 = vmatpush1.bf16.msra.mxu0 0
        %1606 = vmatprep.subr.bf16.mxu0 0
        %1607 = vmatpush1.bf16.msra.mxu0 0
        %1608 = vmatprep.subr.bf16.mxu0 0
        %1609 = vmatpush1.bf16.msra.mxu0 0
        %1610 = vmatprep.subr.bf16.mxu0 0
        %1611 = vmatpush1.bf16.msra.mxu0 0
        %1612 = vmatprep.subr.bf16.mxu0 0
        %1613 = vmatpush1.bf16.msra.mxu0 0
        %1614 = vmatprep.subr.bf16.mxu0 0
        %1615 = vmatpush1.bf16.msra.mxu0 0
        %1616 = vmatprep.subr.bf16.mxu0 0
        %1617 = vmatpush1.bf16.msra.mxu0 0
        %1618 = vmatprep.subr.bf16.mxu0 0
        %1619 = vmatpush1.bf16.msra.mxu0 0
        %1620 = vmatprep.subr.bf16.mxu0 0
        %1621 = vmatpush1.bf16.msra.mxu0 0
        %1622 = vmatprep.subr.bf16.mxu0 0
        %1623 = vmatpush1.bf16.msra.mxu0 0
        %1624 = vmatprep.mubr.bf16.mxu0 0
        %1625 = vmatmul.mubr.bf16.gmra.mrb[0].mxu0 %v1587
        %v1626 = vpop.f32.mrb[0].mxu0
        %v1627 = vadd.f32 0.0, %v1626
        %v1628 = vpop.f32.mrb[0].mxu0
        %v1629 = vpop.f32.mrb[0].mxu0
        %v1630 = vadd.f32 0.0, %v1629
        %v1631 = vpop.f32.mrb[0].mxu0
        %1632 = vmatprep.mubr.bf16.mxu0 0
        %1633 = vmatmul.mubr.bf16.gmra.mrb[0].mxu0 %v1590
        %v1634 = vpop.f32.mrb[0].mxu0
        %v1635 = vadd.f32 0.0, %v1634
        %v1636 = vpop.f32.mrb[0].mxu0
        %v1637 = vpop.f32.mrb[0].mxu0
        %v1638 = vadd.f32 0.0, %v1637
        %v1639 = vpop.f32.mrb[0].mxu0
        %1640 = vdwg.mxu0
        %v1641 = vmax.f32 %v1558, %v1627
        %v1642 = vmax.f32 %v1561, %v1630
        %v1643 = vmax.f32 %v1566, %v1635
        %v1644 = vmax.f32 %v1569, %v1638
        %v1645 = vpack.c.bf16 %v1642, %v1641
        %v1646 = vpack.c.bf16 %v1644, %v1643
        %v1647 = vld [vmem:[%s2] sm:$0xff]
        %v1648 = vld [vmem:[%s2 + $0x8] sm:$0xff]
        %v1649 = vld [vmem:[%s2 + $0x10] sm:$0xff]
        %v1650 = vld [vmem:[%s2 + $0x18] sm:$0xff]
        %v1651 = vld [vmem:[%s2 + $0x20] sm:$0xff]
        %v1652 = vld [vmem:[%s2 + $0x28] sm:$0xff]
        %v1653 = vld [vmem:[%s2 + $0x30] sm:$0xff]
        %v1654 = vld [vmem:[%s2 + $0x38] sm:$0xff]
        %v1655 = vld [vmem:[%s2 + $0x40] sm:$0xff]
        %v1656 = vld [vmem:[%s2 + $0x48] sm:$0xff]
        %v1657 = vld [vmem:[%s2 + $0x50] sm:$0xff]
        %v1658 = vld [vmem:[%s2 + $0x58] sm:$0xff]
        %v1659 = vld [vmem:[%s2 + $0x60] sm:$0xff]
        %v1660 = vld [vmem:[%s2 + $0x68] sm:$0xff]
        %v1661 = vld [vmem:[%s2 + $0x70] sm:$0xff]
        %v1662 = vld [vmem:[%s2 + $0x78] sm:$0xff]
        %s1663 = scalar_lea.vmem %s2, 128
        %v1664 = vld [vmem:[%s1663] sm:$0xff]
        %v1665 = vld [vmem:[%s1663 + $0x8] sm:$0xff]
        %v1666 = vld [vmem:[%s1663 + $0x10] sm:$0xff]
        %v1667 = vld [vmem:[%s1663 + $0x18] sm:$0xff]
        %v1668 = vld [vmem:[%s1663 + $0x20] sm:$0xff]
        %v1669 = vld [vmem:[%s1663 + $0x28] sm:$0xff]
        %v1670 = vld [vmem:[%s1663 + $0x30] sm:$0xff]
        %v1671 = vld [vmem:[%s1663 + $0x38] sm:$0xff]
        %v1672 = vld [vmem:[%s1663 + $0x40] sm:$0xff]
        %v1673 = vld [vmem:[%s1663 + $0x48] sm:$0xff]
        %v1674 = vld [vmem:[%s1663 + $0x50] sm:$0xff]
        %v1675 = vld [vmem:[%s1663 + $0x58] sm:$0xff]
        %v1676 = vld [vmem:[%s1663 + $0x60] sm:$0xff]
        %v1677 = vld [vmem:[%s1663 + $0x68] sm:$0xff]
        %v1678 = vld [vmem:[%s1663 + $0x70] sm:$0xff]
        %v1679 = vld [vmem:[%s1663 + $0x78] sm:$0xff]
        %v1696 = vunpack.c.l.b16 %v1664
        %v1697 = vunpack.c.h.b16 %v1664
        %v1698 = vunpack.c.l.b16 %v1665
        %v1699 = vunpack.c.h.b16 %v1665
        %v1700 = vunpack.c.l.b16 %v1666
        %v1701 = vunpack.c.h.b16 %v1666
        %v1702 = vunpack.c.l.b16 %v1667
        %v1703 = vunpack.c.h.b16 %v1667
        %v1704 = vunpack.c.l.b16 %v1668
        %v1705 = vunpack.c.h.b16 %v1668
        %v1706 = vunpack.c.l.b16 %v1669
        %v1707 = vunpack.c.h.b16 %v1669
        %v1708 = vunpack.c.l.b16 %v1670
        %v1709 = vunpack.c.h.b16 %v1670
        %v1710 = vunpack.c.l.b16 %v1671
        %v1711 = vunpack.c.h.b16 %v1671
        %v1712 = vunpack.c.l.b16 %v1672
        %v1713 = vunpack.c.h.b16 %v1672
        %v1714 = vunpack.c.l.b16 %v1673
        %v1715 = vunpack.c.h.b16 %v1673
        %v1716 = vunpack.c.l.b16 %v1674
        %v1717 = vunpack.c.h.b16 %v1674
        %v1718 = vunpack.c.l.b16 %v1675
        %v1719 = vunpack.c.h.b16 %v1675
        %v1720 = vunpack.c.l.b16 %v1676
        %v1721 = vunpack.c.h.b16 %v1676
        %v1722 = vunpack.c.l.b16 %v1677
        %v1723 = vunpack.c.h.b16 %v1677
        %v1724 = vunpack.c.l.b16 %v1678
        %v1725 = vunpack.c.h.b16 %v1678
        %v1726 = vunpack.c.l.b16 %v1679
        %v1727 = vunpack.c.h.b16 %v1679
        %v1728 = vpack.c.b16 %v1698, %v1696
        %v1729 = vpack.c.b16 %v1699, %v1697
        %v1730 = vpack.c.b16 %v1702, %v1700
        %v1731 = vpack.c.b16 %v1703, %v1701
        %v1732 = vpack.c.b16 %v1706, %v1704
        %v1733 = vpack.c.b16 %v1707, %v1705
        %v1734 = vpack.c.b16 %v1710, %v1708
        %v1735 = vpack.c.b16 %v1711, %v1709
        %v1736 = vpack.c.b16 %v1714, %v1712
        %v1737 = vpack.c.b16 %v1715, %v1713
        %v1738 = vpack.c.b16 %v1718, %v1716
        %v1739 = vpack.c.b16 %v1719, %v1717
        %v1740 = vpack.c.b16 %v1722, %v1720
        %v1741 = vpack.c.b16 %v1723, %v1721
        %v1742 = vpack.c.b16 %v1726, %v1724
        %v1743 = vpack.c.b16 %v1727, %v1725
        %1760 = vmatprep.subr.bf16.mxu0 %v1729
        %1761 = vmatpush1.bf16.msra.mxu0 %v1728
        %1762 = vmatprep.subr.bf16.mxu0 %v1731
        %1763 = vmatpush1.bf16.msra.mxu0 %v1730
        %1764 = vmatprep.subr.bf16.mxu0 %v1733
        %1765 = vmatpush1.bf16.msra.mxu0 %v1732
        %1766 = vmatprep.subr.bf16.mxu0 %v1735
        %1767 = vmatpush1.bf16.msra.mxu0 %v1734
        %1768 = vmatprep.subr.bf16.mxu0 %v1737
        %1769 = vmatpush1.bf16.msra.mxu0 %v1736
        %1770 = vmatprep.subr.bf16.mxu0 %v1739
        %1771 = vmatpush1.bf16.msra.mxu0 %v1738
        %1772 = vmatprep.subr.bf16.mxu0 %v1741
        %1773 = vmatpush1.bf16.msra.mxu0 %v1740
        %1774 = vmatprep.subr.bf16.mxu0 %v1743
        %1775 = vmatpush1.bf16.msra.mxu0 %v1742
        %1776 = vmatprep.subr.bf16.mxu0 0
        %1777 = vmatpush1.bf16.msra.mxu0 0
        %1778 = vmatprep.subr.bf16.mxu0 0
        %1779 = vmatpush1.bf16.msra.mxu0 0
        %1780 = vmatprep.subr.bf16.mxu0 0
        %1781 = vmatpush1.bf16.msra.mxu0 0
        %1782 = vmatprep.subr.bf16.mxu0 0
        %1783 = vmatpush1.bf16.msra.mxu0 0
        %1784 = vmatprep.subr.bf16.mxu0 0
        %1785 = vmatpush1.bf16.msra.mxu0 0
        %1786 = vmatprep.subr.bf16.mxu0 0
        %1787 = vmatpush1.bf16.msra.mxu0 0
        %1788 = vmatprep.subr.bf16.mxu0 0
        %1789 = vmatpush1.bf16.msra.mxu0 0
        %1790 = vmatprep.subr.bf16.mxu0 0
        %1791 = vmatpush1.bf16.msra.mxu0 0
        %1792 = vmatprep.mubr.bf16.mxu0 0
        %1793 = vmatmul.mubr.bf16.gmra.mrb[0].mxu0 %v1497
        %v1794 = vpop.f32.mrb[0].mxu0
        %v1795 = vadd.f32 0.0, %v1794
        %v1796 = vpop.f32.mrb[0].mxu0
        %v1797 = vadd.f32 0.0, %v1796
        %v1798 = vpop.f32.mrb[0].mxu0
        %v1799 = vadd.f32 0.0, %v1798
        %v1800 = vpop.f32.mrb[0].mxu0
        %v1801 = vadd.f32 0.0, %v1800
        %1802 = vmatprep.mubr.bf16.mxu0 0
        %1803 = vmatmul.mubr.bf16.gmra.mrb[0].mxu0 %v1498
        %v1804 = vpop.f32.mrb[0].mxu0
        %v1805 = vadd.f32 0.0, %v1804
        %v1806 = vpop.f32.mrb[0].mxu0
        %v1807 = vadd.f32 0.0, %v1806
        %v1808 = vpop.f32.mrb[0].mxu0
        %v1809 = vadd.f32 0.0, %v1808
        %v1810 = vpop.f32.mrb[0].mxu0
        %v1811 = vadd.f32 0.0, %v1810
        %1812 = vdwg.mxu0
        %v1829 = vunpack.c.l.b16 %v1647
        %v1830 = vunpack.c.h.b16 %v1647
        %v1831 = vunpack.c.l.b16 %v1648
        %v1832 = vunpack.c.h.b16 %v1648
        %v1833 = vunpack.c.l.b16 %v1649
        %v1834 = vunpack.c.h.b16 %v1649
        %v1835 = vunpack.c.l.b16 %v1650
        %v1836 = vunpack.c.h.b16 %v1650
        %v1837 = vunpack.c.l.b16 %v1651
        %v1838 = vunpack.c.h.b16 %v1651
        %v1839 = vunpack.c.l.b16 %v1652
        %v1840 = vunpack.c.h.b16 %v1652
        %v1841 = vunpack.c.l.b16 %v1653
        %v1842 = vunpack.c.h.b16 %v1653
        %v1843 = vunpack.c.l.b16 %v1654
        %v1844 = vunpack.c.h.b16 %v1654
        %v1845 = vunpack.c.l.b16 %v1655
        %v1846 = vunpack.c.h.b16 %v1655
        %v1847 = vunpack.c.l.b16 %v1656
        %v1848 = vunpack.c.h.b16 %v1656
        %v1849 = vunpack.c.l.b16 %v1657
        %v1850 = vunpack.c.h.b16 %v1657
        %v1851 = vunpack.c.l.b16 %v1658
        %v1852 = vunpack.c.h.b16 %v1658
        %v1853 = vunpack.c.l.b16 %v1659
        %v1854 = vunpack.c.h.b16 %v1659
        %v1855 = vunpack.c.l.b16 %v1660
        %v1856 = vunpack.c.h.b16 %v1660
        %v1857 = vunpack.c.l.b16 %v1661
        %v1858 = vunpack.c.h.b16 %v1661
        %v1859 = vunpack.c.l.b16 %v1662
        %v1860 = vunpack.c.h.b16 %v1662
        %v1861 = vpack.c.b16 %v1831, %v1829
        %v1862 = vpack.c.b16 %v1832, %v1830
        %v1863 = vpack.c.b16 %v1835, %v1833
        %v1864 = vpack.c.b16 %v1836, %v1834
        %v1865 = vpack.c.b16 %v1839, %v1837
        %v1866 = vpack.c.b16 %v1840, %v1838
        %v1867 = vpack.c.b16 %v1843, %v1841
        %v1868 = vpack.c.b16 %v1844, %v1842
        %v1869 = vpack.c.b16 %v1847, %v1845
        %v1870 = vpack.c.b16 %v1848, %v1846
        %v1871 = vpack.c.b16 %v1851, %v1849
        %v1872 = vpack.c.b16 %v1852, %v1850
        %v1873 = vpack.c.b16 %v1855, %v1853
        %v1874 = vpack.c.b16 %v1856, %v1854
        %v1875 = vpack.c.b16 %v1859, %v1857
        %v1876 = vpack.c.b16 %v1860, %v1858
        %1893 = vmatprep.subr.bf16.mxu0 %v1862
        %1894 = vmatpush1.bf16.msra.mxu0 %v1861
        %1895 = vmatprep.subr.bf16.mxu0 %v1864
        %1896 = vmatpush1.bf16.msra.mxu0 %v1863
        %1897 = vmatprep.subr.bf16.mxu0 %v1866
        %1898 = vmatpush1.bf16.msra.mxu0 %v1865
        %1899 = vmatprep.subr.bf16.mxu0 %v1868
        %1900 = vmatpush1.bf16.msra.mxu0 %v1867
        %1901 = vmatprep.subr.bf16.mxu0 %v1870
        %1902 = vmatpush1.bf16.msra.mxu0 %v1869
        %1903 = vmatprep.subr.bf16.mxu0 %v1872
        %1904 = vmatpush1.bf16.msra.mxu0 %v1871
        %1905 = vmatprep.subr.bf16.mxu0 %v1874
        %1906 = vmatpush1.bf16.msra.mxu0 %v1873
        %1907 = vmatprep.subr.bf16.mxu0 %v1876
        %1908 = vmatpush1.bf16.msra.mxu0 %v1875
        %1909 = vmatprep.subr.bf16.mxu0 0
        %1910 = vmatpush1.bf16.msra.mxu0 0
        %1911 = vmatprep.subr.bf16.mxu0 0
        %1912 = vmatpush1.bf16.msra.mxu0 0
        %1913 = vmatprep.subr.bf16.mxu0 0
        %1914 = vmatpush1.bf16.msra.mxu0 0
        %1915 = vmatprep.subr.bf16.mxu0 0
        %1916 = vmatpush1.bf16.msra.mxu0 0
        %1917 = vmatprep.subr.bf16.mxu0 0
        %1918 = vmatpush1.bf16.msra.mxu0 0
        %1919 = vmatprep.subr.bf16.mxu0 0
        %1920 = vmatpush1.bf16.msra.mxu0 0
        %1921 = vmatprep.subr.bf16.mxu0 0
        %1922 = vmatpush1.bf16.msra.mxu0 0
        %1923 = vmatprep.subr.bf16.mxu0 0
        %1924 = vmatpush1.bf16.msra.mxu0 0
        %1925 = vmatprep.mubr.bf16.mxu0 0
        %1926 = vmatmul.mubr.bf16.gmra.mrb[0].mxu0 %v1353
        %v1927 = vpop.f32.mrb[0].mxu0
        %v1928 = vadd.f32 %v1795, %v1927
        %v1929 = vpop.f32.mrb[0].mxu0
        %v1930 = vadd.f32 %v1797, %v1929
        %v1931 = vpop.f32.mrb[0].mxu0
        %v1932 = vadd.f32 %v1799, %v1931
        %v1933 = vpop.f32.mrb[0].mxu0
        %v1934 = vadd.f32 %v1801, %v1933
        %1935 = vmatprep.mubr.bf16.mxu0 0
        %1936 = vmatmul.mubr.bf16.gmra.mrb[0].mxu0 %v1354
        %v1937 = vpop.f32.mrb[0].mxu0
        %v1938 = vadd.f32 %v1805, %v1937
        %v1939 = vpop.f32.mrb[0].mxu0
        %v1940 = vadd.f32 %v1807, %v1939
        %v1941 = vpop.f32.mrb[0].mxu0
        %v1942 = vadd.f32 %v1809, %v1941
        %v1943 = vpop.f32.mrb[0].mxu0
        %v1944 = vadd.f32 %v1811, %v1943
        %1945 = vdwg.mxu0
        %s1946 = scalar_lea.vmem %s2, 256
        %v1947 = vld [vmem:[%s1946] sm:$0xff]
        %v1948 = vld [vmem:[%s1946 + $0x8] sm:$0xff]
        %v1949 = vld [vmem:[%s1946 + $0x10] sm:$0xff]
        %v1950 = vld [vmem:[%s1946 + $0x18] sm:$0xff]
        %v1951 = vld [vmem:[%s1946 + $0x20] sm:$0xff]
        %v1952 = vld [vmem:[%s1946 + $0x28] sm:$0xff]
        %v1953 = vld [vmem:[%s1946 + $0x30] sm:$0xff]
        %v1954 = vld [vmem:[%s1946 + $0x38] sm:$0xff]
        %v1955 = vld [vmem:[%s1946 + $0x40] sm:$0xff]
        %v1956 = vld [vmem:[%s1946 + $0x48] sm:$0xff]
        %v1957 = vld [vmem:[%s1946 + $0x50] sm:$0xff]
        %v1958 = vld [vmem:[%s1946 + $0x58] sm:$0xff]
        %v1959 = vld [vmem:[%s1946 + $0x60] sm:$0xff]
        %v1960 = vld [vmem:[%s1946 + $0x68] sm:$0xff]
        %v1961 = vld [vmem:[%s1946 + $0x70] sm:$0xff]
        %v1962 = vld [vmem:[%s1946 + $0x78] sm:$0xff]
        %v1979 = vunpack.c.l.b16 %v1947
        %v1980 = vunpack.c.h.b16 %v1947
        %v1981 = vunpack.c.l.b16 %v1948
        %v1982 = vunpack.c.h.b16 %v1948
        %v1983 = vunpack.c.l.b16 %v1949
        %v1984 = vunpack.c.h.b16 %v1949
        %v1985 = vunpack.c.l.b16 %v1950
        %v1986 = vunpack.c.h.b16 %v1950
        %v1987 = vunpack.c.l.b16 %v1951
        %v1988 = vunpack.c.h.b16 %v1951
        %v1989 = vunpack.c.l.b16 %v1952
        %v1990 = vunpack.c.h.b16 %v1952
        %v1991 = vunpack.c.l.b16 %v1953
        %v1992 = vunpack.c.h.b16 %v1953
        %v1993 = vunpack.c.l.b16 %v1954
        %v1994 = vunpack.c.h.b16 %v1954
        %v1995 = vunpack.c.l.b16 %v1955
        %v1996 = vunpack.c.h.b16 %v1955
        %v1997 = vunpack.c.l.b16 %v1956
        %v1998 = vunpack.c.h.b16 %v1956
        %v1999 = vunpack.c.l.b16 %v1957
        %v2000 = vunpack.c.h.b16 %v1957
        %v2001 = vunpack.c.l.b16 %v1958
        %v2002 = vunpack.c.h.b16 %v1958
        %v2003 = vunpack.c.l.b16 %v1959
        %v2004 = vunpack.c.h.b16 %v1959
        %v2005 = vunpack.c.l.b16 %v1960
        %v2006 = vunpack.c.h.b16 %v1960
        %v2007 = vunpack.c.l.b16 %v1961
        %v2008 = vunpack.c.h.b16 %v1961
        %v2009 = vunpack.c.l.b16 %v1962
        %v2010 = vunpack.c.h.b16 %v1962
        %v2011 = vpack.c.b16 %v1981, %v1979
        %v2012 = vpack.c.b16 %v1982, %v1980
        %v2013 = vpack.c.b16 %v1985, %v1983
        %v2014 = vpack.c.b16 %v1986, %v1984
        %v2015 = vpack.c.b16 %v1989, %v1987
        %v2016 = vpack.c.b16 %v1990, %v1988
        %v2017 = vpack.c.b16 %v1993, %v1991
        %v2018 = vpack.c.b16 %v1994, %v1992
        %v2019 = vpack.c.b16 %v1997, %v1995
        %v2020 = vpack.c.b16 %v1998, %v1996
        %v2021 = vpack.c.b16 %v2001, %v1999
        %v2022 = vpack.c.b16 %v2002, %v2000
        %v2023 = vpack.c.b16 %v2005, %v2003
        %v2024 = vpack.c.b16 %v2006, %v2004
        %v2025 = vpack.c.b16 %v2009, %v2007
        %v2026 = vpack.c.b16 %v2010, %v2008
        %2043 = vmatprep.subr.bf16.mxu0 %v2012
        %2044 = vmatpush1.bf16.msra.mxu0 %v2011
        %2045 = vmatprep.subr.bf16.mxu0 %v2014
        %2046 = vmatpush1.bf16.msra.mxu0 %v2013
        %2047 = vmatprep.subr.bf16.mxu0 %v2016
        %2048 = vmatpush1.bf16.msra.mxu0 %v2015
        %2049 = vmatprep.subr.bf16.mxu0 %v2018
        %2050 = vmatpush1.bf16.msra.mxu0 %v2017
        %2051 = vmatprep.subr.bf16.mxu0 %v2020
        %2052 = vmatpush1.bf16.msra.mxu0 %v2019
        %2053 = vmatprep.subr.bf16.mxu0 %v2022
        %2054 = vmatpush1.bf16.msra.mxu0 %v2021
        %2055 = vmatprep.subr.bf16.mxu0 %v2024
        %2056 = vmatpush1.bf16.msra.mxu0 %v2023
        %2057 = vmatprep.subr.bf16.mxu0 %v2026
        %2058 = vmatpush1.bf16.msra.mxu0 %v2025
        %2059 = vmatprep.subr.bf16.mxu0 0
        %2060 = vmatpush1.bf16.msra.mxu0 0
        %2061 = vmatprep.subr.bf16.mxu0 0
        %2062 = vmatpush1.bf16.msra.mxu0 0
        %2063 = vmatprep.subr.bf16.mxu0 0
        %2064 = vmatpush1.bf16.msra.mxu0 0
        %2065 = vmatprep.subr.bf16.mxu0 0
        %2066 = vmatpush1.bf16.msra.mxu0 0
        %2067 = vmatprep.subr.bf16.mxu0 0
        %2068 = vmatpush1.bf16.msra.mxu0 0
        %2069 = vmatprep.subr.bf16.mxu0 0
        %2070 = vmatpush1.bf16.msra.mxu0 0
        %2071 = vmatprep.subr.bf16.mxu0 0
        %2072 = vmatpush1.bf16.msra.mxu0 0
        %2073 = vmatprep.subr.bf16.mxu0 0
        %2074 = vmatpush1.bf16.msra.mxu0 0
        %2075 = vmatprep.mubr.bf16.mxu0 0
        %2076 = vmatmul.mubr.bf16.gmra.mrb[0].mxu0 %v1645
        %v2077 = vpop.f32.mrb[0].mxu0
        %v2078 = vadd.f32 0.0, %v2077
        %v2079 = vpop.f32.mrb[0].mxu0
        %v2080 = vadd.f32 0.0, %v2079
        %v2081 = vpop.f32.mrb[0].mxu0
        %v2082 = vadd.f32 0.0, %v2081
        %v2083 = vpop.f32.mrb[0].mxu0
        %v2084 = vadd.f32 0.0, %v2083
        %2085 = vmatprep.mubr.bf16.mxu0 0
        %2086 = vmatmul.mubr.bf16.gmra.mrb[0].mxu0 %v1646
        %v2087 = vpop.f32.mrb[0].mxu0
        %v2088 = vadd.f32 0.0, %v2087
        %v2089 = vpop.f32.mrb[0].mxu0
        %v2090 = vadd.f32 0.0, %v2089
        %v2091 = vpop.f32.mrb[0].mxu0
        %v2092 = vadd.f32 0.0, %v2091
        %v2093 = vpop.f32.mrb[0].mxu0
        %v2094 = vadd.f32 0.0, %v2093
        %2095 = vdwg.mxu0
        %v2096 = vadd.f32 %v1928, %v2078
        %v2097 = vadd.f32 %v1930, %v2080
        %v2098 = vadd.f32 %v1932, %v2082
        %v2099 = vadd.f32 %v1934, %v2084
        %v2100 = vadd.f32 %v1938, %v2088
        %v2101 = vadd.f32 %v1940, %v2090
        %v2102 = vadd.f32 %v1942, %v2092
        %v2103 = vadd.f32 %v1944, %v2094
        %s2104 = scalar_lea.vmem %s3, 2
        %v2105 = vld [vmem:[%s2104] sm:$0x3]
        %v2107 = vlaneseq
        %v2108 = vshrl.u32 %v2107, 7
        %v2109 = vsub.s32 0, %v2108
        %v2110 = vrot.slane %v2105, %v2109
        %v2111 = vlaneseq
        %v2112 = vshrl.u32 %v2111, 7
        %v2113 = vsub.s32 1, %v2112
        %v2114 = vrot.slane %v2105, %v2113
        %v2117 = vadd.f32 %v2096, %v2110
        %v2118 = vadd.f32 %v2097, %v2114
        %v2119 = vadd.f32 %v2098, %v2110
        %v2120 = vadd.f32 %v2099, %v2114
        %v2121 = vadd.f32 %v2100, %v2110
        %v2122 = vadd.f32 %v2101, %v2114
        %v2123 = vadd.f32 %v2102, %v2110
        %v2124 = vadd.f32 %v2103, %v2114
        %v2125 = vmax.f32 %v2117, 0.0
        %v2126 = vmax.f32 %v2118, 0.0
        %v2127 = vmax.f32 %v2119, 0.0
        %v2128 = vmax.f32 %v2120, 0.0
        %v2129 = vmax.f32 %v2121, 0.0
        %v2130 = vmax.f32 %v2122, 0.0
        %v2131 = vmax.f32 %v2123, 0.0
        %v2132 = vmax.f32 %v2124, 0.0
        %v2133 = vmax.f32 %v2125, %v2126
        %v2134 = vmax.f32 %v2127, %v2128
        %v2135 = vmax.f32 %v2129, %v2130
        %v2136 = vmax.f32 %v2131, %v2132
        %v2137 = vpack.c.bf16 %v2134, %v2133
        %v2138 = vpack.c.bf16 %v2136, %v2135
        %vm2139 = vcmask 261120
        %v2140 = vsel %vm2139, %v1223, 0
        %2142 = vmatprep.subr.bf16.mxu0 0
        %2143 = vmatpush1.bf16.msra.mxu0 %v2137
        %2144 = vmatprep.subr.bf16.mxu0 0
        %2145 = vmatpush1.bf16.msra.mxu0 %v2138
        %2146 = vmatprep.subr.bf16.mxu0 0
        %2147 = vmatpush1.bf16.msra.mxu0 0
        %2148 = vmatprep.subr.bf16.mxu0 0
        %2149 = vmatpush1.bf16.msra.mxu0 0
        %2150 = vmatprep.subr.bf16.mxu0 0
        %2151 = vmatpush1.bf16.msra.mxu0 0
        %2152 = vmatprep.subr.bf16.mxu0 0
        %2153 = vmatpush1.bf16.msra.mxu0 0
        %2154 = vmatprep.subr.bf16.mxu0 0
        %2155 = vmatpush1.bf16.msra.mxu0 0
        %2156 = vmatprep.subr.bf16.mxu0 0
        %2157 = vmatpush1.bf16.msra.mxu0 0
        %2158 = vmatprep.subr.bf16.mxu0 0
        %2159 = vmatpush1.bf16.msra.mxu0 0
        %2160 = vmatprep.subr.bf16.mxu0 0
        %2161 = vmatpush1.bf16.msra.mxu0 0
        %2162 = vmatprep.subr.bf16.mxu0 0
        %2163 = vmatpush1.bf16.msra.mxu0 0
        %2164 = vmatprep.subr.bf16.mxu0 0
        %2165 = vmatpush1.bf16.msra.mxu0 0
        %2166 = vmatprep.subr.bf16.mxu0 0
        %2167 = vmatpush1.bf16.msra.mxu0 0
        %2168 = vmatprep.subr.bf16.mxu0 0
        %2169 = vmatpush1.bf16.msra.mxu0 0
        %2170 = vmatprep.subr.bf16.mxu0 0
        %2171 = vmatpush1.bf16.msra.mxu0 0
        %2172 = vmatprep.subr.bf16.mxu0 0
        %2173 = vmatpush1.bf16.msra.mxu0 0
        %2174 = vmatprep.mubr.bf16.mxu0 0
        %2175 = vmatmul.mubr.bf16.gmra.mrb[0].mxu0 %v2140
        %v2176 = vpop.f32.mrb[0].mxu0
        %v2177 = vadd.f32 0.0, %v2176
        %v2178 = vpop.f32.mrb[0].mxu0
        %v2179 = vpop.f32.mrb[0].mxu0
        %v2180 = vadd.f32 0.0, %v2179
        %v2181 = vpop.f32.mrb[0].mxu0
        %2182 = vdwg.mxu0
        %v2183 = vsel %vm2139, %v1292, 0
        %2185 = vmatprep.subr.bf16.mxu0 0
        %2186 = vmatpush1.bf16.msra.mxu0 %v2137
        %2187 = vmatprep.subr.bf16.mxu0 0
        %2188 = vmatpush1.bf16.msra.mxu0 %v2138
        %2189 = vmatprep.subr.bf16.mxu0 0
        %2190 = vmatpush1.bf16.msra.mxu0 0
        %2191 = vmatprep.subr.bf16.mxu0 0
        %2192 = vmatpush1.bf16.msra.mxu0 0
        %2193 = vmatprep.subr.bf16.mxu0 0
        %2194 = vmatpush1.bf16.msra.mxu0 0
        %2195 = vmatprep.subr.bf16.mxu0 0
        %2196 = vmatpush1.bf16.msra.mxu0 0
        %2197 = vmatprep.subr.bf16.mxu0 0
        %2198 = vmatpush1.bf16.msra.mxu0 0
        %2199 = vmatprep.subr.bf16.mxu0 0
        %2200 = vmatpush1.bf16.msra.mxu0 0
        %2201 = vmatprep.subr.bf16.mxu0 0
        %2202 = vmatpush1.bf16.msra.mxu0 0
        %2203 = vmatprep.subr.bf16.mxu0 0
        %2204 = vmatpush1.bf16.msra.mxu0 0
        %2205 = vmatprep.subr.bf16.mxu0 0
        %2206 = vmatpush1.bf16.msra.mxu0 0
        %2207 = vmatprep.subr.bf16.mxu0 0
        %2208 = vmatpush1.bf16.msra.mxu0 0
        %2209 = vmatprep.subr.bf16.mxu0 0
        %2210 = vmatpush1.bf16.msra.mxu0 0
        %2211 = vmatprep.subr.bf16.mxu0 0
        %2212 = vmatpush1.bf16.msra.mxu0 0
        %2213 = vmatprep.subr.bf16.mxu0 0
        %2214 = vmatpush1.bf16.msra.mxu0 0
        %2215 = vmatprep.subr.bf16.mxu0 0
        %2216 = vmatpush1.bf16.msra.mxu0 0
        %2217 = vmatprep.mubr.bf16.mxu0 0
        %2218 = vmatmul.mubr.bf16.gmra.mrb[0].mxu0 %v2183
        %v2219 = vpop.f32.mrb[0].mxu0
        %v2220 = vadd.f32 0.0, %v2219
        %v2221 = vpop.f32.mrb[0].mxu0
        %v2222 = vpop.f32.mrb[0].mxu0
        %v2223 = vadd.f32 0.0, %v2222
        %v2224 = vpop.f32.mrb[0].mxu0
        %2225 = vdwg.mxu0
        %v2226 = vmax.f32 %v2177, %v2220
        %v2227 = vmax.f32 %v2180, %v2223
        %v2228 = vpack.c.bf16 %v2227, %v2226
        %v2229 = vsel %vm2139, %v1367, 0
        %2231 = vmatprep.subr.bf16.mxu0 0
        %2232 = vmatpush1.bf16.msra.mxu0 %v2137
        %2233 = vmatprep.subr.bf16.mxu0 0
        %2234 = vmatpush1.bf16.msra.mxu0 %v2138
        %2235 = vmatprep.subr.bf16.mxu0 0
        %2236 = vmatpush1.bf16.msra.mxu0 0
        %2237 = vmatprep.subr.bf16.mxu0 0
        %2238 = vmatpush1.bf16.msra.mxu0 0
        %2239 = vmatprep.subr.bf16.mxu0 0
        %2240 = vmatpush1.bf16.msra.mxu0 0
        %2241 = vmatprep.subr.bf16.mxu0 0
        %2242 = vmatpush1.bf16.msra.mxu0 0
        %2243 = vmatprep.subr.bf16.mxu0 0
        %2244 = vmatpush1.bf16.msra.mxu0 0
        %2245 = vmatprep.subr.bf16.mxu0 0
        %2246 = vmatpush1.bf16.msra.mxu0 0
        %2247 = vmatprep.subr.bf16.mxu0 0
        %2248 = vmatpush1.bf16.msra.mxu0 0
        %2249 = vmatprep.subr.bf16.mxu0 0
        %2250 = vmatpush1.bf16.msra.mxu0 0
        %2251 = vmatprep.subr.bf16.mxu0 0
        %2252 = vmatpush1.bf16.msra.mxu0 0
        %2253 = vmatprep.subr.bf16.mxu0 0
        %2254 = vmatpush1.bf16.msra.mxu0 0
        %2255 = vmatprep.subr.bf16.mxu0 0
        %2256 = vmatpush1.bf16.msra.mxu0 0
        %2257 = vmatprep.subr.bf16.mxu0 0
        %2258 = vmatpush1.bf16.msra.mxu0 0
        %2259 = vmatprep.subr.bf16.mxu0 0
        %2260 = vmatpush1.bf16.msra.mxu0 0
        %2261 = vmatprep.subr.bf16.mxu0 0
        %2262 = vmatpush1.bf16.msra.mxu0 0
        %2263 = vmatprep.mubr.bf16.mxu0 0
        %2264 = vmatmul.mubr.bf16.gmra.mrb[0].mxu0 %v2229
        %v2265 = vpop.f32.mrb[0].mxu0
        %v2266 = vadd.f32 0.0, %v2265
        %v2267 = vpop.f32.mrb[0].mxu0
        %v2268 = vpop.f32.mrb[0].mxu0
        %v2269 = vadd.f32 0.0, %v2268
        %v2270 = vpop.f32.mrb[0].mxu0
        %2271 = vdwg.mxu0
        %v2272 = vsel %vm2139, %v1436, 0
        %2274 = vmatprep.subr.bf16.mxu0 0
        %2275 = vmatpush1.bf16.msra.mxu0 %v2137
        %2276 = vmatprep.subr.bf16.mxu0 0
        %2277 = vmatpush1.bf16.msra.mxu0 %v2138
        %2278 = vmatprep.subr.bf16.mxu0 0
        %2279 = vmatpush1.bf16.msra.mxu0 0
        %2280 = vmatprep.subr.bf16.mxu0 0
        %2281 = vmatpush1.bf16.msra.mxu0 0
        %2282 = vmatprep.subr.bf16.mxu0 0
        %2283 = vmatpush1.bf16.msra.mxu0 0
        %2284 = vmatprep.subr.bf16.mxu0 0
        %2285 = vmatpush1.bf16.msra.mxu0 0
        %2286 = vmatprep.subr.bf16.mxu0 0
        %2287 = vmatpush1.bf16.msra.mxu0 0
        %2288 = vmatprep.subr.bf16.mxu0 0
        %2289 = vmatpush1.bf16.msra.mxu0 0
        %2290 = vmatprep.subr.bf16.mxu0 0
        %2291 = vmatpush1.bf16.msra.mxu0 0
        %2292 = vmatprep.subr.bf16.mxu0 0
        %2293 = vmatpush1.bf16.msra.mxu0 0
        %2294 = vmatprep.subr.bf16.mxu0 0
        %2295 = vmatpush1.bf16.msra.mxu0 0
        %2296 = vmatprep.subr.bf16.mxu0 0
        %2297 = vmatpush1.bf16.msra.mxu0 0
        %2298 = vmatprep.subr.bf16.mxu0 0
        %2299 = vmatpush1.bf16.msra.mxu0 0
        %2300 = vmatprep.subr.bf16.mxu0 0
        %2301 = vmatpush1.bf16.msra.mxu0 0
        %2302 = vmatprep.subr.bf16.mxu0 0
        %2303 = vmatpush1.bf16.msra.mxu0 0
        %2304 = vmatprep.subr.bf16.mxu0 0
        %2305 = vmatpush1.bf16.msra.mxu0 0
        %2306 = vmatprep.mubr.bf16.mxu0 0
        %2307 = vmatmul.mubr.bf16.gmra.mrb[0].mxu0 %v2272
        %v2308 = vpop.f32.mrb[0].mxu0
        %v2309 = vadd.f32 0.0, %v2308
        %v2310 = vpop.f32.mrb[0].mxu0
        %v2311 = vpop.f32.mrb[0].mxu0
        %v2312 = vadd.f32 0.0, %v2311
        %v2313 = vpop.f32.mrb[0].mxu0
        %2314 = vdwg.mxu0
        %v2315 = vmax.f32 %v2266, %v2309
        %v2316 = vmax.f32 %v2269, %v2312
        %v2317 = vpack.c.bf16 %v2316, %v2315
        %v2318 = vsel %vm2139, %v1515, 0
        %2320 = vmatprep.subr.bf16.mxu0 0
        %2321 = vmatpush1.bf16.msra.mxu0 %v2137
        %2322 = vmatprep.subr.bf16.mxu0 0
        %2323 = vmatpush1.bf16.msra.mxu0 %v2138
        %2324 = vmatprep.subr.bf16.mxu0 0
        %2325 = vmatpush1.bf16.msra.mxu0 0
        %2326 = vmatprep.subr.bf16.mxu0 0
        %2327 = vmatpush1.bf16.msra.mxu0 0
        %2328 = vmatprep.subr.bf16.mxu0 0
        %2329 = vmatpush1.bf16.msra.mxu0 0
        %2330 = vmatprep.subr.bf16.mxu0 0
        %2331 = vmatpush1.bf16.msra.mxu0 0
        %2332 = vmatprep.subr.bf16.mxu0 0
        %2333 = vmatpush1.bf16.msra.mxu0 0
        %2334 = vmatprep.subr.bf16.mxu0 0
        %2335 = vmatpush1.bf16.msra.mxu0 0
        %2336 = vmatprep.subr.bf16.mxu0 0
        %2337 = vmatpush1.bf16.msra.mxu0 0
        %2338 = vmatprep.subr.bf16.mxu0 0
        %2339 = vmatpush1.bf16.msra.mxu0 0
        %2340 = vmatprep.subr.bf16.mxu0 0
        %2341 = vmatpush1.bf16.msra.mxu0 0
        %2342 = vmatprep.subr.bf16.mxu0 0
        %2343 = vmatpush1.bf16.msra.mxu0 0
        %2344 = vmatprep.subr.bf16.mxu0 0
        %2345 = vmatpush1.bf16.msra.mxu0 0
        %2346 = vmatprep.subr.bf16.mxu0 0
        %2347 = vmatpush1.bf16.msra.mxu0 0
        %2348 = vmatprep.subr.bf16.mxu0 0
        %2349 = vmatpush1.bf16.msra.mxu0 0
        %2350 = vmatprep.subr.bf16.mxu0 0
        %2351 = vmatpush1.bf16.msra.mxu0 0
        %2352 = vmatprep.mubr.bf16.mxu0 0
        %2353 = vmatmul.mubr.bf16.gmra.mrb[0].mxu0 %v2318
        %v2354 = vpop.f32.mrb[0].mxu0
        %v2355 = vadd.f32 0.0, %v2354
        %v2356 = vpop.f32.mrb[0].mxu0
        %v2357 = vpop.f32.mrb[0].mxu0
        %v2358 = vadd.f32 0.0, %v2357
        %v2359 = vpop.f32.mrb[0].mxu0
        %2360 = vdwg.mxu0
        %v2361 = vsel %vm2139, %v1584, 0
        %2363 = vmatprep.subr.bf16.mxu0 0
        %2364 = vmatpush1.bf16.msra.mxu0 %v2137
        %2365 = vmatprep.subr.bf16.mxu0 0
        %2366 = vmatpush1.bf16.msra.mxu0 %v2138
        %2367 = vmatprep.subr.bf16.mxu0 0
        %2368 = vmatpush1.bf16.msra.mxu0 0
        %2369 = vmatprep.subr.bf16.mxu0 0
        %2370 = vmatpush1.bf16.msra.mxu0 0
        %2371 = vmatprep.subr.bf16.mxu0 0
        %2372 = vmatpush1.bf16.msra.mxu0 0
        %2373 = vmatprep.subr.bf16.mxu0 0
        %2374 = vmatpush1.bf16.msra.mxu0 0
        %2375 = vmatprep.subr.bf16.mxu0 0
        %2376 = vmatpush1.bf16.msra.mxu0 0
        %2377 = vmatprep.subr.bf16.mxu0 0
        %2378 = vmatpush1.bf16.msra.mxu0 0
        %2379 = vmatprep.subr.bf16.mxu0 0
        %2380 = vmatpush1.bf16.msra.mxu0 0
        %2381 = vmatprep.subr.bf16.mxu0 0
        %2382 = vmatpush1.bf16.msra.mxu0 0
        %2383 = vmatprep.subr.bf16.mxu0 0
        %2384 = vmatpush1.bf16.msra.mxu0 0
        %2385 = vmatprep.subr.bf16.mxu0 0
        %2386 = vmatpush1.bf16.msra.mxu0 0
        %2387 = vmatprep.subr.bf16.mxu0 0
        %2388 = vmatpush1.bf16.msra.mxu0 0
        %2389 = vmatprep.subr.bf16.mxu0 0
        %2390 = vmatpush1.bf16.msra.mxu0 0
        %2391 = vmatprep.subr.bf16.mxu0 0
        %2392 = vmatpush1.bf16.msra.mxu0 0
        %2393 = vmatprep.subr.bf16.mxu0 0
        %2394 = vmatpush1.bf16.msra.mxu0 0
        %2395 = vmatprep.mubr.bf16.mxu0 0
        %2396 = vmatmul.mubr.bf16.gmra.mrb[0].mxu0 %v2361
        %v2397 = vpop.f32.mrb[0].mxu0
        %v2398 = vadd.f32 0.0, %v2397
        %v2399 = vpop.f32.mrb[0].mxu0
        %v2400 = vpop.f32.mrb[0].mxu0
        %v2401 = vadd.f32 0.0, %v2400
        %v2402 = vpop.f32.mrb[0].mxu0
        %2403 = vdwg.mxu0
        %v2404 = vmax.f32 %v2355, %v2398
        %v2405 = vmax.f32 %v2358, %v2401
        %v2406 = vpack.c.bf16 %v2405, %v2404
        %s2407 = scalar_lea.vmem %s2, 384
        %v2408 = vld [vmem:[%s2407] sm:$0xff]
        %v2409 = vld [vmem:[%s2407 + $0x8] sm:$0xff]
        %v2410 = vld [vmem:[%s2407 + $0x10] sm:$0xff]
        %v2411 = vld [vmem:[%s2407 + $0x18] sm:$0xff]
        %v2412 = vld [vmem:[%s2407 + $0x20] sm:$0xff]
        %v2413 = vld [vmem:[%s2407 + $0x28] sm:$0xff]
        %v2414 = vld [vmem:[%s2407 + $0x30] sm:$0xff]
        %v2415 = vld [vmem:[%s2407 + $0x38] sm:$0xff]
        %v2416 = vld [vmem:[%s2407 + $0x40] sm:$0xff]
        %v2417 = vld [vmem:[%s2407 + $0x48] sm:$0xff]
        %v2418 = vld [vmem:[%s2407 + $0x50] sm:$0xff]
        %v2419 = vld [vmem:[%s2407 + $0x58] sm:$0xff]
        %v2420 = vld [vmem:[%s2407 + $0x60] sm:$0xff]
        %v2421 = vld [vmem:[%s2407 + $0x68] sm:$0xff]
        %v2422 = vld [vmem:[%s2407 + $0x70] sm:$0xff]
        %v2423 = vld [vmem:[%s2407 + $0x78] sm:$0xff]
        %s2424 = scalar_lea.vmem %s2, 512
        %v2425 = vld [vmem:[%s2424] sm:$0xff]
        %v2426 = vld [vmem:[%s2424 + $0x8] sm:$0xff]
        %v2427 = vld [vmem:[%s2424 + $0x10] sm:$0xff]
        %v2428 = vld [vmem:[%s2424 + $0x18] sm:$0xff]
        %v2429 = vld [vmem:[%s2424 + $0x20] sm:$0xff]
        %v2430 = vld [vmem:[%s2424 + $0x28] sm:$0xff]
        %v2431 = vld [vmem:[%s2424 + $0x30] sm:$0xff]
        %v2432 = vld [vmem:[%s2424 + $0x38] sm:$0xff]
        %v2433 = vld [vmem:[%s2424 + $0x40] sm:$0xff]
        %v2434 = vld [vmem:[%s2424 + $0x48] sm:$0xff]
        %v2435 = vld [vmem:[%s2424 + $0x50] sm:$0xff]
        %v2436 = vld [vmem:[%s2424 + $0x58] sm:$0xff]
        %v2437 = vld [vmem:[%s2424 + $0x60] sm:$0xff]
        %v2438 = vld [vmem:[%s2424 + $0x68] sm:$0xff]
        %v2439 = vld [vmem:[%s2424 + $0x70] sm:$0xff]
        %v2440 = vld [vmem:[%s2424 + $0x78] sm:$0xff]
        %v2457 = vunpack.c.l.b16 %v2425
        %v2458 = vunpack.c.h.b16 %v2425
        %v2459 = vunpack.c.l.b16 %v2426
        %v2460 = vunpack.c.h.b16 %v2426
        %v2461 = vunpack.c.l.b16 %v2427
        %v2462 = vunpack.c.h.b16 %v2427
        %v2463 = vunpack.c.l.b16 %v2428
        %v2464 = vunpack.c.h.b16 %v2428
        %v2465 = vunpack.c.l.b16 %v2429
        %v2466 = vunpack.c.h.b16 %v2429
        %v2467 = vunpack.c.l.b16 %v2430
        %v2468 = vunpack.c.h.b16 %v2430
        %v2469 = vunpack.c.l.b16 %v2431
        %v2470 = vunpack.c.h.b16 %v2431
        %v2471 = vunpack.c.l.b16 %v2432
        %v2472 = vunpack.c.h.b16 %v2432
        %v2473 = vunpack.c.l.b16 %v2433
        %v2474 = vunpack.c.h.b16 %v2433
        %v2475 = vunpack.c.l.b16 %v2434
        %v2476 = vunpack.c.h.b16 %v2434
        %v2477 = vunpack.c.l.b16 %v2435
        %v2478 = vunpack.c.h.b16 %v2435
        %v2479 = vunpack.c.l.b16 %v2436
        %v2480 = vunpack.c.h.b16 %v2436
        %v2481 = vunpack.c.l.b16 %v2437
        %v2482 = vunpack.c.h.b16 %v2437
        %v2483 = vunpack.c.l.b16 %v2438
        %v2484 = vunpack.c.h.b16 %v2438
        %v2485 = vunpack.c.l.b16 %v2439
        %v2486 = vunpack.c.h.b16 %v2439
        %v2487 = vunpack.c.l.b16 %v2440
        %v2488 = vunpack.c.h.b16 %v2440
        %v2489 = vpack.c.b16 %v2459, %v2457
        %v2490 = vpack.c.b16 %v2460, %v2458
        %v2491 = vpack.c.b16 %v2463, %v2461
        %v2492 = vpack.c.b16 %v2464, %v2462
        %v2493 = vpack.c.b16 %v2467, %v2465
        %v2494 = vpack.c.b16 %v2468, %v2466
        %v2495 = vpack.c.b16 %v2471, %v2469
        %v2496 = vpack.c.b16 %v2472, %v2470
        %v2497 = vpack.c.b16 %v2475, %v2473
        %v2498 = vpack.c.b16 %v2476, %v2474
        %v2499 = vpack.c.b16 %v2479, %v2477
        %v2500 = vpack.c.b16 %v2480, %v2478
        %v2501 = vpack.c.b16 %v2483, %v2481
        %v2502 = vpack.c.b16 %v2484, %v2482
        %v2503 = vpack.c.b16 %v2487, %v2485
        %v2504 = vpack.c.b16 %v2488, %v2486
        %2521 = vmatprep.subr.bf16.mxu0 %v2490
        %2522 = vmatpush1.bf16.msra.mxu0 %v2489
        %2523 = vmatprep.subr.bf16.mxu0 %v2492
        %2524 = vmatpush1.bf16.msra.mxu0 %v2491
        %2525 = vmatprep.subr.bf16.mxu0 %v2494
        %2526 = vmatpush1.bf16.msra.mxu0 %v2493
        %2527 = vmatprep.subr.bf16.mxu0 %v2496
        %2528 = vmatpush1.bf16.msra.mxu0 %v2495
        %2529 = vmatprep.subr.bf16.mxu0 %v2498
        %2530 = vmatpush1.bf16.msra.mxu0 %v2497
        %2531 = vmatprep.subr.bf16.mxu0 %v2500
        %2532 = vmatpush1.bf16.msra.mxu0 %v2499
        %2533 = vmatprep.subr.bf16.mxu0 %v2502
        %2534 = vmatpush1.bf16.msra.mxu0 %v2501
        %2535 = vmatprep.subr.bf16.mxu0 %v2504
        %2536 = vmatpush1.bf16.msra.mxu0 %v2503
        %2537 = vmatprep.subr.bf16.mxu0 0
        %2538 = vmatpush1.bf16.msra.mxu0 0
        %2539 = vmatprep.subr.bf16.mxu0 0
        %2540 = vmatpush1.bf16.msra.mxu0 0
        %2541 = vmatprep.subr.bf16.mxu0 0
        %2542 = vmatpush1.bf16.msra.mxu0 0
        %2543 = vmatprep.subr.bf16.mxu0 0
        %2544 = vmatpush1.bf16.msra.mxu0 0
        %2545 = vmatprep.subr.bf16.mxu0 0
        %2546 = vmatpush1.bf16.msra.mxu0 0
        %2547 = vmatprep.subr.bf16.mxu0 0
        %2548 = vmatpush1.bf16.msra.mxu0 0
        %2549 = vmatprep.subr.bf16.mxu0 0
        %2550 = vmatpush1.bf16.msra.mxu0 0
        %2551 = vmatprep.subr.bf16.mxu0 0
        %2552 = vmatpush1.bf16.msra.mxu0 0
        %2553 = vmatprep.mubr.bf16.mxu0 0
        %2554 = vmatmul.mubr.bf16.gmra.mrb[0].mxu0 %v2317
        %v2555 = vpop.f32.mrb[0].mxu0
        %v2556 = vadd.f32 0.0, %v2555
        %v2557 = vpop.f32.mrb[0].mxu0
        %v2558 = vadd.f32 0.0, %v2557
        %v2559 = vpop.f32.mrb[0].mxu0
        %v2560 = vadd.f32 0.0, %v2559
        %v2561 = vpop.f32.mrb[0].mxu0
        %v2562 = vadd.f32 0.0, %v2561
        %2563 = vdwg.mxu0
        %v2580 = vunpack.c.l.b16 %v2408
        %v2581 = vunpack.c.h.b16 %v2408
        %v2582 = vunpack.c.l.b16 %v2409
        %v2583 = vunpack.c.h.b16 %v2409
        %v2584 = vunpack.c.l.b16 %v2410
        %v2585 = vunpack.c.h.b16 %v2410
        %v2586 = vunpack.c.l.b16 %v2411
        %v2587 = vunpack.c.h.b16 %v2411
        %v2588 = vunpack.c.l.b16 %v2412
        %v2589 = vunpack.c.h.b16 %v2412
        %v2590 = vunpack.c.l.b16 %v2413
        %v2591 = vunpack.c.h.b16 %v2413
        %v2592 = vunpack.c.l.b16 %v2414
        %v2593 = vunpack.c.h.b16 %v2414
        %v2594 = vunpack.c.l.b16 %v2415
        %v2595 = vunpack.c.h.b16 %v2415
        %v2596 = vunpack.c.l.b16 %v2416
        %v2597 = vunpack.c.h.b16 %v2416
        %v2598 = vunpack.c.l.b16 %v2417
        %v2599 = vunpack.c.h.b16 %v2417
        %v2600 = vunpack.c.l.b16 %v2418
        %v2601 = vunpack.c.h.b16 %v2418
        %v2602 = vunpack.c.l.b16 %v2419
        %v2603 = vunpack.c.h.b16 %v2419
        %v2604 = vunpack.c.l.b16 %v2420
        %v2605 = vunpack.c.h.b16 %v2420
        %v2606 = vunpack.c.l.b16 %v2421
        %v2607 = vunpack.c.h.b16 %v2421
        %v2608 = vunpack.c.l.b16 %v2422
        %v2609 = vunpack.c.h.b16 %v2422
        %v2610 = vunpack.c.l.b16 %v2423
        %v2611 = vunpack.c.h.b16 %v2423
        %v2612 = vpack.c.b16 %v2582, %v2580
        %v2613 = vpack.c.b16 %v2583, %v2581
        %v2614 = vpack.c.b16 %v2586, %v2584
        %v2615 = vpack.c.b16 %v2587, %v2585
        %v2616 = vpack.c.b16 %v2590, %v2588
        %v2617 = vpack.c.b16 %v2591, %v2589
        %v2618 = vpack.c.b16 %v2594, %v2592
        %v2619 = vpack.c.b16 %v2595, %v2593
        %v2620 = vpack.c.b16 %v2598, %v2596
        %v2621 = vpack.c.b16 %v2599, %v2597
        %v2622 = vpack.c.b16 %v2602, %v2600
        %v2623 = vpack.c.b16 %v2603, %v2601
        %v2624 = vpack.c.b16 %v2606, %v2604
        %v2625 = vpack.c.b16 %v2607, %v2605
        %v2626 = vpack.c.b16 %v2610, %v2608
        %v2627 = vpack.c.b16 %v2611, %v2609
        %2644 = vmatprep.subr.bf16.mxu0 %v2613
        %2645 = vmatpush1.bf16.msra.mxu0 %v2612
        %2646 = vmatprep.subr.bf16.mxu0 %v2615
        %2647 = vmatpush1.bf16.msra.mxu0 %v2614
        %2648 = vmatprep.subr.bf16.mxu0 %v2617
        %2649 = vmatpush1.bf16.msra.mxu0 %v2616
        %2650 = vmatprep.subr.bf16.mxu0 %v2619
        %2651 = vmatpush1.bf16.msra.mxu0 %v2618
        %2652 = vmatprep.subr.bf16.mxu0 %v2621
        %2653 = vmatpush1.bf16.msra.mxu0 %v2620
        %2654 = vmatprep.subr.bf16.mxu0 %v2623
        %2655 = vmatpush1.bf16.msra.mxu0 %v2622
        %2656 = vmatprep.subr.bf16.mxu0 %v2625
        %2657 = vmatpush1.bf16.msra.mxu0 %v2624
        %2658 = vmatprep.subr.bf16.mxu0 %v2627
        %2659 = vmatpush1.bf16.msra.mxu0 %v2626
        %2660 = vmatprep.subr.bf16.mxu0 0
        %2661 = vmatpush1.bf16.msra.mxu0 0
        %2662 = vmatprep.subr.bf16.mxu0 0
        %2663 = vmatpush1.bf16.msra.mxu0 0
        %2664 = vmatprep.subr.bf16.mxu0 0
        %2665 = vmatpush1.bf16.msra.mxu0 0
        %2666 = vmatprep.subr.bf16.mxu0 0
        %2667 = vmatpush1.bf16.msra.mxu0 0
        %2668 = vmatprep.subr.bf16.mxu0 0
        %2669 = vmatpush1.bf16.msra.mxu0 0
        %2670 = vmatprep.subr.bf16.mxu0 0
        %2671 = vmatpush1.bf16.msra.mxu0 0
        %2672 = vmatprep.subr.bf16.mxu0 0
        %2673 = vmatpush1.bf16.msra.mxu0 0
        %2674 = vmatprep.subr.bf16.mxu0 0
        %2675 = vmatpush1.bf16.msra.mxu0 0
        %2676 = vmatprep.mubr.bf16.mxu0 0
        %2677 = vmatmul.mubr.bf16.gmra.mrb[0].mxu0 %v2228
        %v2678 = vpop.f32.mrb[0].mxu0
        %v2679 = vadd.f32 %v2556, %v2678
        %v2680 = vpop.f32.mrb[0].mxu0
        %v2681 = vadd.f32 %v2558, %v2680
        %v2682 = vpop.f32.mrb[0].mxu0
        %v2683 = vadd.f32 %v2560, %v2682
        %v2684 = vpop.f32.mrb[0].mxu0
        %v2685 = vadd.f32 %v2562, %v2684
        %2686 = vdwg.mxu0
        %s2687 = scalar_lea.vmem %s2, 640
        %v2688 = vld [vmem:[%s2687] sm:$0xff]
        %v2689 = vld [vmem:[%s2687 + $0x8] sm:$0xff]
        %v2690 = vld [vmem:[%s2687 + $0x10] sm:$0xff]
        %v2691 = vld [vmem:[%s2687 + $0x18] sm:$0xff]
        %v2692 = vld [vmem:[%s2687 + $0x20] sm:$0xff]
        %v2693 = vld [vmem:[%s2687 + $0x28] sm:$0xff]
        %v2694 = vld [vmem:[%s2687 + $0x30] sm:$0xff]
        %v2695 = vld [vmem:[%s2687 + $0x38] sm:$0xff]
        %v2696 = vld [vmem:[%s2687 + $0x40] sm:$0xff]
        %v2697 = vld [vmem:[%s2687 + $0x48] sm:$0xff]
        %v2698 = vld [vmem:[%s2687 + $0x50] sm:$0xff]
        %v2699 = vld [vmem:[%s2687 + $0x58] sm:$0xff]
        %v2700 = vld [vmem:[%s2687 + $0x60] sm:$0xff]
        %v2701 = vld [vmem:[%s2687 + $0x68] sm:$0xff]
        %v2702 = vld [vmem:[%s2687 + $0x70] sm:$0xff]
        %v2703 = vld [vmem:[%s2687 + $0x78] sm:$0xff]
        %v2720 = vunpack.c.l.b16 %v2688
        %v2721 = vunpack.c.h.b16 %v2688
        %v2722 = vunpack.c.l.b16 %v2689
        %v2723 = vunpack.c.h.b16 %v2689
        %v2724 = vunpack.c.l.b16 %v2690
        %v2725 = vunpack.c.h.b16 %v2690
        %v2726 = vunpack.c.l.b16 %v2691
        %v2727 = vunpack.c.h.b16 %v2691
        %v2728 = vunpack.c.l.b16 %v2692
        %v2729 = vunpack.c.h.b16 %v2692
        %v2730 = vunpack.c.l.b16 %v2693
        %v2731 = vunpack.c.h.b16 %v2693
        %v2732 = vunpack.c.l.b16 %v2694
        %v2733 = vunpack.c.h.b16 %v2694
        %v2734 = vunpack.c.l.b16 %v2695
        %v2735 = vunpack.c.h.b16 %v2695
        %v2736 = vunpack.c.l.b16 %v2696
        %v2737 = vunpack.c.h.b16 %v2696
        %v2738 = vunpack.c.l.b16 %v2697
        %v2739 = vunpack.c.h.b16 %v2697
        %v2740 = vunpack.c.l.b16 %v2698
        %v2741 = vunpack.c.h.b16 %v2698
        %v2742 = vunpack.c.l.b16 %v2699
        %v2743 = vunpack.c.h.b16 %v2699
        %v2744 = vunpack.c.l.b16 %v2700
        %v2745 = vunpack.c.h.b16 %v2700
        %v2746 = vunpack.c.l.b16 %v2701
        %v2747 = vunpack.c.h.b16 %v2701
        %v2748 = vunpack.c.l.b16 %v2702
        %v2749 = vunpack.c.h.b16 %v2702
        %v2750 = vunpack.c.l.b16 %v2703
        %v2751 = vunpack.c.h.b16 %v2703
        %v2752 = vpack.c.b16 %v2722, %v2720
        %v2753 = vpack.c.b16 %v2723, %v2721
        %v2754 = vpack.c.b16 %v2726, %v2724
        %v2755 = vpack.c.b16 %v2727, %v2725
        %v2756 = vpack.c.b16 %v2730, %v2728
        %v2757 = vpack.c.b16 %v2731, %v2729
        %v2758 = vpack.c.b16 %v2734, %v2732
        %v2759 = vpack.c.b16 %v2735, %v2733
        %v2760 = vpack.c.b16 %v2738, %v2736
        %v2761 = vpack.c.b16 %v2739, %v2737
        %v2762 = vpack.c.b16 %v2742, %v2740
        %v2763 = vpack.c.b16 %v2743, %v2741
        %v2764 = vpack.c.b16 %v2746, %v2744
        %v2765 = vpack.c.b16 %v2747, %v2745
        %v2766 = vpack.c.b16 %v2750, %v2748
        %v2767 = vpack.c.b16 %v2751, %v2749
        %2784 = vmatprep.subr.bf16.mxu0 %v2753
        %2785 = vmatpush1.bf16.msra.mxu0 %v2752
        %2786 = vmatprep.subr.bf16.mxu0 %v2755
        %2787 = vmatpush1.bf16.msra.mxu0 %v2754
        %2788 = vmatprep.subr.bf16.mxu0 %v2757
        %2789 = vmatpush1.bf16.msra.mxu0 %v2756
        %2790 = vmatprep.subr.bf16.mxu0 %v2759
        %2791 = vmatpush1.bf16.msra.mxu0 %v2758
        %2792 = vmatprep.subr.bf16.mxu0 %v2761
        %2793 = vmatpush1.bf16.msra.mxu0 %v2760
        %2794 = vmatprep.subr.bf16.mxu0 %v2763
        %2795 = vmatpush1.bf16.msra.mxu0 %v2762
        %2796 = vmatprep.subr.bf16.mxu0 %v2765
        %2797 = vmatpush1.bf16.msra.mxu0 %v2764
        %2798 = vmatprep.subr.bf16.mxu0 %v2767
        %2799 = vmatpush1.bf16.msra.mxu0 %v2766
        %2800 = vmatprep.subr.bf16.mxu0 0
        %2801 = vmatpush1.bf16.msra.mxu0 0
        %2802 = vmatprep.subr.bf16.mxu0 0
        %2803 = vmatpush1.bf16.msra.mxu0 0
        %2804 = vmatprep.subr.bf16.mxu0 0
        %2805 = vmatpush1.bf16.msra.mxu0 0
        %2806 = vmatprep.subr.bf16.mxu0 0
        %2807 = vmatpush1.bf16.msra.mxu0 0
        %2808 = vmatprep.subr.bf16.mxu0 0
        %2809 = vmatpush1.bf16.msra.mxu0 0
        %2810 = vmatprep.subr.bf16.mxu0 0
        %2811 = vmatpush1.bf16.msra.mxu0 0
        %2812 = vmatprep.subr.bf16.mxu0 0
        %2813 = vmatpush1.bf16.msra.mxu0 0
        %2814 = vmatprep.subr.bf16.mxu0 0
        %2815 = vmatpush1.bf16.msra.mxu0 0
        %2816 = vmatprep.mubr.bf16.mxu0 0
        %2817 = vmatmul.mubr.bf16.gmra.mrb[0].mxu0 %v2406
        %v2818 = vpop.f32.mrb[0].mxu0
        %v2819 = vadd.f32 0.0, %v2818
        %v2820 = vpop.f32.mrb[0].mxu0
        %v2821 = vadd.f32 0.0, %v2820
        %v2822 = vpop.f32.mrb[0].mxu0
        %v2823 = vadd.f32 0.0, %v2822
        %v2824 = vpop.f32.mrb[0].mxu0
        %v2825 = vadd.f32 0.0, %v2824
        %2826 = vdwg.mxu0
        %v2827 = vadd.f32 %v2679, %v2819
        %v2828 = vadd.f32 %v2681, %v2821
        %v2829 = vadd.f32 %v2683, %v2823
        %v2830 = vadd.f32 %v2685, %v2825
        %s2831 = scalar_lea.vmem %s3, 4
        %v2832 = vld [vmem:[%s2831] sm:$0x3]
        %v2834 = vlaneseq
        %v2835 = vshrl.u32 %v2834, 7
        %v2836 = vsub.s32 0, %v2835
        %v2837 = vrot.slane %v2832, %v2836
        %v2838 = vlaneseq
        %v2839 = vshrl.u32 %v2838, 7
        %v2840 = vsub.s32 1, %v2839
        %v2841 = vrot.slane %v2832, %v2840
        %v2844 = vadd.f32 %v2827, %v2837
        %v2845 = vadd.f32 %v2828, %v2841
        %v2846 = vadd.f32 %v2829, %v2837
        %v2847 = vadd.f32 %v2830, %v2841
        %v2848 = vmax.f32 %v2844, 0.0
        %v2849 = vmax.f32 %v2845, 0.0
        %v2850 = vmax.f32 %v2846, 0.0
        %v2851 = vmax.f32 %v2847, 0.0
        %v2852 = vmax.f32 %v2848, %v2849
        %v2853 = vmax.f32 %v2850, %v2851
        %v2854 = vpack.c.bf16 %v2853, %v2852
        %v2855 = vpack.c.bf16 %v1219, %v1219
        %vm2856 = vcmask 130048
        %v2858 = vsel %vm2856, %v2855, 0
        %2860 = vmatprep.subr.bf16.mxu0 0
        %2861 = vmatpush1.bf16.msra.mxu0 %v2854
        %2862 = vmatprep.subr.bf16.mxu0 0
        %2863 = vmatpush1.bf16.msra.mxu0 0
        %2864 = vmatprep.subr.bf16.mxu0 0
        %2865 = vmatpush1.bf16.msra.mxu0 0
        %2866 = vmatprep.subr.bf16.mxu0 0
        %2867 = vmatpush1.bf16.msra.mxu0 0
        %2868 = vmatprep.subr.bf16.mxu0 0
        %2869 = vmatpush1.bf16.msra.mxu0 0
        %2870 = vmatprep.subr.bf16.mxu0 0
        %2871 = vmatpush1.bf16.msra.mxu0 0
        %2872 = vmatprep.subr.bf16.mxu0 0
        %2873 = vmatpush1.bf16.msra.mxu0 0
        %2874 = vmatprep.subr.bf16.mxu0 0
        %2875 = vmatpush1.bf16.msra.mxu0 0
        %2876 = vmatprep.subr.bf16.mxu0 0
        %2877 = vmatpush1.bf16.msra.mxu0 0
        %2878 = vmatprep.subr.bf16.mxu0 0
        %2879 = vmatpush1.bf16.msra.mxu0 0
        %2880 = vmatprep.subr.bf16.mxu0 0
        %2881 = vmatpush1.bf16.msra.mxu0 0
        %2882 = vmatprep.subr.bf16.mxu0 0
        %2883 = vmatpush1.bf16.msra.mxu0 0
        %2884 = vmatprep.subr.bf16.mxu0 0
        %2885 = vmatpush1.bf16.msra.mxu0 0
        %2886 = vmatprep.subr.bf16.mxu0 0
        %2887 = vmatpush1.bf16.msra.mxu0 0
        %2888 = vmatprep.subr.bf16.mxu0 0
        %2889 = vmatpush1.bf16.msra.mxu0 0
        %2890 = vmatprep.subr.bf16.mxu0 0
        %2891 = vmatpush1.bf16.msra.mxu0 0
        %2892 = vmatprep.mubr.bf16.mxu0 0
        %2893 = vmatmul.mubr.bf16.gmra.mrb[0].mxu0 %v2858
        %v2894 = vpop.f32.mrb[0].mxu0
        %v2895 = vadd.f32 0.0, %v2894
        %v2896 = vpop.f32.mrb[0].mxu0
        %v2897 = vpop.f32.mrb[0].mxu0
        %v2898 = vpop.f32.mrb[0].mxu0
        %2899 = vdwg.mxu0
        %v2900 = vpack.c.bf16 %v1288, %v1288
        %v2902 = vsel %vm2856, %v2900, 0
        %2904 = vmatprep.subr.bf16.mxu0 0
        %2905 = vmatpush1.bf16.msra.mxu0 %v2854
        %2906 = vmatprep.subr.bf16.mxu0 0
        %2907 = vmatpush1.bf16.msra.mxu0 0
        %2908 = vmatprep.subr.bf16.mxu0 0
        %2909 = vmatpush1.bf16.msra.mxu0 0
        %2910 = vmatprep.subr.bf16.mxu0 0
        %2911 = vmatpush1.bf16.msra.mxu0 0
        %2912 = vmatprep.subr.bf16.mxu0 0
        %2913 = vmatpush1.bf16.msra.mxu0 0
        %2914 = vmatprep.subr.bf16.mxu0 0
        %2915 = vmatpush1.bf16.msra.mxu0 0
        %2916 = vmatprep.subr.bf16.mxu0 0
        %2917 = vmatpush1.bf16.msra.mxu0 0
        %2918 = vmatprep.subr.bf16.mxu0 0
        %2919 = vmatpush1.bf16.msra.mxu0 0
        %2920 = vmatprep.subr.bf16.mxu0 0
        %2921 = vmatpush1.bf16.msra.mxu0 0
        %2922 = vmatprep.subr.bf16.mxu0 0
        %2923 = vmatpush1.bf16.msra.mxu0 0
        %2924 = vmatprep.subr.bf16.mxu0 0
        %2925 = vmatpush1.bf16.msra.mxu0 0
        %2926 = vmatprep.subr.bf16.mxu0 0
        %2927 = vmatpush1.bf16.msra.mxu0 0
        %2928 = vmatprep.subr.bf16.mxu0 0
        %2929 = vmatpush1.bf16.msra.mxu0 0
        %2930 = vmatprep.subr.bf16.mxu0 0
        %2931 = vmatpush1.bf16.msra.mxu0 0
        %2932 = vmatprep.subr.bf16.mxu0 0
        %2933 = vmatpush1.bf16.msra.mxu0 0
        %2934 = vmatprep.subr.bf16.mxu0 0
        %2935 = vmatpush1.bf16.msra.mxu0 0
        %2936 = vmatprep.mubr.bf16.mxu0 0
        %2937 = vmatmul.mubr.bf16.gmra.mrb[0].mxu0 %v2902
        %v2938 = vpop.f32.mrb[0].mxu0
        %v2939 = vadd.f32 0.0, %v2938
        %v2940 = vpop.f32.mrb[0].mxu0
        %v2941 = vpop.f32.mrb[0].mxu0
        %v2942 = vpop.f32.mrb[0].mxu0
        %2943 = vdwg.mxu0
        %v2944 = vmax.f32 %v2895, %v2939
        %v2945 = vpack.c.bf16 %v2944, %v2944
        %v2946 = vpack.c.bf16 %v1363, %v1363
        %v2948 = vsel %vm2856, %v2946, 0
        %2950 = vmatprep.subr.bf16.mxu0 0
        %2951 = vmatpush1.bf16.msra.mxu0 %v2854
        %2952 = vmatprep.subr.bf16.mxu0 0
        %2953 = vmatpush1.bf16.msra.mxu0 0
        %2954 = vmatprep.subr.bf16.mxu0 0
        %2955 = vmatpush1.bf16.msra.mxu0 0
        %2956 = vmatprep.subr.bf16.mxu0 0
        %2957 = vmatpush1.bf16.msra.mxu0 0
        %2958 = vmatprep.subr.bf16.mxu0 0
        %2959 = vmatpush1.bf16.msra.mxu0 0
        %2960 = vmatprep.subr.bf16.mxu0 0
        %2961 = vmatpush1.bf16.msra.mxu0 0
        %2962 = vmatprep.subr.bf16.mxu0 0
        %2963 = vmatpush1.bf16.msra.mxu0 0
        %2964 = vmatprep.subr.bf16.mxu0 0
        %2965 = vmatpush1.bf16.msra.mxu0 0
        %2966 = vmatprep.subr.bf16.mxu0 0
        %2967 = vmatpush1.bf16.msra.mxu0 0
        %2968 = vmatprep.subr.bf16.mxu0 0
        %2969 = vmatpush1.bf16.msra.mxu0 0
        %2970 = vmatprep.subr.bf16.mxu0 0
        %2971 = vmatpush1.bf16.msra.mxu0 0
        %2972 = vmatprep.subr.bf16.mxu0 0
        %2973 = vmatpush1.bf16.msra.mxu0 0
        %2974 = vmatprep.subr.bf16.mxu0 0
        %2975 = vmatpush1.bf16.msra.mxu0 0
        %2976 = vmatprep.subr.bf16.mxu0 0
        %2977 = vmatpush1.bf16.msra.mxu0 0
        %2978 = vmatprep.subr.bf16.mxu0 0
        %2979 = vmatpush1.bf16.msra.mxu0 0
        %2980 = vmatprep.subr.bf16.mxu0 0
        %2981 = vmatpush1.bf16.msra.mxu0 0
        %2982 = vmatprep.mubr.bf16.mxu0 0
        %2983 = vmatmul.mubr.bf16.gmra.mrb[0].mxu0 %v2948
        %v2984 = vpop.f32.mrb[0].mxu0
        %v2985 = vadd.f32 0.0, %v2984
        %v2986 = vpop.f32.mrb[0].mxu0
        %v2987 = vpop.f32.mrb[0].mxu0
        %v2988 = vpop.f32.mrb[0].mxu0
        %2989 = vdwg.mxu0
        %v2990 = vpack.c.bf16 %v1432, %v1432
        %v2992 = vsel %vm2856, %v2990, 0
        %2994 = vmatprep.subr.bf16.mxu0 0
        %2995 = vmatpush1.bf16.msra.mxu0 %v2854
        %2996 = vmatprep.subr.bf16.mxu0 0
        %2997 = vmatpush1.bf16.msra.mxu0 0
        %2998 = vmatprep.subr.bf16.mxu0 0
        %2999 = vmatpush1.bf16.msra.mxu0 0
        %3000 = vmatprep.subr.bf16.mxu0 0
        %3001 = vmatpush1.bf16.msra.mxu0 0
        %3002 = vmatprep.subr.bf16.mxu0 0
        %3003 = vmatpush1.bf16.msra.mxu0 0
        %3004 = vmatprep.subr.bf16.mxu0 0
        %3005 = vmatpush1.bf16.msra.mxu0 0
        %3006 = vmatprep.subr.bf16.mxu0 0
        %3007 = vmatpush1.bf16.msra.mxu0 0
        %3008 = vmatprep.subr.bf16.mxu0 0
        %3009 = vmatpush1.bf16.msra.mxu0 0
        %3010 = vmatprep.subr.bf16.mxu0 0
        %3011 = vmatpush1.bf16.msra.mxu0 0
        %3012 = vmatprep.subr.bf16.mxu0 0
        %3013 = vmatpush1.bf16.msra.mxu0 0
        %3014 = vmatprep.subr.bf16.mxu0 0
        %3015 = vmatpush1.bf16.msra.mxu0 0
        %3016 = vmatprep.subr.bf16.mxu0 0
        %3017 = vmatpush1.bf16.msra.mxu0 0
        %3018 = vmatprep.subr.bf16.mxu0 0
        %3019 = vmatpush1.bf16.msra.mxu0 0
        %3020 = vmatprep.subr.bf16.mxu0 0
        %3021 = vmatpush1.bf16.msra.mxu0 0
        %3022 = vmatprep.subr.bf16.mxu0 0
        %3023 = vmatpush1.bf16.msra.mxu0 0
        %3024 = vmatprep.subr.bf16.mxu0 0
        %3025 = vmatpush1.bf16.msra.mxu0 0
        %3026 = vmatprep.mubr.bf16.mxu0 0
        %3027 = vmatmul.mubr.bf16.gmra.mrb[0].mxu0 %v2992
        %v3028 = vpop.f32.mrb[0].mxu0
        %v3029 = vadd.f32 0.0, %v3028
        %v3030 = vpop.f32.mrb[0].mxu0
        %v3031 = vpop.f32.mrb[0].mxu0
        %v3032 = vpop.f32.mrb[0].mxu0
        %3033 = vdwg.mxu0
        %v3034 = vmax.f32 %v2985, %v3029
        %v3035 = vpack.c.bf16 %v3034, %v3034
        %v3036 = vpack.c.bf16 %v1511, %v1511
        %v3038 = vsel %vm2856, %v3036, 0
        %3040 = vmatprep.subr.bf16.mxu0 0
        %3041 = vmatpush1.bf16.msra.mxu0 %v2854
        %3042 = vmatprep.subr.bf16.mxu0 0
        %3043 = vmatpush1.bf16.msra.mxu0 0
        %3044 = vmatprep.subr.bf16.mxu0 0
        %3045 = vmatpush1.bf16.msra.mxu0 0
        %3046 = vmatprep.subr.bf16.mxu0 0
        %3047 = vmatpush1.bf16.msra.mxu0 0
        %3048 = vmatprep.subr.bf16.mxu0 0
        %3049 = vmatpush1.bf16.msra.mxu0 0
        %3050 = vmatprep.subr.bf16.mxu0 0
        %3051 = vmatpush1.bf16.msra.mxu0 0
        %3052 = vmatprep.subr.bf16.mxu0 0
        %3053 = vmatpush1.bf16.msra.mxu0 0
        %3054 = vmatprep.subr.bf16.mxu0 0
        %3055 = vmatpush1.bf16.msra.mxu0 0
        %3056 = vmatprep.subr.bf16.mxu0 0
        %3057 = vmatpush1.bf16.msra.mxu0 0
        %3058 = vmatprep.subr.bf16.mxu0 0
        %3059 = vmatpush1.bf16.msra.mxu0 0
        %3060 = vmatprep.subr.bf16.mxu0 0
        %3061 = vmatpush1.bf16.msra.mxu0 0
        %3062 = vmatprep.subr.bf16.mxu0 0
        %3063 = vmatpush1.bf16.msra.mxu0 0
        %3064 = vmatprep.subr.bf16.mxu0 0
        %3065 = vmatpush1.bf16.msra.mxu0 0
        %3066 = vmatprep.subr.bf16.mxu0 0
        %3067 = vmatpush1.bf16.msra.mxu0 0
        %3068 = vmatprep.subr.bf16.mxu0 0
        %3069 = vmatpush1.bf16.msra.mxu0 0
        %3070 = vmatprep.subr.bf16.mxu0 0
        %3071 = vmatpush1.bf16.msra.mxu0 0
        %3072 = vmatprep.mubr.bf16.mxu0 0
        %3073 = vmatmul.mubr.bf16.gmra.mrb[0].mxu0 %v3038
        %v3074 = vpop.f32.mrb[0].mxu0
        %v3075 = vadd.f32 0.0, %v3074
        %v3076 = vpop.f32.mrb[0].mxu0
        %v3077 = vpop.f32.mrb[0].mxu0
        %v3078 = vpop.f32.mrb[0].mxu0
        %3079 = vdwg.mxu0
        %v3080 = vpack.c.bf16 %v1580, %v1580
        %v3082 = vsel %vm2856, %v3080, 0
        %3084 = vmatprep.subr.bf16.mxu0 0
        %3085 = vmatpush1.bf16.msra.mxu0 %v2854
        %3086 = vmatprep.subr.bf16.mxu0 0
        %3087 = vmatpush1.bf16.msra.mxu0 0
        %3088 = vmatprep.subr.bf16.mxu0 0
        %3089 = vmatpush1.bf16.msra.mxu0 0
        %3090 = vmatprep.subr.bf16.mxu0 0
        %3091 = vmatpush1.bf16.msra.mxu0 0
        %3092 = vmatprep.subr.bf16.mxu0 0
        %3093 = vmatpush1.bf16.msra.mxu0 0
        %3094 = vmatprep.subr.bf16.mxu0 0
        %3095 = vmatpush1.bf16.msra.mxu0 0
        %3096 = vmatprep.subr.bf16.mxu0 0
        %3097 = vmatpush1.bf16.msra.mxu0 0
        %3098 = vmatprep.subr.bf16.mxu0 0
        %3099 = vmatpush1.bf16.msra.mxu0 0
        %3100 = vmatprep.subr.bf16.mxu0 0
        %3101 = vmatpush1.bf16.msra.mxu0 0
        %3102 = vmatprep.subr.bf16.mxu0 0
        %3103 = vmatpush1.bf16.msra.mxu0 0
        %3104 = vmatprep.subr.bf16.mxu0 0
        %3105 = vmatpush1.bf16.msra.mxu0 0
        %3106 = vmatprep.subr.bf16.mxu0 0
        %3107 = vmatpush1.bf16.msra.mxu0 0
        %3108 = vmatprep.subr.bf16.mxu0 0
        %3109 = vmatpush1.bf16.msra.mxu0 0
        %3110 = vmatprep.subr.bf16.mxu0 0
        %3111 = vmatpush1.bf16.msra.mxu0 0
        %3112 = vmatprep.subr.bf16.mxu0 0
        %3113 = vmatpush1.bf16.msra.mxu0 0
        %3114 = vmatprep.subr.bf16.mxu0 0
        %3115 = vmatpush1.bf16.msra.mxu0 0
        %3116 = vmatprep.mubr.bf16.mxu0 0
        %3117 = vmatmul.mubr.bf16.gmra.mrb[0].mxu0 %v3082
        %v3118 = vpop.f32.mrb[0].mxu0
        %v3119 = vadd.f32 0.0, %v3118
        %v3120 = vpop.f32.mrb[0].mxu0
        %v3121 = vpop.f32.mrb[0].mxu0
        %v3122 = vpop.f32.mrb[0].mxu0
        %3123 = vdwg.mxu0
        %v3124 = vmax.f32 %v3075, %v3119
        %v3125 = vpack.c.bf16 %v3124, %v3124
        %s3126 = scalar_lea.vmem %s2, 768
        %v3127 = vld [vmem:[%s3126] sm:$0xff]
        %v3128 = vld [vmem:[%s3126 + $0x8] sm:$0xff]
        %v3129 = vld [vmem:[%s3126 + $0x10] sm:$0xff]
        %v3130 = vld [vmem:[%s3126 + $0x18] sm:$0xff]
        %v3131 = vld [vmem:[%s3126 + $0x20] sm:$0xff]
        %v3132 = vld [vmem:[%s3126 + $0x28] sm:$0xff]
        %v3133 = vld [vmem:[%s3126 + $0x30] sm:$0xff]
        %v3134 = vld [vmem:[%s3126 + $0x38] sm:$0xff]
        %v3135 = vld [vmem:[%s3126 + $0x40] sm:$0xff]
        %v3136 = vld [vmem:[%s3126 + $0x48] sm:$0xff]
        %v3137 = vld [vmem:[%s3126 + $0x50] sm:$0xff]
        %v3138 = vld [vmem:[%s3126 + $0x58] sm:$0xff]
        %v3139 = vld [vmem:[%s3126 + $0x60] sm:$0xff]
        %v3140 = vld [vmem:[%s3126 + $0x68] sm:$0xff]
        %v3141 = vld [vmem:[%s3126 + $0x70] sm:$0xff]
        %v3142 = vld [vmem:[%s3126 + $0x78] sm:$0xff]
        %s3143 = scalar_lea.vmem %s2, 896
        %v3144 = vld [vmem:[%s3143] sm:$0xff]
        %v3145 = vld [vmem:[%s3143 + $0x8] sm:$0xff]
        %v3146 = vld [vmem:[%s3143 + $0x10] sm:$0xff]
        %v3147 = vld [vmem:[%s3143 + $0x18] sm:$0xff]
        %v3148 = vld [vmem:[%s3143 + $0x20] sm:$0xff]
        %v3149 = vld [vmem:[%s3143 + $0x28] sm:$0xff]
        %v3150 = vld [vmem:[%s3143 + $0x30] sm:$0xff]
        %v3151 = vld [vmem:[%s3143 + $0x38] sm:$0xff]
        %v3152 = vld [vmem:[%s3143 + $0x40] sm:$0xff]
        %v3153 = vld [vmem:[%s3143 + $0x48] sm:$0xff]
        %v3154 = vld [vmem:[%s3143 + $0x50] sm:$0xff]
        %v3155 = vld [vmem:[%s3143 + $0x58] sm:$0xff]
        %v3156 = vld [vmem:[%s3143 + $0x60] sm:$0xff]
        %v3157 = vld [vmem:[%s3143 + $0x68] sm:$0xff]
        %v3158 = vld [vmem:[%s3143 + $0x70] sm:$0xff]
        %v3159 = vld [vmem:[%s3143 + $0x78] sm:$0xff]
        %v3176 = vunpack.c.l.b16 %v3144
        %v3177 = vunpack.c.h.b16 %v3144
        %v3178 = vunpack.c.l.b16 %v3145
        %v3179 = vunpack.c.h.b16 %v3145
        %v3180 = vunpack.c.l.b16 %v3146
        %v3181 = vunpack.c.h.b16 %v3146
        %v3182 = vunpack.c.l.b16 %v3147
        %v3183 = vunpack.c.h.b16 %v3147
        %v3184 = vunpack.c.l.b16 %v3148
        %v3185 = vunpack.c.h.b16 %v3148
        %v3186 = vunpack.c.l.b16 %v3149
        %v3187 = vunpack.c.h.b16 %v3149
        %v3188 = vunpack.c.l.b16 %v3150
        %v3189 = vunpack.c.h.b16 %v3150
        %v3190 = vunpack.c.l.b16 %v3151
        %v3191 = vunpack.c.h.b16 %v3151
        %v3192 = vunpack.c.l.b16 %v3152
        %v3193 = vunpack.c.h.b16 %v3152
        %v3194 = vunpack.c.l.b16 %v3153
        %v3195 = vunpack.c.h.b16 %v3153
        %v3196 = vunpack.c.l.b16 %v3154
        %v3197 = vunpack.c.h.b16 %v3154
        %v3198 = vunpack.c.l.b16 %v3155
        %v3199 = vunpack.c.h.b16 %v3155
        %v3200 = vunpack.c.l.b16 %v3156
        %v3201 = vunpack.c.h.b16 %v3156
        %v3202 = vunpack.c.l.b16 %v3157
        %v3203 = vunpack.c.h.b16 %v3157
        %v3204 = vunpack.c.l.b16 %v3158
        %v3205 = vunpack.c.h.b16 %v3158
        %v3206 = vunpack.c.l.b16 %v3159
        %v3207 = vunpack.c.h.b16 %v3159
        %v3208 = vpack.c.b16 %v3178, %v3176
        %v3209 = vpack.c.b16 %v3179, %v3177
        %v3210 = vpack.c.b16 %v3182, %v3180
        %v3211 = vpack.c.b16 %v3183, %v3181
        %v3212 = vpack.c.b16 %v3186, %v3184
        %v3213 = vpack.c.b16 %v3187, %v3185
        %v3214 = vpack.c.b16 %v3190, %v3188
        %v3215 = vpack.c.b16 %v3191, %v3189
        %v3216 = vpack.c.b16 %v3194, %v3192
        %v3217 = vpack.c.b16 %v3195, %v3193
        %v3218 = vpack.c.b16 %v3198, %v3196
        %v3219 = vpack.c.b16 %v3199, %v3197
        %v3220 = vpack.c.b16 %v3202, %v3200
        %v3221 = vpack.c.b16 %v3203, %v3201
        %v3222 = vpack.c.b16 %v3206, %v3204
        %v3223 = vpack.c.b16 %v3207, %v3205
        %3240 = vmatprep.subr.bf16.mxu0 %v3209
        %3241 = vmatpush1.bf16.msra.mxu0 %v3208
        %3242 = vmatprep.subr.bf16.mxu0 %v3211
        %3243 = vmatpush1.bf16.msra.mxu0 %v3210
        %3244 = vmatprep.subr.bf16.mxu0 %v3213
        %3245 = vmatpush1.bf16.msra.mxu0 %v3212
        %3246 = vmatprep.subr.bf16.mxu0 %v3215
        %3247 = vmatpush1.bf16.msra.mxu0 %v3214
        %3248 = vmatprep.subr.bf16.mxu0 %v3217
        %3249 = vmatpush1.bf16.msra.mxu0 %v3216
        %3250 = vmatprep.subr.bf16.mxu0 %v3219
        %3251 = vmatpush1.bf16.msra.mxu0 %v3218
        %3252 = vmatprep.subr.bf16.mxu0 %v3221
        %3253 = vmatpush1.bf16.msra.mxu0 %v3220
        %3254 = vmatprep.subr.bf16.mxu0 %v3223
        %3255 = vmatpush1.bf16.msra.mxu0 %v3222
        %3256 = vmatprep.subr.bf16.mxu0 0
        %3257 = vmatpush1.bf16.msra.mxu0 0
        %3258 = vmatprep.subr.bf16.mxu0 0
        %3259 = vmatpush1.bf16.msra.mxu0 0
        %3260 = vmatprep.subr.bf16.mxu0 0
        %3261 = vmatpush1.bf16.msra.mxu0 0
        %3262 = vmatprep.subr.bf16.mxu0 0
        %3263 = vmatpush1.bf16.msra.mxu0 0
        %3264 = vmatprep.subr.bf16.mxu0 0
        %3265 = vmatpush1.bf16.msra.mxu0 0
        %3266 = vmatprep.subr.bf16.mxu0 0
        %3267 = vmatpush1.bf16.msra.mxu0 0
        %3268 = vmatprep.subr.bf16.mxu0 0
        %3269 = vmatpush1.bf16.msra.mxu0 0
        %3270 = vmatprep.subr.bf16.mxu0 0
        %3271 = vmatpush1.bf16.msra.mxu0 0
        %3272 = vmatprep.mubr.bf16.mxu0 0
        %3273 = vmatmul.mubr.bf16.gmra.mrb[0].mxu0 %v3035
        %v3274 = vpop.f32.mrb[0].mxu0
        %v3275 = vadd.f32 0.0, %v3274
        %v3276 = vpop.f32.mrb[0].mxu0
        %v3277 = vadd.f32 0.0, %v3276
        %v3278 = vpop.f32.mrb[0].mxu0
        %v3279 = vpop.f32.mrb[0].mxu0
        %3280 = vdwg.mxu0
        %v3297 = vunpack.c.l.b16 %v3127
        %v3298 = vunpack.c.h.b16 %v3127
        %v3299 = vunpack.c.l.b16 %v3128
        %v3300 = vunpack.c.h.b16 %v3128
        %v3301 = vunpack.c.l.b16 %v3129
        %v3302 = vunpack.c.h.b16 %v3129
        %v3303 = vunpack.c.l.b16 %v3130
        %v3304 = vunpack.c.h.b16 %v3130
        %v3305 = vunpack.c.l.b16 %v3131
        %v3306 = vunpack.c.h.b16 %v3131
        %v3307 = vunpack.c.l.b16 %v3132
        %v3308 = vunpack.c.h.b16 %v3132
        %v3309 = vunpack.c.l.b16 %v3133
        %v3310 = vunpack.c.h.b16 %v3133
        %v3311 = vunpack.c.l.b16 %v3134
        %v3312 = vunpack.c.h.b16 %v3134
        %v3313 = vunpack.c.l.b16 %v3135
        %v3314 = vunpack.c.h.b16 %v3135
        %v3315 = vunpack.c.l.b16 %v3136
        %v3316 = vunpack.c.h.b16 %v3136
        %v3317 = vunpack.c.l.b16 %v3137
        %v3318 = vunpack.c.h.b16 %v3137
        %v3319 = vunpack.c.l.b16 %v3138
        %v3320 = vunpack.c.h.b16 %v3138
        %v3321 = vunpack.c.l.b16 %v3139
        %v3322 = vunpack.c.h.b16 %v3139
        %v3323 = vunpack.c.l.b16 %v3140
        %v3324 = vunpack.c.h.b16 %v3140
        %v3325 = vunpack.c.l.b16 %v3141
        %v3326 = vunpack.c.h.b16 %v3141
        %v3327 = vunpack.c.l.b16 %v3142
        %v3328 = vunpack.c.h.b16 %v3142
        %v3329 = vpack.c.b16 %v3299, %v3297
        %v3330 = vpack.c.b16 %v3300, %v3298
        %v3331 = vpack.c.b16 %v3303, %v3301
        %v3332 = vpack.c.b16 %v3304, %v3302
        %v3333 = vpack.c.b16 %v3307, %v3305
        %v3334 = vpack.c.b16 %v3308, %v3306
        %v3335 = vpack.c.b16 %v3311, %v3309
        %v3336 = vpack.c.b16 %v3312, %v3310
        %v3337 = vpack.c.b16 %v3315, %v3313
        %v3338 = vpack.c.b16 %v3316, %v3314
        %v3339 = vpack.c.b16 %v3319, %v3317
        %v3340 = vpack.c.b16 %v3320, %v3318
        %v3341 = vpack.c.b16 %v3323, %v3321
        %v3342 = vpack.c.b16 %v3324, %v3322
        %v3343 = vpack.c.b16 %v3327, %v3325
        %v3344 = vpack.c.b16 %v3328, %v3326
        %3361 = vmatprep.subr.bf16.mxu0 %v3330
        %3362 = vmatpush1.bf16.msra.mxu0 %v3329
        %3363 = vmatprep.subr.bf16.mxu0 %v3332
        %3364 = vmatpush1.bf16.msra.mxu0 %v3331
        %3365 = vmatprep.subr.bf16.mxu0 %v3334
        %3366 = vmatpush1.bf16.msra.mxu0 %v3333
        %3367 = vmatprep.subr.bf16.mxu0 %v3336
        %3368 = vmatpush1.bf16.msra.mxu0 %v3335
        %3369 = vmatprep.subr.bf16.mxu0 %v3338
        %3370 = vmatpush1.bf16.msra.mxu0 %v3337
        %3371 = vmatprep.subr.bf16.mxu0 %v3340
        %3372 = vmatpush1.bf16.msra.mxu0 %v3339
        %3373 = vmatprep.subr.bf16.mxu0 %v3342
        %3374 = vmatpush1.bf16.msra.mxu0 %v3341
        %3375 = vmatprep.subr.bf16.mxu0 %v3344
        %3376 = vmatpush1.bf16.msra.mxu0 %v3343
        %3377 = vmatprep.subr.bf16.mxu0 0
        %3378 = vmatpush1.bf16.msra.mxu0 0
        %3379 = vmatprep.subr.bf16.mxu0 0
        %3380 = vmatpush1.bf16.msra.mxu0 0
        %3381 = vmatprep.subr.bf16.mxu0 0
        %3382 = vmatpush1.bf16.msra.mxu0 0
        %3383 = vmatprep.subr.bf16.mxu0 0
        %3384 = vmatpush1.bf16.msra.mxu0 0
        %3385 = vmatprep.subr.bf16.mxu0 0
        %3386 = vmatpush1.bf16.msra.mxu0 0
        %3387 = vmatprep.subr.bf16.mxu0 0
        %3388 = vmatpush1.bf16.msra.mxu0 0
        %3389 = vmatprep.subr.bf16.mxu0 0
        %3390 = vmatpush1.bf16.msra.mxu0 0
        %3391 = vmatprep.subr.bf16.mxu0 0
        %3392 = vmatpush1.bf16.msra.mxu0 0
        %3393 = vmatprep.mubr.bf16.mxu0 0
        %3394 = vmatmul.mubr.bf16.gmra.mrb[0].mxu0 %v2945
        %v3395 = vpop.f32.mrb[0].mxu0
        %v3396 = vadd.f32 %v3275, %v3395
        %v3397 = vpop.f32.mrb[0].mxu0
        %v3398 = vadd.f32 %v3277, %v3397
        %v3399 = vpop.f32.mrb[0].mxu0
        %v3400 = vpop.f32.mrb[0].mxu0
        %3401 = vdwg.mxu0
        %s3402 = scalar_lea.vmem %s2, 1024
        %v3403 = vld [vmem:[%s3402] sm:$0xff]
        %v3404 = vld [vmem:[%s3402 + $0x8] sm:$0xff]
        %v3405 = vld [vmem:[%s3402 + $0x10] sm:$0xff]
        %v3406 = vld [vmem:[%s3402 + $0x18] sm:$0xff]
        %v3407 = vld [vmem:[%s3402 + $0x20] sm:$0xff]
        %v3408 = vld [vmem:[%s3402 + $0x28] sm:$0xff]
        %v3409 = vld [vmem:[%s3402 + $0x30] sm:$0xff]
        %v3410 = vld [vmem:[%s3402 + $0x38] sm:$0xff]
        %v3411 = vld [vmem:[%s3402 + $0x40] sm:$0xff]
        %v3412 = vld [vmem:[%s3402 + $0x48] sm:$0xff]
        %v3413 = vld [vmem:[%s3402 + $0x50] sm:$0xff]
        %v3414 = vld [vmem:[%s3402 + $0x58] sm:$0xff]
        %v3415 = vld [vmem:[%s3402 + $0x60] sm:$0xff]
        %v3416 = vld [vmem:[%s3402 + $0x68] sm:$0xff]
        %v3417 = vld [vmem:[%s3402 + $0x70] sm:$0xff]
        %v3418 = vld [vmem:[%s3402 + $0x78] sm:$0xff]
        %v3435 = vunpack.c.l.b16 %v3403
        %v3436 = vunpack.c.h.b16 %v3403
        %v3437 = vunpack.c.l.b16 %v3404
        %v3438 = vunpack.c.h.b16 %v3404
        %v3439 = vunpack.c.l.b16 %v3405
        %v3440 = vunpack.c.h.b16 %v3405
        %v3441 = vunpack.c.l.b16 %v3406
        %v3442 = vunpack.c.h.b16 %v3406
        %v3443 = vunpack.c.l.b16 %v3407
        %v3444 = vunpack.c.h.b16 %v3407
        %v3445 = vunpack.c.l.b16 %v3408
        %v3446 = vunpack.c.h.b16 %v3408
        %v3447 = vunpack.c.l.b16 %v3409
        %v3448 = vunpack.c.h.b16 %v3409
        %v3449 = vunpack.c.l.b16 %v3410
        %v3450 = vunpack.c.h.b16 %v3410
        %v3451 = vunpack.c.l.b16 %v3411
        %v3452 = vunpack.c.h.b16 %v3411
        %v3453 = vunpack.c.l.b16 %v3412
        %v3454 = vunpack.c.h.b16 %v3412
        %v3455 = vunpack.c.l.b16 %v3413
        %v3456 = vunpack.c.h.b16 %v3413
        %v3457 = vunpack.c.l.b16 %v3414
        %v3458 = vunpack.c.h.b16 %v3414
        %v3459 = vunpack.c.l.b16 %v3415
        %v3460 = vunpack.c.h.b16 %v3415
        %v3461 = vunpack.c.l.b16 %v3416
        %v3462 = vunpack.c.h.b16 %v3416
        %v3463 = vunpack.c.l.b16 %v3417
        %v3464 = vunpack.c.h.b16 %v3417
        %v3465 = vunpack.c.l.b16 %v3418
        %v3466 = vunpack.c.h.b16 %v3418
        %v3467 = vpack.c.b16 %v3437, %v3435
        %v3468 = vpack.c.b16 %v3438, %v3436
        %v3469 = vpack.c.b16 %v3441, %v3439
        %v3470 = vpack.c.b16 %v3442, %v3440
        %v3471 = vpack.c.b16 %v3445, %v3443
        %v3472 = vpack.c.b16 %v3446, %v3444
        %v3473 = vpack.c.b16 %v3449, %v3447
        %v3474 = vpack.c.b16 %v3450, %v3448
        %v3475 = vpack.c.b16 %v3453, %v3451
        %v3476 = vpack.c.b16 %v3454, %v3452
        %v3477 = vpack.c.b16 %v3457, %v3455
        %v3478 = vpack.c.b16 %v3458, %v3456
        %v3479 = vpack.c.b16 %v3461, %v3459
        %v3480 = vpack.c.b16 %v3462, %v3460
        %v3481 = vpack.c.b16 %v3465, %v3463
        %v3482 = vpack.c.b16 %v3466, %v3464
        %3499 = vmatprep.subr.bf16.mxu0 %v3468
        %3500 = vmatpush1.bf16.msra.mxu0 %v3467
        %3501 = vmatprep.subr.bf16.mxu0 %v3470
        %3502 = vmatpush1.bf16.msra.mxu0 %v3469
        %3503 = vmatprep.subr.bf16.mxu0 %v3472
        %3504 = vmatpush1.bf16.msra.mxu0 %v3471
        %3505 = vmatprep.subr.bf16.mxu0 %v3474
        %3506 = vmatpush1.bf16.msra.mxu0 %v3473
        %3507 = vmatprep.subr.bf16.mxu0 %v3476
        %3508 = vmatpush1.bf16.msra.mxu0 %v3475
        %3509 = vmatprep.subr.bf16.mxu0 %v3478
        %3510 = vmatpush1.bf16.msra.mxu0 %v3477
        %3511 = vmatprep.subr.bf16.mxu0 %v3480
        %3512 = vmatpush1.bf16.msra.mxu0 %v3479
        %3513 = vmatprep.subr.bf16.mxu0 %v3482
        %3514 = vmatpush1.bf16.msra.mxu0 %v3481
        %3515 = vmatprep.subr.bf16.mxu0 0
        %3516 = vmatpush1.bf16.msra.mxu0 0
        %3517 = vmatprep.subr.bf16.mxu0 0
        %3518 = vmatpush1.bf16.msra.mxu0 0
        %3519 = vmatprep.subr.bf16.mxu0 0
        %3520 = vmatpush1.bf16.msra.mxu0 0
        %3521 = vmatprep.subr.bf16.mxu0 0
        %3522 = vmatpush1.bf16.msra.mxu0 0
        %3523 = vmatprep.subr.bf16.mxu0 0
        %3524 = vmatpush1.bf16.msra.mxu0 0
        %3525 = vmatprep.subr.bf16.mxu0 0
        %3526 = vmatpush1.bf16.msra.mxu0 0
        %3527 = vmatprep.subr.bf16.mxu0 0
        %3528 = vmatpush1.bf16.msra.mxu0 0
        %3529 = vmatprep.subr.bf16.mxu0 0
        %3530 = vmatpush1.bf16.msra.mxu0 0
        %3531 = vmatprep.mubr.bf16.mxu0 0
        %3532 = vmatmul.mubr.bf16.gmra.mrb[0].mxu0 %v3125
        %v3533 = vpop.f32.mrb[0].mxu0
        %v3534 = vadd.f32 0.0, %v3533
        %v3535 = vpop.f32.mrb[0].mxu0
        %v3536 = vadd.f32 0.0, %v3535
        %v3537 = vpop.f32.mrb[0].mxu0
        %v3538 = vpop.f32.mrb[0].mxu0
        %3539 = vdwg.mxu0
        %v3540 = vadd.f32 %v3396, %v3534
        %v3541 = vadd.f32 %v3398, %v3536
        %s3542 = scalar_lea.vmem %s3, 6
        %v3543 = vld [vmem:[%s3542] sm:$0x3]
        %v3545 = vlaneseq
        %v3546 = vshrl.u32 %v3545, 7
        %v3547 = vsub.s32 0, %v3546
        %v3548 = vrot.slane %v3543, %v3547
        %v3549 = vlaneseq
        %v3550 = vshrl.u32 %v3549, 7
        %v3551 = vsub.s32 1, %v3550
        %v3552 = vrot.slane %v3543, %v3551
        %v3555 = vadd.f32 %v3540, %v3548
        %v3556 = vadd.f32 %v3541, %v3552
        %v3557 = vmax.f32 %v3555, 0.0
        %v3558 = vmax.f32 %v3556, 0.0
        %v3559 = vmax.f32 %v3557, %v3558
        %v3560 = vpack.c.bf16 %v3559, %v3559
        %vm3561 = vcmask 64512
        %v3562 = vsel %vm3561, %v2855, 0
        %vm3564 = vcmask 1043456
        %v3566 = vsel %vm3564, %v3560, 0
        %3568 = vmatprep.subr.bf16.mxu0 0
        %3569 = vmatpush1.bf16.msra.mxu0 %v3566
        %3570 = vmatprep.subr.bf16.mxu0 0
        %3571 = vmatpush1.bf16.msra.mxu0 0
        %3572 = vmatprep.subr.bf16.mxu0 0
        %3573 = vmatpush1.bf16.msra.mxu0 0
        %3574 = vmatprep.subr.bf16.mxu0 0
        %3575 = vmatpush1.bf16.msra.mxu0 0
        %3576 = vmatprep.subr.bf16.mxu0 0
        %3577 = vmatpush1.bf16.msra.mxu0 0
        %3578 = vmatprep.subr.bf16.mxu0 0
        %3579 = vmatpush1.bf16.msra.mxu0 0
        %3580 = vmatprep.subr.bf16.mxu0 0
        %3581 = vmatpush1.bf16.msra.mxu0 0
        %3582 = vmatprep.subr.bf16.mxu0 0
        %3583 = vmatpush1.bf16.msra.mxu0 0
        %3584 = vmatprep.subr.bf16.mxu0 0
        %3585 = vmatpush1.bf16.msra.mxu0 0
        %3586 = vmatprep.subr.bf16.mxu0 0
        %3587 = vmatpush1.bf16.msra.mxu0 0
        %3588 = vmatprep.subr.bf16.mxu0 0
        %3589 = vmatpush1.bf16.msra.mxu0 0
        %3590 = vmatprep.subr.bf16.mxu0 0
        %3591 = vmatpush1.bf16.msra.mxu0 0
        %3592 = vmatprep.subr.bf16.mxu0 0
        %3593 = vmatpush1.bf16.msra.mxu0 0
        %3594 = vmatprep.subr.bf16.mxu0 0
        %3595 = vmatpush1.bf16.msra.mxu0 0
        %3596 = vmatprep.subr.bf16.mxu0 0
        %3597 = vmatpush1.bf16.msra.mxu0 0
        %3598 = vmatprep.subr.bf16.mxu0 0
        %3599 = vmatpush1.bf16.msra.mxu0 0
        %3600 = vmatprep.mubr.bf16.mxu0 0
        %3601 = vmatmul.mubr.bf16.gmra.mrb[0].mxu0 %v3562
        %v3602 = vpop.f32.mrb[0].mxu0
        %v3603 = vadd.f32 0.0, %v3602
        %v3604 = vpop.f32.mrb[0].mxu0
        %v3605 = vpop.f32.mrb[0].mxu0
        %v3606 = vpop.f32.mrb[0].mxu0
        %3607 = vdwg.mxu0
        %v3608 = vsel %vm3561, %v2900, 0
        %3610 = vmatprep.subr.bf16.mxu0 0
        %3611 = vmatpush1.bf16.msra.mxu0 %v3566
        %3612 = vmatprep.subr.bf16.mxu0 0
        %3613 = vmatpush1.bf16.msra.mxu0 0
        %3614 = vmatprep.subr.bf16.mxu0 0
        %3615 = vmatpush1.bf16.msra.mxu0 0
        %3616 = vmatprep.subr.bf16.mxu0 0
        %3617 = vmatpush1.bf16.msra.mxu0 0
        %3618 = vmatprep.subr.bf16.mxu0 0
        %3619 = vmatpush1.bf16.msra.mxu0 0
        %3620 = vmatprep.subr.bf16.mxu0 0
        %3621 = vmatpush1.bf16.msra.mxu0 0
        %3622 = vmatprep.subr.bf16.mxu0 0
        %3623 = vmatpush1.bf16.msra.mxu0 0
        %3624 = vmatprep.subr.bf16.mxu0 0
        %3625 = vmatpush1.bf16.msra.mxu0 0
        %3626 = vmatprep.subr.bf16.mxu0 0
        %3627 = vmatpush1.bf16.msra.mxu0 0
        %3628 = vmatprep.subr.bf16.mxu0 0
        %3629 = vmatpush1.bf16.msra.mxu0 0
        %3630 = vmatprep.subr.bf16.mxu0 0
        %3631 = vmatpush1.bf16.msra.mxu0 0
        %3632 = vmatprep.subr.bf16.mxu0 0
        %3633 = vmatpush1.bf16.msra.mxu0 0
        %3634 = vmatprep.subr.bf16.mxu0 0
        %3635 = vmatpush1.bf16.msra.mxu0 0
        %3636 = vmatprep.subr.bf16.mxu0 0
        %3637 = vmatpush1.bf16.msra.mxu0 0
        %3638 = vmatprep.subr.bf16.mxu0 0
        %3639 = vmatpush1.bf16.msra.mxu0 0
        %3640 = vmatprep.subr.bf16.mxu0 0
        %3641 = vmatpush1.bf16.msra.mxu0 0
        %3642 = vmatprep.mubr.bf16.mxu0 0
        %3643 = vmatmul.mubr.bf16.gmra.mrb[0].mxu0 %v3608
        %v3644 = vpop.f32.mrb[0].mxu0
        %v3645 = vadd.f32 0.0, %v3644
        %v3646 = vpop.f32.mrb[0].mxu0
        %v3647 = vpop.f32.mrb[0].mxu0
        %v3648 = vpop.f32.mrb[0].mxu0
        %3649 = vdwg.mxu0
        %v3650 = vmax.f32 %v3603, %v3645
        %v3651 = vpack.c.bf16 %v3650, %v3650
        %v3652 = vsel %vm3561, %v2946, 0
        %3654 = vmatprep.subr.bf16.mxu0 0
        %3655 = vmatpush1.bf16.msra.mxu0 %v3566
        %3656 = vmatprep.subr.bf16.mxu0 0
        %3657 = vmatpush1.bf16.msra.mxu0 0
        %3658 = vmatprep.subr.bf16.mxu0 0
        %3659 = vmatpush1.bf16.msra.mxu0 0
        %3660 = vmatprep.subr.bf16.mxu0 0
        %3661 = vmatpush1.bf16.msra.mxu0 0
        %3662 = vmatprep.subr.bf16.mxu0 0
        %3663 = vmatpush1.bf16.msra.mxu0 0
        %3664 = vmatprep.subr.bf16.mxu0 0
        %3665 = vmatpush1.bf16.msra.mxu0 0
        %3666 = vmatprep.subr.bf16.mxu0 0
        %3667 = vmatpush1.bf16.msra.mxu0 0
        %3668 = vmatprep.subr.bf16.mxu0 0
        %3669 = vmatpush1.bf16.msra.mxu0 0
        %3670 = vmatprep.subr.bf16.mxu0 0
        %3671 = vmatpush1.bf16.msra.mxu0 0
        %3672 = vmatprep.subr.bf16.mxu0 0
        %3673 = vmatpush1.bf16.msra.mxu0 0
        %3674 = vmatprep.subr.bf16.mxu0 0
        %3675 = vmatpush1.bf16.msra.mxu0 0
        %3676 = vmatprep.subr.bf16.mxu0 0
        %3677 = vmatpush1.bf16.msra.mxu0 0
        %3678 = vmatprep.subr.bf16.mxu0 0
        %3679 = vmatpush1.bf16.msra.mxu0 0
        %3680 = vmatprep.subr.bf16.mxu0 0
        %3681 = vmatpush1.bf16.msra.mxu0 0
        %3682 = vmatprep.subr.bf16.mxu0 0
        %3683 = vmatpush1.bf16.msra.mxu0 0
        %3684 = vmatprep.subr.bf16.mxu0 0
        %3685 = vmatpush1.bf16.msra.mxu0 0
        %3686 = vmatprep.mubr.bf16.mxu0 0
        %3687 = vmatmul.mubr.bf16.gmra.mrb[0].mxu0 %v3652
        %v3688 = vpop.f32.mrb[0].mxu0
        %v3689 = vadd.f32 0.0, %v3688
        %v3690 = vpop.f32.mrb[0].mxu0
        %v3691 = vpop.f32.mrb[0].mxu0
        %v3692 = vpop.f32.mrb[0].mxu0
        %3693 = vdwg.mxu0
        %v3694 = vsel %vm3561, %v2990, 0
        %3696 = vmatprep.subr.bf16.mxu0 0
        %3697 = vmatpush1.bf16.msra.mxu0 %v3566
        %3698 = vmatprep.subr.bf16.mxu0 0
        %3699 = vmatpush1.bf16.msra.mxu0 0
        %3700 = vmatprep.subr.bf16.mxu0 0
        %3701 = vmatpush1.bf16.msra.mxu0 0
        %3702 = vmatprep.subr.bf16.mxu0 0
        %3703 = vmatpush1.bf16.msra.mxu0 0
        %3704 = vmatprep.subr.bf16.mxu0 0
        %3705 = vmatpush1.bf16.msra.mxu0 0
        %3706 = vmatprep.subr.bf16.mxu0 0
        %3707 = vmatpush1.bf16.msra.mxu0 0
        %3708 = vmatprep.subr.bf16.mxu0 0
        %3709 = vmatpush1.bf16.msra.mxu0 0
        %3710 = vmatprep.subr.bf16.mxu0 0
        %3711 = vmatpush1.bf16.msra.mxu0 0
        %3712 = vmatprep.subr.bf16.mxu0 0
        %3713 = vmatpush1.bf16.msra.mxu0 0
        %3714 = vmatprep.subr.bf16.mxu0 0
        %3715 = vmatpush1.bf16.msra.mxu0 0
        %3716 = vmatprep.subr.bf16.mxu0 0
        %3717 = vmatpush1.bf16.msra.mxu0 0
        %3718 = vmatprep.subr.bf16.mxu0 0
        %3719 = vmatpush1.bf16.msra.mxu0 0
        %3720 = vmatprep.subr.bf16.mxu0 0
        %3721 = vmatpush1.bf16.msra.mxu0 0
        %3722 = vmatprep.subr.bf16.mxu0 0
        %3723 = vmatpush1.bf16.msra.mxu0 0
        %3724 = vmatprep.subr.bf16.mxu0 0
        %3725 = vmatpush1.bf16.msra.mxu0 0
        %3726 = vmatprep.subr.bf16.mxu0 0
        %3727 = vmatpush1.bf16.msra.mxu0 0
        %3728 = vmatprep.mubr.bf16.mxu0 0
        %3729 = vmatmul.mubr.bf16.gmra.mrb[0].mxu0 %v3694
        %v3730 = vpop.f32.mrb[0].mxu0
        %v3731 = vadd.f32 0.0, %v3730
        %v3732 = vpop.f32.mrb[0].mxu0
        %v3733 = vpop.f32.mrb[0].mxu0
        %v3734 = vpop.f32.mrb[0].mxu0
        %3735 = vdwg.mxu0
        %v3736 = vmax.f32 %v3689, %v3731
        %v3737 = vpack.c.bf16 %v3736, %v3736
        %v3738 = vsel %vm3561, %v3036, 0
        %3740 = vmatprep.subr.bf16.mxu0 0
        %3741 = vmatpush1.bf16.msra.mxu0 %v3566
        %3742 = vmatprep.subr.bf16.mxu0 0
        %3743 = vmatpush1.bf16.msra.mxu0 0
        %3744 = vmatprep.subr.bf16.mxu0 0
        %3745 = vmatpush1.bf16.msra.mxu0 0
        %3746 = vmatprep.subr.bf16.mxu0 0
        %3747 = vmatpush1.bf16.msra.mxu0 0
        %3748 = vmatprep.subr.bf16.mxu0 0
        %3749 = vmatpush1.bf16.msra.mxu0 0
        %3750 = vmatprep.subr.bf16.mxu0 0
        %3751 = vmatpush1.bf16.msra.mxu0 0
        %3752 = vmatprep.subr.bf16.mxu0 0
        %3753 = vmatpush1.bf16.msra.mxu0 0
        %3754 = vmatprep.subr.bf16.mxu0 0
        %3755 = vmatpush1.bf16.msra.mxu0 0
        %3756 = vmatprep.subr.bf16.mxu0 0
        %3757 = vmatpush1.bf16.msra.mxu0 0
        %3758 = vmatprep.subr.bf16.mxu0 0
        %3759 = vmatpush1.bf16.msra.mxu0 0
        %3760 = vmatprep.subr.bf16.mxu0 0
        %3761 = vmatpush1.bf16.msra.mxu0 0
        %3762 = vmatprep.subr.bf16.mxu0 0
        %3763 = vmatpush1.bf16.msra.mxu0 0
        %3764 = vmatprep.subr.bf16.mxu0 0
        %3765 = vmatpush1.bf16.msra.mxu0 0
        %3766 = vmatprep.subr.bf16.mxu0 0
        %3767 = vmatpush1.bf16.msra.mxu0 0
        %3768 = vmatprep.subr.bf16.mxu0 0
        %3769 = vmatpush1.bf16.msra.mxu0 0
        %3770 = vmatprep.subr.bf16.mxu0 0
        %3771 = vmatpush1.bf16.msra.mxu0 0
        %3772 = vmatprep.mubr.bf16.mxu0 0
        %3773 = vmatmul.mubr.bf16.gmra.mrb[0].mxu0 %v3738
        %v3774 = vpop.f32.mrb[0].mxu0
        %v3775 = vadd.f32 0.0, %v3774
        %v3776 = vpop.f32.mrb[0].mxu0
        %v3777 = vpop.f32.mrb[0].mxu0
        %v3778 = vpop.f32.mrb[0].mxu0
        %3779 = vdwg.mxu0
        %v3780 = vsel %vm3561, %v3080, 0
        %3782 = vmatprep.subr.bf16.mxu0 0
        %3783 = vmatpush1.bf16.msra.mxu0 %v3566
        %3784 = vmatprep.subr.bf16.mxu0 0
        %3785 = vmatpush1.bf16.msra.mxu0 0
        %3786 = vmatprep.subr.bf16.mxu0 0
        %3787 = vmatpush1.bf16.msra.mxu0 0
        %3788 = vmatprep.subr.bf16.mxu0 0
        %3789 = vmatpush1.bf16.msra.mxu0 0
        %3790 = vmatprep.subr.bf16.mxu0 0
        %3791 = vmatpush1.bf16.msra.mxu0 0
        %3792 = vmatprep.subr.bf16.mxu0 0
        %3793 = vmatpush1.bf16.msra.mxu0 0
        %3794 = vmatprep.subr.bf16.mxu0 0
        %3795 = vmatpush1.bf16.msra.mxu0 0
        %3796 = vmatprep.subr.bf16.mxu0 0
        %3797 = vmatpush1.bf16.msra.mxu0 0
        %3798 = vmatprep.subr.bf16.mxu0 0
        %3799 = vmatpush1.bf16.msra.mxu0 0
        %3800 = vmatprep.subr.bf16.mxu0 0
        %3801 = vmatpush1.bf16.msra.mxu0 0
        %3802 = vmatprep.subr.bf16.mxu0 0
        %3803 = vmatpush1.bf16.msra.mxu0 0
        %3804 = vmatprep.subr.bf16.mxu0 0
        %3805 = vmatpush1.bf16.msra.mxu0 0
        %3806 = vmatprep.subr.bf16.mxu0 0
        %3807 = vmatpush1.bf16.msra.mxu0 0
        %3808 = vmatprep.subr.bf16.mxu0 0
        %3809 = vmatpush1.bf16.msra.mxu0 0
        %3810 = vmatprep.subr.bf16.mxu0 0
        %3811 = vmatpush1.bf16.msra.mxu0 0
        %3812 = vmatprep.subr.bf16.mxu0 0
        %3813 = vmatpush1.bf16.msra.mxu0 0
        %3814 = vmatprep.mubr.bf16.mxu0 0
        %3815 = vmatmul.mubr.bf16.gmra.mrb[0].mxu0 %v3780
        %v3816 = vpop.f32.mrb[0].mxu0
        %v3817 = vadd.f32 0.0, %v3816
        %v3818 = vpop.f32.mrb[0].mxu0
        %v3819 = vpop.f32.mrb[0].mxu0
        %v3820 = vpop.f32.mrb[0].mxu0
        %3821 = vdwg.mxu0
        %v3822 = vmax.f32 %v3775, %v3817
        %v3823 = vpack.c.bf16 %v3822, %v3822
        %s3824 = scalar_lea.vmem %s2, 1152
        %v3825 = vld [vmem:[%s3824] sm:$0xff]
        %v3826 = vld [vmem:[%s3824 + $0x8] sm:$0xff]
        %v3827 = vld [vmem:[%s3824 + $0x10] sm:$0xff]
        %v3828 = vld [vmem:[%s3824 + $0x18] sm:$0xff]
        %v3829 = vld [vmem:[%s3824 + $0x20] sm:$0xff]
        %v3830 = vld [vmem:[%s3824 + $0x28] sm:$0xff]
        %v3831 = vld [vmem:[%s3824 + $0x30] sm:$0xff]
        %v3832 = vld [vmem:[%s3824 + $0x38] sm:$0xff]
        %v3833 = vld [vmem:[%s3824 + $0x40] sm:$0xff]
        %v3834 = vld [vmem:[%s3824 + $0x48] sm:$0xff]
        %v3835 = vld [vmem:[%s3824 + $0x50] sm:$0xff]
        %v3836 = vld [vmem:[%s3824 + $0x58] sm:$0xff]
        %v3837 = vld [vmem:[%s3824 + $0x60] sm:$0xff]
        %v3838 = vld [vmem:[%s3824 + $0x68] sm:$0xff]
        %v3839 = vld [vmem:[%s3824 + $0x70] sm:$0xff]
        %v3840 = vld [vmem:[%s3824 + $0x78] sm:$0xff]
        %s3841 = scalar_lea.vmem %s2, 1280
        %v3842 = vld [vmem:[%s3841] sm:$0xff]
        %v3843 = vld [vmem:[%s3841 + $0x8] sm:$0xff]
        %v3844 = vld [vmem:[%s3841 + $0x10] sm:$0xff]
        %v3845 = vld [vmem:[%s3841 + $0x18] sm:$0xff]
        %v3846 = vld [vmem:[%s3841 + $0x20] sm:$0xff]
        %v3847 = vld [vmem:[%s3841 + $0x28] sm:$0xff]
        %v3848 = vld [vmem:[%s3841 + $0x30] sm:$0xff]
        %v3849 = vld [vmem:[%s3841 + $0x38] sm:$0xff]
        %v3850 = vld [vmem:[%s3841 + $0x40] sm:$0xff]
        %v3851 = vld [vmem:[%s3841 + $0x48] sm:$0xff]
        %v3852 = vld [vmem:[%s3841 + $0x50] sm:$0xff]
        %v3853 = vld [vmem:[%s3841 + $0x58] sm:$0xff]
        %v3854 = vld [vmem:[%s3841 + $0x60] sm:$0xff]
        %v3855 = vld [vmem:[%s3841 + $0x68] sm:$0xff]
        %v3856 = vld [vmem:[%s3841 + $0x70] sm:$0xff]
        %v3857 = vld [vmem:[%s3841 + $0x78] sm:$0xff]
        %v3874 = vunpack.c.l.b16 %v3842
        %v3875 = vunpack.c.h.b16 %v3842
        %v3876 = vunpack.c.l.b16 %v3843
        %v3877 = vunpack.c.h.b16 %v3843
        %v3878 = vunpack.c.l.b16 %v3844
        %v3879 = vunpack.c.h.b16 %v3844
        %v3880 = vunpack.c.l.b16 %v3845
        %v3881 = vunpack.c.h.b16 %v3845
        %v3882 = vunpack.c.l.b16 %v3846
        %v3883 = vunpack.c.h.b16 %v3846
        %v3884 = vunpack.c.l.b16 %v3847
        %v3885 = vunpack.c.h.b16 %v3847
        %v3886 = vunpack.c.l.b16 %v3848
        %v3887 = vunpack.c.h.b16 %v3848
        %v3888 = vunpack.c.l.b16 %v3849
        %v3889 = vunpack.c.h.b16 %v3849
        %v3890 = vunpack.c.l.b16 %v3850
        %v3891 = vunpack.c.h.b16 %v3850
        %v3892 = vunpack.c.l.b16 %v3851
        %v3893 = vunpack.c.h.b16 %v3851
        %v3894 = vunpack.c.l.b16 %v3852
        %v3895 = vunpack.c.h.b16 %v3852
        %v3896 = vunpack.c.l.b16 %v3853
        %v3897 = vunpack.c.h.b16 %v3853
        %v3898 = vunpack.c.l.b16 %v3854
        %v3899 = vunpack.c.h.b16 %v3854
        %v3900 = vunpack.c.l.b16 %v3855
        %v3901 = vunpack.c.h.b16 %v3855
        %v3902 = vunpack.c.l.b16 %v3856
        %v3903 = vunpack.c.h.b16 %v3856
        %v3904 = vunpack.c.l.b16 %v3857
        %v3905 = vunpack.c.h.b16 %v3857
        %v3906 = vpack.c.b16 %v3876, %v3874
        %v3907 = vpack.c.b16 %v3877, %v3875
        %v3908 = vpack.c.b16 %v3880, %v3878
        %v3909 = vpack.c.b16 %v3881, %v3879
        %v3910 = vpack.c.b16 %v3884, %v3882
        %v3911 = vpack.c.b16 %v3885, %v3883
        %v3912 = vpack.c.b16 %v3888, %v3886
        %v3913 = vpack.c.b16 %v3889, %v3887
        %v3914 = vpack.c.b16 %v3892, %v3890
        %v3915 = vpack.c.b16 %v3893, %v3891
        %v3916 = vpack.c.b16 %v3896, %v3894
        %v3917 = vpack.c.b16 %v3897, %v3895
        %v3918 = vpack.c.b16 %v3900, %v3898
        %v3919 = vpack.c.b16 %v3901, %v3899
        %v3920 = vpack.c.b16 %v3904, %v3902
        %v3921 = vpack.c.b16 %v3905, %v3903
        %3938 = vmatprep.subr.bf16.mxu0 %v3907
        %3939 = vmatpush1.bf16.msra.mxu0 %v3906
        %3940 = vmatprep.subr.bf16.mxu0 %v3909
        %3941 = vmatpush1.bf16.msra.mxu0 %v3908
        %3942 = vmatprep.subr.bf16.mxu0 %v3911
        %3943 = vmatpush1.bf16.msra.mxu0 %v3910
        %3944 = vmatprep.subr.bf16.mxu0 %v3913
        %3945 = vmatpush1.bf16.msra.mxu0 %v3912
        %3946 = vmatprep.subr.bf16.mxu0 %v3915
        %3947 = vmatpush1.bf16.msra.mxu0 %v3914
        %3948 = vmatprep.subr.bf16.mxu0 %v3917
        %3949 = vmatpush1.bf16.msra.mxu0 %v3916
        %3950 = vmatprep.subr.bf16.mxu0 %v3919
        %3951 = vmatpush1.bf16.msra.mxu0 %v3918
        %3952 = vmatprep.subr.bf16.mxu0 %v3921
        %3953 = vmatpush1.bf16.msra.mxu0 %v3920
        %3954 = vmatprep.subr.bf16.mxu0 0
        %3955 = vmatpush1.bf16.msra.mxu0 0
        %3956 = vmatprep.subr.bf16.mxu0 0
        %3957 = vmatpush1.bf16.msra.mxu0 0
        %3958 = vmatprep.subr.bf16.mxu0 0
        %3959 = vmatpush1.bf16.msra.mxu0 0
        %3960 = vmatprep.subr.bf16.mxu0 0
        %3961 = vmatpush1.bf16.msra.mxu0 0
        %3962 = vmatprep.subr.bf16.mxu0 0
        %3963 = vmatpush1.bf16.msra.mxu0 0
        %3964 = vmatprep.subr.bf16.mxu0 0
        %3965 = vmatpush1.bf16.msra.mxu0 0
        %3966 = vmatprep.subr.bf16.mxu0 0
        %3967 = vmatpush1.bf16.msra.mxu0 0
        %3968 = vmatprep.subr.bf16.mxu0 0
        %3969 = vmatpush1.bf16.msra.mxu0 0
        %3970 = vmatprep.mubr.bf16.mxu0 0
        %3971 = vmatmul.mubr.bf16.gmra.mrb[0].mxu0 %v3737
        %v3972 = vpop.f32.mrb[0].mxu0
        %v3973 = vadd.f32 0.0, %v3972
        %v3974 = vpop.f32.mrb[0].mxu0
        %v3975 = vadd.f32 0.0, %v3974
        %v3976 = vpop.f32.mrb[0].mxu0
        %v3977 = vpop.f32.mrb[0].mxu0
        %3978 = vdwg.mxu0
        %v3995 = vunpack.c.l.b16 %v3825
        %v3996 = vunpack.c.h.b16 %v3825
        %v3997 = vunpack.c.l.b16 %v3826
        %v3998 = vunpack.c.h.b16 %v3826
        %v3999 = vunpack.c.l.b16 %v3827
        %v4000 = vunpack.c.h.b16 %v3827
        %v4001 = vunpack.c.l.b16 %v3828
        %v4002 = vunpack.c.h.b16 %v3828
        %v4003 = vunpack.c.l.b16 %v3829
        %v4004 = vunpack.c.h.b16 %v3829
        %v4005 = vunpack.c.l.b16 %v3830
        %v4006 = vunpack.c.h.b16 %v3830
        %v4007 = vunpack.c.l.b16 %v3831
        %v4008 = vunpack.c.h.b16 %v3831
        %v4009 = vunpack.c.l.b16 %v3832
        %v4010 = vunpack.c.h.b16 %v3832
        %v4011 = vunpack.c.l.b16 %v3833
        %v4012 = vunpack.c.h.b16 %v3833
        %v4013 = vunpack.c.l.b16 %v3834
        %v4014 = vunpack.c.h.b16 %v3834
        %v4015 = vunpack.c.l.b16 %v3835
        %v4016 = vunpack.c.h.b16 %v3835
        %v4017 = vunpack.c.l.b16 %v3836
        %v4018 = vunpack.c.h.b16 %v3836
        %v4019 = vunpack.c.l.b16 %v3837
        %v4020 = vunpack.c.h.b16 %v3837
        %v4021 = vunpack.c.l.b16 %v3838
        %v4022 = vunpack.c.h.b16 %v3838
        %v4023 = vunpack.c.l.b16 %v3839
        %v4024 = vunpack.c.h.b16 %v3839
        %v4025 = vunpack.c.l.b16 %v3840
        %v4026 = vunpack.c.h.b16 %v3840
        %v4027 = vpack.c.b16 %v3997, %v3995
        %v4028 = vpack.c.b16 %v3998, %v3996
        %v4029 = vpack.c.b16 %v4001, %v3999
        %v4030 = vpack.c.b16 %v4002, %v4000
        %v4031 = vpack.c.b16 %v4005, %v4003
        %v4032 = vpack.c.b16 %v4006, %v4004
        %v4033 = vpack.c.b16 %v4009, %v4007
        %v4034 = vpack.c.b16 %v4010, %v4008
        %v4035 = vpack.c.b16 %v4013, %v4011
        %v4036 = vpack.c.b16 %v4014, %v4012
        %v4037 = vpack.c.b16 %v4017, %v4015
        %v4038 = vpack.c.b16 %v4018, %v4016
        %v4039 = vpack.c.b16 %v4021, %v4019
        %v4040 = vpack.c.b16 %v4022, %v4020
        %v4041 = vpack.c.b16 %v4025, %v4023
        %v4042 = vpack.c.b16 %v4026, %v4024
        %4059 = vmatprep.subr.bf16.mxu0 %v4028
        %4060 = vmatpush1.bf16.msra.mxu0 %v4027
        %4061 = vmatprep.subr.bf16.mxu0 %v4030
        %4062 = vmatpush1.bf16.msra.mxu0 %v4029
        %4063 = vmatprep.subr.bf16.mxu0 %v4032
        %4064 = vmatpush1.bf16.msra.mxu0 %v4031
        %4065 = vmatprep.subr.bf16.mxu0 %v4034
        %4066 = vmatpush1.bf16.msra.mxu0 %v4033
        %4067 = vmatprep.subr.bf16.mxu0 %v4036
        %4068 = vmatpush1.bf16.msra.mxu0 %v4035
        %4069 = vmatprep.subr.bf16.mxu0 %v4038
        %4070 = vmatpush1.bf16.msra.mxu0 %v4037
        %4071 = vmatprep.subr.bf16.mxu0 %v4040
        %4072 = vmatpush1.bf16.msra.mxu0 %v4039
        %4073 = vmatprep.subr.bf16.mxu0 %v4042
        %4074 = vmatpush1.bf16.msra.mxu0 %v4041
        %4075 = vmatprep.subr.bf16.mxu0 0
        %4076 = vmatpush1.bf16.msra.mxu0 0
        %4077 = vmatprep.subr.bf16.mxu0 0
        %4078 = vmatpush1.bf16.msra.mxu0 0
        %4079 = vmatprep.subr.bf16.mxu0 0
        %4080 = vmatpush1.bf16.msra.mxu0 0
        %4081 = vmatprep.subr.bf16.mxu0 0
        %4082 = vmatpush1.bf16.msra.mxu0 0
        %4083 = vmatprep.subr.bf16.mxu0 0
        %4084 = vmatpush1.bf16.msra.mxu0 0
        %4085 = vmatprep.subr.bf16.mxu0 0
        %4086 = vmatpush1.bf16.msra.mxu0 0
        %4087 = vmatprep.subr.bf16.mxu0 0
        %4088 = vmatpush1.bf16.msra.mxu0 0
        %4089 = vmatprep.subr.bf16.mxu0 0
        %4090 = vmatpush1.bf16.msra.mxu0 0
        %4091 = vmatprep.mubr.bf16.mxu0 0
        %4092 = vmatmul.mubr.bf16.gmra.mrb[0].mxu0 %v3651
        %v4093 = vpop.f32.mrb[0].mxu0
        %v4094 = vadd.f32 %v3973, %v4093
        %v4095 = vpop.f32.mrb[0].mxu0
        %v4096 = vadd.f32 %v3975, %v4095
        %v4097 = vpop.f32.mrb[0].mxu0
        %v4098 = vpop.f32.mrb[0].mxu0
        %4099 = vdwg.mxu0
        %s4100 = scalar_lea.vmem %s2, 1408
        %v4101 = vld [vmem:[%s4100] sm:$0xff]
        %v4102 = vld [vmem:[%s4100 + $0x8] sm:$0xff]
        %v4103 = vld [vmem:[%s4100 + $0x10] sm:$0xff]
        %v4104 = vld [vmem:[%s4100 + $0x18] sm:$0xff]
        %v4105 = vld [vmem:[%s4100 + $0x20] sm:$0xff]
        %v4106 = vld [vmem:[%s4100 + $0x28] sm:$0xff]
        %v4107 = vld [vmem:[%s4100 + $0x30] sm:$0xff]
        %v4108 = vld [vmem:[%s4100 + $0x38] sm:$0xff]
        %v4109 = vld [vmem:[%s4100 + $0x40] sm:$0xff]
        %v4110 = vld [vmem:[%s4100 + $0x48] sm:$0xff]
        %v4111 = vld [vmem:[%s4100 + $0x50] sm:$0xff]
        %v4112 = vld [vmem:[%s4100 + $0x58] sm:$0xff]
        %v4113 = vld [vmem:[%s4100 + $0x60] sm:$0xff]
        %v4114 = vld [vmem:[%s4100 + $0x68] sm:$0xff]
        %v4115 = vld [vmem:[%s4100 + $0x70] sm:$0xff]
        %v4116 = vld [vmem:[%s4100 + $0x78] sm:$0xff]
        %v4133 = vunpack.c.l.b16 %v4101
        %v4134 = vunpack.c.h.b16 %v4101
        %v4135 = vunpack.c.l.b16 %v4102
        %v4136 = vunpack.c.h.b16 %v4102
        %v4137 = vunpack.c.l.b16 %v4103
        %v4138 = vunpack.c.h.b16 %v4103
        %v4139 = vunpack.c.l.b16 %v4104
        %v4140 = vunpack.c.h.b16 %v4104
        %v4141 = vunpack.c.l.b16 %v4105
        %v4142 = vunpack.c.h.b16 %v4105
        %v4143 = vunpack.c.l.b16 %v4106
        %v4144 = vunpack.c.h.b16 %v4106
        %v4145 = vunpack.c.l.b16 %v4107
        %v4146 = vunpack.c.h.b16 %v4107
        %v4147 = vunpack.c.l.b16 %v4108
        %v4148 = vunpack.c.h.b16 %v4108
        %v4149 = vunpack.c.l.b16 %v4109
        %v4150 = vunpack.c.h.b16 %v4109
        %v4151 = vunpack.c.l.b16 %v4110
        %v4152 = vunpack.c.h.b16 %v4110
        %v4153 = vunpack.c.l.b16 %v4111
        %v4154 = vunpack.c.h.b16 %v4111
        %v4155 = vunpack.c.l.b16 %v4112
        %v4156 = vunpack.c.h.b16 %v4112
        %v4157 = vunpack.c.l.b16 %v4113
        %v4158 = vunpack.c.h.b16 %v4113
        %v4159 = vunpack.c.l.b16 %v4114
        %v4160 = vunpack.c.h.b16 %v4114
        %v4161 = vunpack.c.l.b16 %v4115
        %v4162 = vunpack.c.h.b16 %v4115
        %v4163 = vunpack.c.l.b16 %v4116
        %v4164 = vunpack.c.h.b16 %v4116
        %v4165 = vpack.c.b16 %v4135, %v4133
        %v4166 = vpack.c.b16 %v4136, %v4134
        %v4167 = vpack.c.b16 %v4139, %v4137
        %v4168 = vpack.c.b16 %v4140, %v4138
        %v4169 = vpack.c.b16 %v4143, %v4141
        %v4170 = vpack.c.b16 %v4144, %v4142
        %v4171 = vpack.c.b16 %v4147, %v4145
        %v4172 = vpack.c.b16 %v4148, %v4146
        %v4173 = vpack.c.b16 %v4151, %v4149
        %v4174 = vpack.c.b16 %v4152, %v4150
        %v4175 = vpack.c.b16 %v4155, %v4153
        %v4176 = vpack.c.b16 %v4156, %v4154
        %v4177 = vpack.c.b16 %v4159, %v4157
        %v4178 = vpack.c.b16 %v4160, %v4158
        %v4179 = vpack.c.b16 %v4163, %v4161
        %v4180 = vpack.c.b16 %v4164, %v4162
        %4197 = vmatprep.subr.bf16.mxu0 %v4166
        %4198 = vmatpush1.bf16.msra.mxu0 %v4165
        %4199 = vmatprep.subr.bf16.mxu0 %v4168
        %4200 = vmatpush1.bf16.msra.mxu0 %v4167
        %4201 = vmatprep.subr.bf16.mxu0 %v4170
        %4202 = vmatpush1.bf16.msra.mxu0 %v4169
        %4203 = vmatprep.subr.bf16.mxu0 %v4172
        %4204 = vmatpush1.bf16.msra.mxu0 %v4171
        %4205 = vmatprep.subr.bf16.mxu0 %v4174
        %4206 = vmatpush1.bf16.msra.mxu0 %v4173
        %4207 = vmatprep.subr.bf16.mxu0 %v4176
        %4208 = vmatpush1.bf16.msra.mxu0 %v4175
        %4209 = vmatprep.subr.bf16.mxu0 %v4178
        %4210 = vmatpush1.bf16.msra.mxu0 %v4177
        %4211 = vmatprep.subr.bf16.mxu0 %v4180
        %4212 = vmatpush1.bf16.msra.mxu0 %v4179
        %4213 = vmatprep.subr.bf16.mxu0 0
        %4214 = vmatpush1.bf16.msra.mxu0 0
        %4215 = vmatprep.subr.bf16.mxu0 0
        %4216 = vmatpush1.bf16.msra.mxu0 0
        %4217 = vmatprep.subr.bf16.mxu0 0
        %4218 = vmatpush1.bf16.msra.mxu0 0
        %4219 = vmatprep.subr.bf16.mxu0 0
        %4220 = vmatpush1.bf16.msra.mxu0 0
        %4221 = vmatprep.subr.bf16.mxu0 0
        %4222 = vmatpush1.bf16.msra.mxu0 0
        %4223 = vmatprep.subr.bf16.mxu0 0
        %4224 = vmatpush1.bf16.msra.mxu0 0
        %4225 = vmatprep.subr.bf16.mxu0 0
        %4226 = vmatpush1.bf16.msra.mxu0 0
        %4227 = vmatprep.subr.bf16.mxu0 0
        %4228 = vmatpush1.bf16.msra.mxu0 0
        %4229 = vmatprep.mubr.bf16.mxu0 0
        %4230 = vmatmul.mubr.bf16.gmra.mrb[0].mxu0 %v3823
        %v4231 = vpop.f32.mrb[0].mxu0
        %v4232 = vadd.f32 0.0, %v4231
        %v4233 = vpop.f32.mrb[0].mxu0
        %v4234 = vadd.f32 0.0, %v4233
        %v4235 = vpop.f32.mrb[0].mxu0
        %v4236 = vpop.f32.mrb[0].mxu0
        %4237 = vdwg.mxu0
        %v4238 = vadd.f32 %v4094, %v4232
        %v4239 = vadd.f32 %v4096, %v4234
        %s4240 = scalar_lea.vmem %s3, 8
        %v4241 = vld [vmem:[%s4240] sm:$0x3]
        %v4243 = vlaneseq
        %v4244 = vshrl.u32 %v4243, 7
        %v4245 = vsub.s32 0, %v4244
        %v4246 = vrot.slane %v4241, %v4245
        %v4247 = vlaneseq
        %v4248 = vshrl.u32 %v4247, 7
        %v4249 = vsub.s32 1, %v4248
        %v4250 = vrot.slane %v4241, %v4249
        %v4253 = vadd.f32 %v4238, %v4246
        %v4254 = vadd.f32 %v4239, %v4250
        %v4255 = vmax.f32 %v4253, 0.0
        %v4256 = vmax.f32 %v4254, 0.0
        %v4257 = vmax.f32 %v4255, %v4256
        %v4258 = vpack.c.bf16 %v4257, %v4257
        %vm4259 = vcmp.eq.s32.totalorder %v1206, 0
        %v4260 = vsel %vm4259, 1.0, 0.0
        %v4261 = vpack.c.bf16 %v4260, %v4260
        %vm4262 = vcmask 31744
        %v4264 = vsel %vm4262, %v4261, 0
        %vm4266 = vcmask 1041408
        %v4268 = vsel %vm4266, %v4258, 0
        %4270 = vmatprep.subr.bf16.mxu0 0
        %4271 = vmatpush1.bf16.msra.mxu0 %v4268
        %4272 = vmatprep.subr.bf16.mxu0 0
        %4273 = vmatpush1.bf16.msra.mxu0 0
        %4274 = vmatprep.subr.bf16.mxu0 0
        %4275 = vmatpush1.bf16.msra.mxu0 0
        %4276 = vmatprep.subr.bf16.mxu0 0
        %4277 = vmatpush1.bf16.msra.mxu0 0
        %4278 = vmatprep.subr.bf16.mxu0 0
        %4279 = vmatpush1.bf16.msra.mxu0 0
        %4280 = vmatprep.subr.bf16.mxu0 0
        %4281 = vmatpush1.bf16.msra.mxu0 0
        %4282 = vmatprep.subr.bf16.mxu0 0
        %4283 = vmatpush1.bf16.msra.mxu0 0
        %4284 = vmatprep.subr.bf16.mxu0 0
        %4285 = vmatpush1.bf16.msra.mxu0 0
        %4286 = vmatprep.subr.bf16.mxu0 0
        %4287 = vmatpush1.bf16.msra.mxu0 0
        %4288 = vmatprep.subr.bf16.mxu0 0
        %4289 = vmatpush1.bf16.msra.mxu0 0
        %4290 = vmatprep.subr.bf16.mxu0 0
        %4291 = vmatpush1.bf16.msra.mxu0 0
        %4292 = vmatprep.subr.bf16.mxu0 0
        %4293 = vmatpush1.bf16.msra.mxu0 0
        %4294 = vmatprep.subr.bf16.mxu0 0
        %4295 = vmatpush1.bf16.msra.mxu0 0
        %4296 = vmatprep.subr.bf16.mxu0 0
        %4297 = vmatpush1.bf16.msra.mxu0 0
        %4298 = vmatprep.subr.bf16.mxu0 0
        %4299 = vmatpush1.bf16.msra.mxu0 0
        %4300 = vmatprep.subr.bf16.mxu0 0
        %4301 = vmatpush1.bf16.msra.mxu0 0
        %4302 = vmatprep.mubr.bf16.mxu0 0
        %4303 = vmatmul.mubr.bf16.gmra.mrb[0].mxu0 %v4264
        %v4304 = vpop.f32.mrb[0].mxu0
        %v4305 = vadd.f32 0.0, %v4304
        %v4306 = vpop.f32.mrb[0].mxu0
        %v4307 = vpop.f32.mrb[0].mxu0
        %v4308 = vpop.f32.mrb[0].mxu0
        %4309 = vdwg.mxu0
        %vm4310 = vcmp.eq.s32.totalorder %v1206, 1
        %v4311 = vsel %vm4310, 1.0, 0.0
        %v4312 = vpack.c.bf16 %v4311, %v4311
        %v4314 = vsel %vm4262, %v4312, 0
        %4316 = vmatprep.subr.bf16.mxu0 0
        %4317 = vmatpush1.bf16.msra.mxu0 %v4268
        %4318 = vmatprep.subr.bf16.mxu0 0
        %4319 = vmatpush1.bf16.msra.mxu0 0
        %4320 = vmatprep.subr.bf16.mxu0 0
        %4321 = vmatpush1.bf16.msra.mxu0 0
        %4322 = vmatprep.subr.bf16.mxu0 0
        %4323 = vmatpush1.bf16.msra.mxu0 0
        %4324 = vmatprep.subr.bf16.mxu0 0
        %4325 = vmatpush1.bf16.msra.mxu0 0
        %4326 = vmatprep.subr.bf16.mxu0 0
        %4327 = vmatpush1.bf16.msra.mxu0 0
        %4328 = vmatprep.subr.bf16.mxu0 0
        %4329 = vmatpush1.bf16.msra.mxu0 0
        %4330 = vmatprep.subr.bf16.mxu0 0
        %4331 = vmatpush1.bf16.msra.mxu0 0
        %4332 = vmatprep.subr.bf16.mxu0 0
        %4333 = vmatpush1.bf16.msra.mxu0 0
        %4334 = vmatprep.subr.bf16.mxu0 0
        %4335 = vmatpush1.bf16.msra.mxu0 0
        %4336 = vmatprep.subr.bf16.mxu0 0
        %4337 = vmatpush1.bf16.msra.mxu0 0
        %4338 = vmatprep.subr.bf16.mxu0 0
        %4339 = vmatpush1.bf16.msra.mxu0 0
        %4340 = vmatprep.subr.bf16.mxu0 0
        %4341 = vmatpush1.bf16.msra.mxu0 0
        %4342 = vmatprep.subr.bf16.mxu0 0
        %4343 = vmatpush1.bf16.msra.mxu0 0
        %4344 = vmatprep.subr.bf16.mxu0 0
        %4345 = vmatpush1.bf16.msra.mxu0 0
        %4346 = vmatprep.subr.bf16.mxu0 0
        %4347 = vmatpush1.bf16.msra.mxu0 0
        %4348 = vmatprep.mubr.bf16.mxu0 0
        %4349 = vmatmul.mubr.bf16.gmra.mrb[0].mxu0 %v4314
        %v4350 = vpop.f32.mrb[0].mxu0
        %v4351 = vadd.f32 0.0, %v4350
        %v4352 = vpop.f32.mrb[0].mxu0
        %v4353 = vpop.f32.mrb[0].mxu0
        %v4354 = vpop.f32.mrb[0].mxu0
        %4355 = vdwg.mxu0
        %v4356 = vmax.f32 %v4305, %v4351
        %v4357 = vpack.c.bf16 %v4356, %v4356
        %vm4358 = vcmp.eq.s32.totalorder %v1206, 2
        %v4359 = vsel %vm4358, 1.0, 0.0
        %v4360 = vpack.c.bf16 %v4359, %v4359
        %v4362 = vsel %vm4262, %v4360, 0
        %4364 = vmatprep.subr.bf16.mxu0 0
        %4365 = vmatpush1.bf16.msra.mxu0 %v4268
        %4366 = vmatprep.subr.bf16.mxu0 0
        %4367 = vmatpush1.bf16.msra.mxu0 0
        %4368 = vmatprep.subr.bf16.mxu0 0
        %4369 = vmatpush1.bf16.msra.mxu0 0
        %4370 = vmatprep.subr.bf16.mxu0 0
        %4371 = vmatpush1.bf16.msra.mxu0 0
        %4372 = vmatprep.subr.bf16.mxu0 0
        %4373 = vmatpush1.bf16.msra.mxu0 0
        %4374 = vmatprep.subr.bf16.mxu0 0
        %4375 = vmatpush1.bf16.msra.mxu0 0
        %4376 = vmatprep.subr.bf16.mxu0 0
        %4377 = vmatpush1.bf16.msra.mxu0 0
        %4378 = vmatprep.subr.bf16.mxu0 0
        %4379 = vmatpush1.bf16.msra.mxu0 0
        %4380 = vmatprep.subr.bf16.mxu0 0
        %4381 = vmatpush1.bf16.msra.mxu0 0
        %4382 = vmatprep.subr.bf16.mxu0 0
        %4383 = vmatpush1.bf16.msra.mxu0 0
        %4384 = vmatprep.subr.bf16.mxu0 0
        %4385 = vmatpush1.bf16.msra.mxu0 0
        %4386 = vmatprep.subr.bf16.mxu0 0
        %4387 = vmatpush1.bf16.msra.mxu0 0
        %4388 = vmatprep.subr.bf16.mxu0 0
        %4389 = vmatpush1.bf16.msra.mxu0 0
        %4390 = vmatprep.subr.bf16.mxu0 0
        %4391 = vmatpush1.bf16.msra.mxu0 0
        %4392 = vmatprep.subr.bf16.mxu0 0
        %4393 = vmatpush1.bf16.msra.mxu0 0
        %4394 = vmatprep.subr.bf16.mxu0 0
        %4395 = vmatpush1.bf16.msra.mxu0 0
        %4396 = vmatprep.mubr.bf16.mxu0 0
        %4397 = vmatmul.mubr.bf16.gmra.mrb[0].mxu0 %v4362
        %v4398 = vpop.f32.mrb[0].mxu0
        %v4399 = vadd.f32 0.0, %v4398
        %v4400 = vpop.f32.mrb[0].mxu0
        %v4401 = vpop.f32.mrb[0].mxu0
        %v4402 = vpop.f32.mrb[0].mxu0
        %4403 = vdwg.mxu0
        %vm4404 = vcmp.eq.s32.totalorder %v1206, 3
        %v4405 = vsel %vm4404, 1.0, 0.0
        %v4406 = vpack.c.bf16 %v4405, %v4405
        %v4408 = vsel %vm4262, %v4406, 0
        %4410 = vmatprep.subr.bf16.mxu0 0
        %4411 = vmatpush1.bf16.msra.mxu0 %v4268
        %4412 = vmatprep.subr.bf16.mxu0 0
        %4413 = vmatpush1.bf16.msra.mxu0 0
        %4414 = vmatprep.subr.bf16.mxu0 0
        %4415 = vmatpush1.bf16.msra.mxu0 0
        %4416 = vmatprep.subr.bf16.mxu0 0
        %4417 = vmatpush1.bf16.msra.mxu0 0
        %4418 = vmatprep.subr.bf16.mxu0 0
        %4419 = vmatpush1.bf16.msra.mxu0 0
        %4420 = vmatprep.subr.bf16.mxu0 0
        %4421 = vmatpush1.bf16.msra.mxu0 0
        %4422 = vmatprep.subr.bf16.mxu0 0
        %4423 = vmatpush1.bf16.msra.mxu0 0
        %4424 = vmatprep.subr.bf16.mxu0 0
        %4425 = vmatpush1.bf16.msra.mxu0 0
        %4426 = vmatprep.subr.bf16.mxu0 0
        %4427 = vmatpush1.bf16.msra.mxu0 0
        %4428 = vmatprep.subr.bf16.mxu0 0
        %4429 = vmatpush1.bf16.msra.mxu0 0
        %4430 = vmatprep.subr.bf16.mxu0 0
        %4431 = vmatpush1.bf16.msra.mxu0 0
        %4432 = vmatprep.subr.bf16.mxu0 0
        %4433 = vmatpush1.bf16.msra.mxu0 0
        %4434 = vmatprep.subr.bf16.mxu0 0
        %4435 = vmatpush1.bf16.msra.mxu0 0
        %4436 = vmatprep.subr.bf16.mxu0 0
        %4437 = vmatpush1.bf16.msra.mxu0 0
        %4438 = vmatprep.subr.bf16.mxu0 0
        %4439 = vmatpush1.bf16.msra.mxu0 0
        %4440 = vmatprep.subr.bf16.mxu0 0
        %4441 = vmatpush1.bf16.msra.mxu0 0
        %4442 = vmatprep.mubr.bf16.mxu0 0
        %4443 = vmatmul.mubr.bf16.gmra.mrb[0].mxu0 %v4408
        %v4444 = vpop.f32.mrb[0].mxu0
        %v4445 = vadd.f32 0.0, %v4444
        %v4446 = vpop.f32.mrb[0].mxu0
        %v4447 = vpop.f32.mrb[0].mxu0
        %v4448 = vpop.f32.mrb[0].mxu0
        %4449 = vdwg.mxu0
        %v4450 = vmax.f32 %v4399, %v4445
        %v4451 = vpack.c.bf16 %v4450, %v4450
        %v4452 = vld [vmem:[%s5] sm:$0x1]
        %v4453 = vld [vmem:[%s4] sm:$0xf]
        %v4454 = vld [vmem:[%s4 + $0x4] sm:$0xf]
        %v4455 = vld [vmem:[%s4 + $0x8] sm:$0xf]
        %v4456 = vld [vmem:[%s4 + $0xc] sm:$0xf]
        %v4457 = vld [vmem:[%s4 + $0x10] sm:$0xf]
        %v4458 = vld [vmem:[%s4 + $0x14] sm:$0xf]
        %v4459 = vld [vmem:[%s4 + $0x18] sm:$0xf]
        %v4460 = vld [vmem:[%s4 + $0x1c] sm:$0xf]
        %v4461 = vld [vmem:[%s4 + $0x20] sm:$0xf]
        %v4462 = vld [vmem:[%s4 + $0x24] sm:$0xf]
        %v4463 = vld [vmem:[%s4 + $0x28] sm:$0xf]
        %v4464 = vld [vmem:[%s4 + $0x2c] sm:$0xf]
        %v4465 = vld [vmem:[%s4 + $0x30] sm:$0xf]
        %v4466 = vld [vmem:[%s4 + $0x34] sm:$0xf]
        %v4467 = vld [vmem:[%s4 + $0x38] sm:$0xf]
        %v4468 = vld [vmem:[%s4 + $0x3c] sm:$0xf]
        %v4485 = vunpack.c.l.b16 %v4453
        %v4486 = vunpack.c.l.b16 %v4454
        %v4487 = vunpack.c.l.b16 %v4455
        %v4488 = vunpack.c.l.b16 %v4456
        %v4489 = vunpack.c.l.b16 %v4457
        %v4490 = vunpack.c.l.b16 %v4458
        %v4491 = vunpack.c.l.b16 %v4459
        %v4492 = vunpack.c.l.b16 %v4460
        %v4493 = vunpack.c.l.b16 %v4461
        %v4494 = vunpack.c.l.b16 %v4462
        %v4495 = vunpack.c.l.b16 %v4463
        %v4496 = vunpack.c.l.b16 %v4464
        %v4497 = vunpack.c.l.b16 %v4465
        %v4498 = vunpack.c.l.b16 %v4466
        %v4499 = vunpack.c.l.b16 %v4467
        %v4500 = vunpack.c.l.b16 %v4468
        %v4501 = vpack.c.b16 %v4486, %v4485
        %v4502 = vpack.c.b16 %v4488, %v4487
        %v4503 = vpack.c.b16 %v4490, %v4489
        %v4504 = vpack.c.b16 %v4492, %v4491
        %v4505 = vpack.c.b16 %v4494, %v4493
        %v4506 = vpack.c.b16 %v4496, %v4495
        %v4507 = vpack.c.b16 %v4498, %v4497
        %v4508 = vpack.c.b16 %v4500, %v4499
        %4517 = vmatprep.subr.bf16.mxu0 0
        %4518 = vmatpush1.bf16.msra.mxu0 %v4501
        %4519 = vmatprep.subr.bf16.mxu0 0
        %4520 = vmatpush1.bf16.msra.mxu0 %v4502
        %4521 = vmatprep.subr.bf16.mxu0 0
        %4522 = vmatpush1.bf16.msra.mxu0 %v4503
        %4523 = vmatprep.subr.bf16.mxu0 0
        %4524 = vmatpush1.bf16.msra.mxu0 %v4504
        %4525 = vmatprep.subr.bf16.mxu0 0
        %4526 = vmatpush1.bf16.msra.mxu0 %v4505
        %4527 = vmatprep.subr.bf16.mxu0 0
        %4528 = vmatpush1.bf16.msra.mxu0 %v4506
        %4529 = vmatprep.subr.bf16.mxu0 0
        %4530 = vmatpush1.bf16.msra.mxu0 %v4507
        %4531 = vmatprep.subr.bf16.mxu0 0
        %4532 = vmatpush1.bf16.msra.mxu0 %v4508
        %4533 = vmatprep.subr.bf16.mxu0 0
        %4534 = vmatpush1.bf16.msra.mxu0 0
        %4535 = vmatprep.subr.bf16.mxu0 0
        %4536 = vmatpush1.bf16.msra.mxu0 0
        %4537 = vmatprep.subr.bf16.mxu0 0
        %4538 = vmatpush1.bf16.msra.mxu0 0
        %4539 = vmatprep.subr.bf16.mxu0 0
        %4540 = vmatpush1.bf16.msra.mxu0 0
        %4541 = vmatprep.subr.bf16.mxu0 0
        %4542 = vmatpush1.bf16.msra.mxu0 0
        %4543 = vmatprep.subr.bf16.mxu0 0
        %4544 = vmatpush1.bf16.msra.mxu0 0
        %4545 = vmatprep.subr.bf16.mxu0 0
        %4546 = vmatpush1.bf16.msra.mxu0 0
        %4547 = vmatprep.subr.bf16.mxu0 0
        %4548 = vmatpush1.bf16.msra.mxu0 0
        %4549 = vmatprep.mubr.bf16.mxu0 0
        %4550 = vmatmul.mubr.bf16.gmra.mrb[0].mxu0 %v4357
        %v4551 = vpop.f32.mrb[0].mxu0
        %v4552 = vadd.f32 0.0, %v4551
        %v4553 = vpop.f32.mrb[0].mxu0
        %v4554 = vpop.f32.mrb[0].mxu0
        %v4555 = vpop.f32.mrb[0].mxu0
        %4556 = vdwg.mxu0
        %v4557 = vadd.f32 %v4452, %v4552
        %s4558 = scalar_lea.vmem %s4, 64
        %v4559 = vld [vmem:[%s4558] sm:$0xf]
        %v4560 = vld [vmem:[%s4558 + $0x4] sm:$0xf]
        %v4561 = vld [vmem:[%s4558 + $0x8] sm:$0xf]
        %v4562 = vld [vmem:[%s4558 + $0xc] sm:$0xf]
        %v4563 = vld [vmem:[%s4558 + $0x10] sm:$0xf]
        %v4564 = vld [vmem:[%s4558 + $0x14] sm:$0xf]
        %v4565 = vld [vmem:[%s4558 + $0x18] sm:$0xf]
        %v4566 = vld [vmem:[%s4558 + $0x1c] sm:$0xf]
        %v4567 = vld [vmem:[%s4558 + $0x20] sm:$0xf]
        %v4568 = vld [vmem:[%s4558 + $0x24] sm:$0xf]
        %v4569 = vld [vmem:[%s4558 + $0x28] sm:$0xf]
        %v4570 = vld [vmem:[%s4558 + $0x2c] sm:$0xf]
        %v4571 = vld [vmem:[%s4558 + $0x30] sm:$0xf]
        %v4572 = vld [vmem:[%s4558 + $0x34] sm:$0xf]
        %v4573 = vld [vmem:[%s4558 + $0x38] sm:$0xf]
        %v4574 = vld [vmem:[%s4558 + $0x3c] sm:$0xf]
        %v4591 = vunpack.c.l.b16 %v4559
        %v4592 = vunpack.c.l.b16 %v4560
        %v4593 = vunpack.c.l.b16 %v4561
        %v4594 = vunpack.c.l.b16 %v4562
        %v4595 = vunpack.c.l.b16 %v4563
        %v4596 = vunpack.c.l.b16 %v4564
        %v4597 = vunpack.c.l.b16 %v4565
        %v4598 = vunpack.c.l.b16 %v4566
        %v4599 = vunpack.c.l.b16 %v4567
        %v4600 = vunpack.c.l.b16 %v4568
        %v4601 = vunpack.c.l.b16 %v4569
        %v4602 = vunpack.c.l.b16 %v4570
        %v4603 = vunpack.c.l.b16 %v4571
        %v4604 = vunpack.c.l.b16 %v4572
        %v4605 = vunpack.c.l.b16 %v4573
        %v4606 = vunpack.c.l.b16 %v4574
        %v4607 = vpack.c.b16 %v4592, %v4591
        %v4608 = vpack.c.b16 %v4594, %v4593
        %v4609 = vpack.c.b16 %v4596, %v4595
        %v4610 = vpack.c.b16 %v4598, %v4597
        %v4611 = vpack.c.b16 %v4600, %v4599
        %v4612 = vpack.c.b16 %v4602, %v4601
        %v4613 = vpack.c.b16 %v4604, %v4603
        %v4614 = vpack.c.b16 %v4606, %v4605
        %4623 = vmatprep.subr.bf16.mxu0 0
        %4624 = vmatpush1.bf16.msra.mxu0 %v4607
        %4625 = vmatprep.subr.bf16.mxu0 0
        %4626 = vmatpush1.bf16.msra.mxu0 %v4608
        %4627 = vmatprep.subr.bf16.mxu0 0
        %4628 = vmatpush1.bf16.msra.mxu0 %v4609
        %4629 = vmatprep.subr.bf16.mxu0 0
        %4630 = vmatpush1.bf16.msra.mxu0 %v4610
        %4631 = vmatprep.subr.bf16.mxu0 0
        %4632 = vmatpush1.bf16.msra.mxu0 %v4611
        %4633 = vmatprep.subr.bf16.mxu0 0
        %4634 = vmatpush1.bf16.msra.mxu0 %v4612
        %4635 = vmatprep.subr.bf16.mxu0 0
        %4636 = vmatpush1.bf16.msra.mxu0 %v4613
        %4637 = vmatprep.subr.bf16.mxu0 0
        %4638 = vmatpush1.bf16.msra.mxu0 %v4614
        %4639 = vmatprep.subr.bf16.mxu0 0
        %4640 = vmatpush1.bf16.msra.mxu0 0
        %4641 = vmatprep.subr.bf16.mxu0 0
        %4642 = vmatpush1.bf16.msra.mxu0 0
        %4643 = vmatprep.subr.bf16.mxu0 0
        %4644 = vmatpush1.bf16.msra.mxu0 0
        %4645 = vmatprep.subr.bf16.mxu0 0
        %4646 = vmatpush1.bf16.msra.mxu0 0
        %4647 = vmatprep.subr.bf16.mxu0 0
        %4648 = vmatpush1.bf16.msra.mxu0 0
        %4649 = vmatprep.subr.bf16.mxu0 0
        %4650 = vmatpush1.bf16.msra.mxu0 0
        %4651 = vmatprep.subr.bf16.mxu0 0
        %4652 = vmatpush1.bf16.msra.mxu0 0
        %4653 = vmatprep.subr.bf16.mxu0 0
        %4654 = vmatpush1.bf16.msra.mxu0 0
        %4655 = vmatprep.mubr.bf16.mxu0 0
        %4656 = vmatmul.mubr.bf16.gmra.mrb[0].mxu0 %v4451
        %v4657 = vpop.f32.mrb[0].mxu0
        %v4658 = vadd.f32 0.0, %v4657
        %v4659 = vpop.f32.mrb[0].mxu0
        %v4660 = vpop.f32.mrb[0].mxu0
        %v4661 = vpop.f32.mrb[0].mxu0
        %4662 = vdwg.mxu0
        %v4663 = vadd.f32 %v4557, %v4658
        %v4664 = vmax.f32 %v4663, 0.0
        %v4665 = vld [vmem:[%s6] sm:$0xff]
        %v4666 = vld [vmem:[%s6 + $0x8] sm:$0xff]
        %v4667 = vld [vmem:[%s6 + $0x10] sm:$0xff]
        %v4668 = vld [vmem:[%s6 + $0x18] sm:$0xff]
        %v4669 = vld [vmem:[%s7] sm:$0x1]
        %v4671 = vsel %vm2139, %v4664, 0
        %4673 = vmatprep.subr.mxu0 0.0
        %4674 = vmatpush1.msra.mxu0 %v4665
        %4675 = vmatprep.subr.mxu0 0.0
        %4676 = vmatpush1.msra.mxu0 %v4666
        %4677 = vmatprep.subr.mxu0 0.0
        %4678 = vmatpush1.msra.mxu0 %v4667
        %4679 = vmatprep.subr.mxu0 0.0
        %4680 = vmatpush1.msra.mxu0 %v4668
        %4681 = vmatprep.subr.mxu0 0.0
        %4682 = vmatpush1.msra.mxu0 0.0
        %4683 = vmatprep.subr.mxu0 0.0
        %4684 = vmatpush1.msra.mxu0 0.0
        %4685 = vmatprep.subr.mxu0 0.0
        %4686 = vmatpush1.msra.mxu0 0.0
        %4687 = vmatprep.subr.mxu0 0.0
        %4688 = vmatpush1.msra.mxu0 0.0
        %4689 = vmatprep.subr.mxu0 0.0
        %4690 = vmatpush1.msra.mxu0 0.0
        %4691 = vmatprep.subr.mxu0 0.0
        %4692 = vmatpush1.msra.mxu0 0.0
        %4693 = vmatprep.subr.mxu0 0.0
        %4694 = vmatpush1.msra.mxu0 0.0
        %4695 = vmatprep.subr.mxu0 0.0
        %4696 = vmatpush1.msra.mxu0 0.0
        %4697 = vmatprep.subr.mxu0 0.0
        %4698 = vmatpush1.msra.mxu0 0.0
        %4699 = vmatprep.subr.mxu0 0.0
        %4700 = vmatpush1.msra.mxu0 0.0
        %4701 = vmatprep.subr.mxu0 0.0
        %4702 = vmatpush1.msra.mxu0 0.0
        %4703 = vmatprep.subr.mxu0 0.0
        %4704 = vmatpush1.msra.mxu0 0.0
        %4705 = vmatprep.subr.mxu0 0.0
        %4706 = vmatpush1.msra.mxu0 0.0
        %4707 = vmatprep.subr.mxu0 0.0
        %4708 = vmatpush1.msra.mxu0 0.0
        %4709 = vmatprep.subr.mxu0 0.0
        %4710 = vmatpush1.msra.mxu0 0.0
        %4711 = vmatprep.subr.mxu0 0.0
        %4712 = vmatpush1.msra.mxu0 0.0
        %4713 = vmatprep.subr.mxu0 0.0
        %4714 = vmatpush1.msra.mxu0 0.0
        %4715 = vmatprep.subr.mxu0 0.0
        %4716 = vmatpush1.msra.mxu0 0.0
        %4717 = vmatprep.subr.mxu0 0.0
        %4718 = vmatpush1.msra.mxu0 0.0
        %4719 = vmatprep.subr.mxu0 0.0
        %4720 = vmatpush1.msra.mxu0 0.0
        %4721 = vmatprep.subr.mxu0 0.0
        %4722 = vmatpush1.msra.mxu0 0.0
        %4723 = vmatprep.subr.mxu0 0.0
        %4724 = vmatpush1.msra.mxu0 0.0
        %4725 = vmatprep.subr.mxu0 0.0
        %4726 = vmatpush1.msra.mxu0 0.0
        %4727 = vmatprep.subr.mxu0 0.0
        %4728 = vmatpush1.msra.mxu0 0.0
        %4729 = vmatprep.subr.mxu0 0.0
        %4730 = vmatpush1.msra.mxu0 0.0
        %4731 = vmatprep.subr.mxu0 0.0
        %4732 = vmatpush1.msra.mxu0 0.0
        %4733 = vmatprep.subr.mxu0 0.0
        %4734 = vmatpush1.msra.mxu0 0.0
        %4735 = vmatprep.subr.mxu0 0.0
        %4736 = vmatpush1.msra.mxu0 0.0
        %4737 = vmatprep.mubr.f32.mxu0 0.0
        %4738 = vmatmul.mubr.f32.gmra.mrb[0].mxu0 %v4671
        %v4739 = vpop.f32.mrb[0].mxu0
        %v4740 = vadd.f32 %v4669, %v4739
        %v4741 = vpop.f32.mrb[0].mxu0
        %4742 = vdwg.mxu0
        %vm4743 = vcmask 73728
        %4744 = vst.msk [vmem:[%s297] sm:$0x1] %vm4743, %v4740
        %s4745 = sand.u32 %s203, 1
        %s4746 = scalar_lea.sflag [#allocation3], %s4745
        %s4747 = sand.u32 %s203, 1
        %s4748 = scalar_lea.vmem [#allocation2], %s4747
        // Predicated region
        $region53: #{cnn_forward.1} parent=51 // pred_check
          %p4749 = pneg %p213
        $region54: #{cnn_forward.1} parent=51 // pred_check_branch
          %4751 = sbr.rel (%p4749) target = $region56
        $region55: #{cnn_forward.1} parent=51 // pred_region
          %s4753 = ssub.s32 16, 16
          %4754 = vsyncadd %s4746, %s4753
          %s4755 = smul.addr %s22, 16
          %s4756 = scalar_lea.hbm %s8, %s4755
          %s4758 = sshll.u32 %s4748, 4
          %s4759 = int_to_ptr.vmem [resolvable:$true] %s4758
          %4761 = dma.vmem_to_hbm [thread:$0]  %s4759, 16, %s4756, %s4746
        $region56: #{cnn_forward.1} parent=51 // pred_fallthru
          _
      $region52: #{cnn_forward.1} parent=5 // pred_fallthru
        _
      %p4762 = scmp.le.s32.totalorder 2, %s17
      // Predicated region
      $region57: #{cnn_forward.1} parent=5 // pred_check
        %p4763 = pneg %p4762
      $region58: #{cnn_forward.1} parent=5 // pred_check_branch
        %4765 = sbr.rel (%p4763) target = $region60
      $region59: #{cnn_forward.1} parent=5 // pred_region
        %s4766 = ssub.s32 %s17, 2
        // Predicated region
        $region61: #{cnn_forward.1} parent=59 // pred_check
          %p4767 = pneg %p219
        $region62: #{cnn_forward.1} parent=59 // pred_check_branch
          %4769 = sbr.rel (%p4767) target = $region64
        $region63: #{cnn_forward.1} parent=59 // pred_region
          %s4770 = sand.u32 %s204, 1
          %s4771 = scalar_lea.sflag [#allocation3], %s4770
          %s4772 = sand.u32 %s204, 1
          %s4773 = scalar_lea.vmem [#allocation2], %s4772
          %4774 = dma.done %s4771, 16
        $region64: #{cnn_forward.1} parent=59 // pred_fallthru
          _
      $region60: #{cnn_forward.1} parent=5 // pred_fallthru
        _
    $region6: #{cnn_forward.1} parent=1 // loop_footer
      %s21 = sadd.s32 1, %s17
    $region7: #{cnn_forward.1} parent=1 // loop_footer_branch
      %16 = sbr.rel target = $region3
    $region8: #{cnn_forward.1} parent=1 // loop_exit
      _
    %4775 = vsyncpa [#allocation3], 1
    %s4776 = scalar_lea.sflag [#allocation3], 1
    %4777 = vsyncpa %s4776, 1

</llo_original>
